<compile_context>
chip_gen: v7x
topology: tpu7x:2x2x1
jax: 0.10.0
libtpu: 0.0.40
codegen_flags: <defaults>
</compile_context>

<pallas_src>
import numpy as np
import jax
import jax.numpy as jnp
from jax.experimental import pallas as pl
from jax.experimental.pallas import tpu as pltpu

K1 = 160  # padded input feature dim (c*49 + h*7 + w, 147 -> 160)


# ---------------------------------------------------------------------------
# Fused forward kernel (feature-major: activations are [feature, batch_tile])
# ---------------------------------------------------------------------------

def _critic_fused_kernel(x_ref, w1_ref, b1_ref, w2_ref, b2_ref, w3_ref, b3_ref,
                         wc1_ref, bc1_ref, wc2_ref, bc2_ref, o_ref):
    f32, bf16 = jnp.float32, jnp.bfloat16

    # ---- Conv1 (3->16, k=2), all 36 output positions as ONE matmul + ReLU ----------
    # x_ref: [160, TB] bf16 (rows = c*49 + h*7 + w); w1_ref: [576, 160] block-Toeplitz
    # (rows = ho*96 + wo*16 + cout).
    h1 = jnp.dot(w1_ref[...], x_ref[...], preferred_element_type=f32)
    h1 = jnp.maximum(h1 + b1_ref[...], 0.0)                       # [576, TB] f32

    # ---- MaxPool2d(2): pooling partners are sublane slices at multiples of 8 -------
    # (pure VPU maxes, no lane shuffles). Pack the 9 surviving 16-row channel blocks
    # into [144, TB] (rows = i*48 + j*16 + c) and cast to bf16 once for conv2.
    pooled_blocks = []
    for i in range(3):                                            # pooled row (ho pairs)
        v = jnp.maximum(h1[192 * i:192 * i + 96],
                        h1[192 * i + 96:192 * i + 192])           # [96, TB]
        for j in range(3):                                        # pooled col (wo pairs)
            pooled_blocks.append(jnp.maximum(v[32 * j:32 * j + 16],
                                             v[32 * j + 16:32 * j + 32]))
    pooled = jnp.concatenate(pooled_blocks, axis=0).astype(bf16)  # [144, TB]

    # ---- Conv2 (16->32, k=2), all 4 output positions as ONE matmul + ReLU ----------
    c2 = jnp.dot(w2_ref[...], pooled, preferred_element_type=f32)
    c2 = jnp.maximum(c2 + b2_ref[...], 0.0).astype(bf16)          # [128, TB], rows = pos*32+cout

    # ---- Conv3 (32->64, k=2) -> flattened 64-feature embedding + ReLU --------------
    feat = jnp.dot(w3_ref[...], c2, preferred_element_type=f32)
    feat = jnp.maximum(feat + b3_ref[...], 0.0).astype(bf16)      # [64, TB]

    # ---- Critic head: Linear(64,64) -> tanh (EUP) -> Linear(64,1) as sublane reduce
    hid = jnp.tanh(jnp.dot(wc1_ref[...], feat, preferred_element_type=f32)
                   + bc1_ref[...])                                # [64, TB] f32
    # Lane-major result: [1, TB] (lane-dense output block).
    o_ref[...] = jnp.sum(hid * wc2_ref[...], axis=0, keepdims=True) + bc2_ref[...]


# ---------------------------------------------------------------------------
# Parameter preparation (PyTorch layouts -> feature-major matmul layouts)
# In production these packed weights would be precomputed once, not per call.
# ---------------------------------------------------------------------------

def prepare_kernel_params(p):
    f32, bf16 = jnp.float32, jnp.bfloat16

    # Conv1 block-Toeplitz:
    #   w1[ho*96 + wo*16 + cout, c*49 + (ho+dh)*7 + (wo+dw)] = conv1_w[cout, c, dh, dw]
    ho, wo, co, ci, dh, dw = np.meshgrid(np.arange(6), np.arange(6), np.arange(16),
                                         np.arange(3), np.arange(2), np.arange(2),
                                         indexing="ij")
    r1 = (ho * 96 + wo * 16 + co).ravel()
    c1 = (ci * 49 + (ho + dh) * 7 + (wo + dw)).ravel()
    v1 = p['conv1_w'][co.ravel(), ci.ravel(), dh.ravel(), dw.ravel()]
    w1 = jnp.zeros((576, K1), f32).at[r1, c1].set(v1)

    # Conv2 (all 4 output positions):
    #   w2[(oi*2+oj)*32 + cout, (oi+di)*48 + (oj+dj)*16 + cin] = conv2_w[cout, cin, di, dj]
    oi, oj, co2, ci2, di, dj = np.meshgrid(np.arange(2), np.arange(2), np.arange(32),
                                           np.arange(16), np.arange(2), np.arange(2),
                                           indexing="ij")
    r2 = ((oi * 2 + oj) * 32 + co2).ravel()
    c2 = ((oi + di) * 48 + (oj + dj) * 16 + ci2).ravel()
    v2 = p['conv2_w'][co2.ravel(), ci2.ravel(), di.ravel(), dj.ravel()]
    w2 = jnp.zeros((128, 144), f32).at[r2, c2].set(v2)

    # Conv3 (1x1 output): pure relayout, w3[cout3, (di*2+dj)*32 + cin2].
    w3 = jnp.transpose(p['conv3_w'], (0, 2, 3, 1)).reshape(64, 128)

    return dict(
        w1=w1.astype(bf16),
        b1=jnp.tile(p['conv1_b'], 36).reshape(576, 1).astype(f32),
        w2=w2.astype(bf16),
        b2=jnp.tile(p['conv2_b'], 4).reshape(128, 1).astype(f32),
        w3=w3.astype(bf16),
        b3=p['conv3_b'].reshape(64, 1).astype(f32),
        wc1=p['fc1_w'].astype(bf16),                 # [out=64, in=64] (left operand)
        bc1=p['fc1_b'].reshape(64, 1).astype(f32),
        wc2=p['fc2_w'].reshape(64, 1).astype(f32),   # column for the sublane reduce
        bc2=p['fc2_b'].reshape(1, 1).astype(f32),
    )


# ---------------------------------------------------------------------------
# Public forward (single pallas_call)
# ---------------------------------------------------------------------------

def critic_model_forward(x_nchw, params):
    kp = prepare_kernel_params(params)
    B = x_nchw.shape[0]

    # NCHW [B,3,7,7] -> lane-dense feature-major [160, B] bf16 (rows = c*49 + h*7 + w,
    # zero-padded 147->160). Single fused XLA relayout+cast before the kernel.
    x = x_nchw.astype(jnp.float32).reshape(B, 147)
    x = jnp.pad(x, ((0, 0), (0, K1 - 147))).T.astype(jnp.bfloat16)   # [160, B]

    # Batch tiling: batch lives on the lane axis. Single tile for small B; otherwise
    # >=2 lane-aligned tiles (shards across v7x's 2 TCs) of up to 1024 samples.
    if B <= 128:
        batch_tile = B
    else:
        batch_tile = min(1024, ((pl.cdiv(B, 2) + 127) // 128) * 128)
    n_tiles = pl.cdiv(B, batch_tile)
    b_pad = n_tiles * batch_tile
    if b_pad != B:
        x = jnp.pad(x, ((0, 0), (0, b_pad - B)))

    out = pl.pallas_call(
        _critic_fused_kernel,
        out_shape=jax.ShapeDtypeStruct((1, b_pad), jnp.float32),
        grid=(n_tiles,),
        in_specs=[
            pl.BlockSpec((K1, batch_tile), lambda t: (0, t)),   # x (feature-major, lane=batch)
            pl.BlockSpec((576, K1), lambda t: (0, 0)),          # w1 (conv1 block-Toeplitz)
            pl.BlockSpec((576, 1), lambda t: (0, 0)),           # b1
            pl.BlockSpec((128, 144), lambda t: (0, 0)),         # w2 (conv2, all positions)
            pl.BlockSpec((128, 1), lambda t: (0, 0)),           # b2
            pl.BlockSpec((64, 128), lambda t: (0, 0)),          # w3 (conv3)
            pl.BlockSpec((64, 1), lambda t: (0, 0)),            # b3
            pl.BlockSpec((64, 64), lambda t: (0, 0)),           # wc1
            pl.BlockSpec((64, 1), lambda t: (0, 0)),            # bc1
            pl.BlockSpec((64, 1), lambda t: (0, 0)),            # wc2 (f32 column)
            pl.BlockSpec((1, 1), lambda t: (0, 0)),             # bc2
        ],
        out_specs=pl.BlockSpec((1, batch_tile), lambda t: (0, t)),   # lane-dense output
        compiler_params=pltpu.CompilerParams(dimension_semantics=("parallel",)),
    )(x, kp['w1'], kp['b1'], kp['w2'], kp['b2'], kp['w3'], kp['b3'],
      kp['wc1'], kp['bc1'], kp['wc2'], kp['bc2'])

    return out[0, :B].reshape(B, 1)


# ---------------------------------------------------------------------------
# Deterministic parameter init (PyTorch layouts, as the torch module would hold)
# ---------------------------------------------------------------------------

def init_params(key):
    ks = jax.random.split(key, 10)

    def n(k, shape):
        return jax.random.normal(k, shape, jnp.float32) * 0.1

    return dict(
        conv1_w=n(ks[0], (16, 3, 2, 2)),  conv1_b=n(ks[1], (16,)),
        conv2_w=n(ks[2], (32, 16, 2, 2)), conv2_b=n(ks[3], (32,)),
        conv3_w=n(ks[4], (64, 32, 2, 2)), conv3_b=n(ks[5], (64,)),
        fc1_w=n(ks[6], (64, 64)),         fc1_b=n(ks[7], (64,)),
        fc2_w=n(ks[8], (1, 64)),          fc2_b=n(ks[9], (1,)),
    )


# ---------------------------------------------------------------------------
# Pure-JAX f32 reference (mirrors the torch module op-for-op)
# ---------------------------------------------------------------------------

def reference_forward(x_nchw, p):
    x = x_nchw.astype(jnp.float32)

    def conv(h, w, b):
        y = jax.lax.conv_general_dilated(h, w, (1, 1), 'VALID',
                                         dimension_numbers=('NCHW', 'OIHW', 'NCHW'))
        return jax.nn.relu(y + b[None, :, None, None])

    h = conv(x, p['conv1_w'], p['conv1_b'])                      # [B,16,6,6]
    B, C, H, W = h.shape
    h = h.reshape(B, C, H // 2, 2, W // 2, 2).max(axis=(3, 5))   # [B,16,3,3]
    h = conv(h, p['conv2_w'], p['conv2_b'])                      # [B,32,2,2]
    h = conv(h, p['conv3_w'], p['conv3_b'])                      # [B,64,1,1]
    h = h.reshape(B, -1)
    h = jnp.tanh(h @ p['fc1_w'].T + p['fc1_b'])
    return h @ p['fc2_w'].T + p['fc2_b']


if __name__ == "__main__":
    key = jax.random.PRNGKey(0)
    kx, kp = jax.random.split(key)

    # MiniGrid observation: NCHW [batch=2, channels=3, 7, 7]
    x = jax.random.normal(kx, (2, 3, 7, 7), jnp.float32)
    params = init_params(kp)

    fwd = jax.jit(critic_model_forward)
    out = fwd(x, params)
    jax.block_until_ready(out)

    ref = reference_forward(x, params)
    assert out.shape == (2, 1), out.shape
    # bf16 MXU operands -> loosened tolerance vs. the f32 reference.
    assert jnp.allclose(out, ref, atol=2e-2, rtol=2e-2), (out, ref)

    print("KERNEL_OK")
</pallas_src>

<mosaic_0001>
module attributes {stable_mosaic.version = 11 : i64} {
  func.func @_critic_fused_kernel(%arg0: i32, %arg1: memref<160x2xbf16, #tpu.memory_space<vmem>>, %arg2: memref<576x160xbf16, #tpu.memory_space<vmem>>, %arg3: memref<576x1xf32, #tpu.memory_space<vmem>>, %arg4: memref<128x144xbf16, #tpu.memory_space<vmem>>, %arg5: memref<128x1xf32, #tpu.memory_space<vmem>>, %arg6: memref<64x128xbf16, #tpu.memory_space<vmem>>, %arg7: memref<64x1xf32, #tpu.memory_space<vmem>>, %arg8: memref<64x64xbf16, #tpu.memory_space<vmem>>, %arg9: memref<64x1xf32, #tpu.memory_space<vmem>>, %arg10: memref<64x1xf32, #tpu.memory_space<vmem>>, %arg11: memref<1x1xf32, #tpu.memory_space<vmem>>, %arg12: memref<1x2xf32, #tpu.memory_space<vmem>>) attributes {dimension_semantics = [#tpu.dimension_semantics<parallel>], iteration_bounds = array<i64: 1>, scalar_prefetch = 0 : i64, scratch_operands = 0 : i64, tpu.core_type = #tpu.core_type<tc>, window_params = [{transform_indices = @transform_0, window_bounds = array<i64: 160, 2>}, {pipeline_mode = #tpu.pipeline_mode<synchronous>, transform_indices = @transform_1, window_bounds = array<i64: 576, 160>}, {pipeline_mode = #tpu.pipeline_mode<synchronous>, transform_indices = @transform_2, window_bounds = array<i64: 576, 1>}, {pipeline_mode = #tpu.pipeline_mode<synchronous>, transform_indices = @transform_3, window_bounds = array<i64: 128, 144>}, {pipeline_mode = #tpu.pipeline_mode<synchronous>, transform_indices = @transform_4, window_bounds = array<i64: 128, 1>}, {pipeline_mode = #tpu.pipeline_mode<synchronous>, transform_indices = @transform_5, window_bounds = array<i64: 64, 128>}, {pipeline_mode = #tpu.pipeline_mode<synchronous>, transform_indices = @transform_6, window_bounds = array<i64: 64, 1>}, {pipeline_mode = #tpu.pipeline_mode<synchronous>, transform_indices = @transform_7, window_bounds = array<i64: 64, 64>}, {pipeline_mode = #tpu.pipeline_mode<synchronous>, transform_indices = @transform_8, window_bounds = array<i64: 64, 1>}, {pipeline_mode = #tpu.pipeline_mode<synchronous>, transform_indices = @transform_9, window_bounds = array<i64: 64, 1>}, {pipeline_mode = #tpu.pipeline_mode<synchronous>, transform_indices = @transform_10, window_bounds = array<i64: 1, 1>}, {transform_indices = @transform_11, window_bounds = array<i64: 1, 2>}]} {
    %c0 = arith.constant 0 : index
    %c0_0 = arith.constant 0 : index
    %0 = vector.load %arg2[%c0, %c0_0] : memref<576x160xbf16, #tpu.memory_space<vmem>>, vector<576x160xbf16>
    %c0_1 = arith.constant 0 : index
    %c0_2 = arith.constant 0 : index
    %1 = vector.load %arg1[%c0_1, %c0_2] : memref<160x2xbf16, #tpu.memory_space<vmem>>, vector<160x2xbf16>
    %cst = arith.constant dense<0.000000e+00> : vector<576x2xf32>
    %2 = tpu.matmul %0, %1, %cst {dimension_numbers = #tpu.dot_dimension_numbers<[1], [0], [0], [1], [0, 0, 1, 1], [], []>} : vector<576x160xbf16>, vector<160x2xbf16>, vector<576x2xf32> -> vector<576x2xf32>
    %c0_3 = arith.constant 0 : index
    %c0_4 = arith.constant 0 : index
    %3 = vector.load %arg3[%c0_3, %c0_4] : memref<576x1xf32, #tpu.memory_space<vmem>>, vector<576x1xf32>
    %4 = vector.broadcast %3 : vector<576x1xf32> to vector<576x2xf32>
    %5 = arith.addf %2, %4 : vector<576x2xf32>
    %cst_5 = arith.constant 0.000000e+00 : f32
    %6 = vector.broadcast %cst_5 : f32 to vector<576x2xf32>
    %7 = arith.maximumf %5, %6 : vector<576x2xf32>
    %8 = vector.extract_strided_slice %7 {offsets = [0, 0], sizes = [96, 2], strides = [1, 1]} : vector<576x2xf32> to vector<96x2xf32>
    %9 = vector.extract_strided_slice %7 {offsets = [96, 0], sizes = [96, 2], strides = [1, 1]} : vector<576x2xf32> to vector<96x2xf32>
    %10 = arith.maximumf %8, %9 : vector<96x2xf32>
    %11 = vector.extract_strided_slice %10 {offsets = [0, 0], sizes = [16, 2], strides = [1, 1]} : vector<96x2xf32> to vector<16x2xf32>
    %12 = vector.extract_strided_slice %10 {offsets = [16, 0], sizes = [16, 2], strides = [1, 1]} : vector<96x2xf32> to vector<16x2xf32>
    %13 = arith.maximumf %11, %12 : vector<16x2xf32>
    %14 = vector.extract_strided_slice %10 {offsets = [32, 0], sizes = [16, 2], strides = [1, 1]} : vector<96x2xf32> to vector<16x2xf32>
    %15 = vector.extract_strided_slice %10 {offsets = [48, 0], sizes = [16, 2], strides = [1, 1]} : vector<96x2xf32> to vector<16x2xf32>
    %16 = arith.maximumf %14, %15 : vector<16x2xf32>
    %17 = vector.extract_strided_slice %10 {offsets = [64, 0], sizes = [16, 2], strides = [1, 1]} : vector<96x2xf32> to vector<16x2xf32>
    %18 = vector.extract_strided_slice %10 {offsets = [80, 0], sizes = [16, 2], strides = [1, 1]} : vector<96x2xf32> to vector<16x2xf32>
    %19 = arith.maximumf %17, %18 : vector<16x2xf32>
    %20 = vector.extract_strided_slice %7 {offsets = [192, 0], sizes = [96, 2], strides = [1, 1]} : vector<576x2xf32> to vector<96x2xf32>
    %21 = vector.extract_strided_slice %7 {offsets = [288, 0], sizes = [96, 2], strides = [1, 1]} : vector<576x2xf32> to vector<96x2xf32>
    %22 = arith.maximumf %20, %21 : vector<96x2xf32>
    %23 = vector.extract_strided_slice %22 {offsets = [0, 0], sizes = [16, 2], strides = [1, 1]} : vector<96x2xf32> to vector<16x2xf32>
    %24 = vector.extract_strided_slice %22 {offsets = [16, 0], sizes = [16, 2], strides = [1, 1]} : vector<96x2xf32> to vector<16x2xf32>
    %25 = arith.maximumf %23, %24 : vector<16x2xf32>
    %26 = vector.extract_strided_slice %22 {offsets = [32, 0], sizes = [16, 2], strides = [1, 1]} : vector<96x2xf32> to vector<16x2xf32>
    %27 = vector.extract_strided_slice %22 {offsets = [48, 0], sizes = [16, 2], strides = [1, 1]} : vector<96x2xf32> to vector<16x2xf32>
    %28 = arith.maximumf %26, %27 : vector<16x2xf32>
    %29 = vector.extract_strided_slice %22 {offsets = [64, 0], sizes = [16, 2], strides = [1, 1]} : vector<96x2xf32> to vector<16x2xf32>
    %30 = vector.extract_strided_slice %22 {offsets = [80, 0], sizes = [16, 2], strides = [1, 1]} : vector<96x2xf32> to vector<16x2xf32>
    %31 = arith.maximumf %29, %30 : vector<16x2xf32>
    %32 = vector.extract_strided_slice %7 {offsets = [384, 0], sizes = [96, 2], strides = [1, 1]} : vector<576x2xf32> to vector<96x2xf32>
    %33 = vector.extract_strided_slice %7 {offsets = [480, 0], sizes = [96, 2], strides = [1, 1]} : vector<576x2xf32> to vector<96x2xf32>
    %34 = arith.maximumf %32, %33 : vector<96x2xf32>
    %35 = vector.extract_strided_slice %34 {offsets = [0, 0], sizes = [16, 2], strides = [1, 1]} : vector<96x2xf32> to vector<16x2xf32>
    %36 = vector.extract_strided_slice %34 {offsets = [16, 0], sizes = [16, 2], strides = [1, 1]} : vector<96x2xf32> to vector<16x2xf32>
    %37 = arith.maximumf %35, %36 : vector<16x2xf32>
    %38 = vector.extract_strided_slice %34 {offsets = [32, 0], sizes = [16, 2], strides = [1, 1]} : vector<96x2xf32> to vector<16x2xf32>
    %39 = vector.extract_strided_slice %34 {offsets = [48, 0], sizes = [16, 2], strides = [1, 1]} : vector<96x2xf32> to vector<16x2xf32>
    %40 = arith.maximumf %38, %39 : vector<16x2xf32>
    %41 = vector.extract_strided_slice %34 {offsets = [64, 0], sizes = [16, 2], strides = [1, 1]} : vector<96x2xf32> to vector<16x2xf32>
    %42 = vector.extract_strided_slice %34 {offsets = [80, 0], sizes = [16, 2], strides = [1, 1]} : vector<96x2xf32> to vector<16x2xf32>
    %43 = arith.maximumf %41, %42 : vector<16x2xf32>
    %44 = tpu.concatenate %13, %16, %19, %25, %28, %31, %37, %40, %43 in 0 : vector<16x2xf32>, vector<16x2xf32>, vector<16x2xf32>, vector<16x2xf32>, vector<16x2xf32>, vector<16x2xf32>, vector<16x2xf32>, vector<16x2xf32>, vector<16x2xf32> -> vector<144x2xf32>
    %45 = arith.truncf %44 : vector<144x2xf32> to vector<144x2xbf16>
    %c0_6 = arith.constant 0 : index
    %c0_7 = arith.constant 0 : index
    %46 = vector.load %arg4[%c0_6, %c0_7] : memref<128x144xbf16, #tpu.memory_space<vmem>>, vector<128x144xbf16>
    %cst_8 = arith.constant dense<0.000000e+00> : vector<128x2xf32>
    %47 = tpu.matmul %46, %45, %cst_8 {dimension_numbers = #tpu.dot_dimension_numbers<[1], [0], [0], [1], [0, 0, 1, 1], [], []>} : vector<128x144xbf16>, vector<144x2xbf16>, vector<128x2xf32> -> vector<128x2xf32>
    %c0_9 = arith.constant 0 : index
    %c0_10 = arith.constant 0 : index
    %48 = vector.load %arg5[%c0_9, %c0_10] : memref<128x1xf32, #tpu.memory_space<vmem>>, vector<128x1xf32>
    %49 = vector.broadcast %48 : vector<128x1xf32> to vector<128x2xf32>
    %50 = arith.addf %47, %49 : vector<128x2xf32>
    %cst_11 = arith.constant 0.000000e+00 : f32
    %51 = vector.broadcast %cst_11 : f32 to vector<128x2xf32>
    %52 = arith.maximumf %50, %51 : vector<128x2xf32>
    %53 = arith.truncf %52 : vector<128x2xf32> to vector<128x2xbf16>
    %c0_12 = arith.constant 0 : index
    %c0_13 = arith.constant 0 : index
    %54 = vector.load %arg6[%c0_12, %c0_13] : memref<64x128xbf16, #tpu.memory_space<vmem>>, vector<64x128xbf16>
    %cst_14 = arith.constant dense<0.000000e+00> : vector<64x2xf32>
    %55 = tpu.matmul %54, %53, %cst_14 {dimension_numbers = #tpu.dot_dimension_numbers<[1], [0], [0], [1], [0, 0, 1, 1], [], []>} : vector<64x128xbf16>, vector<128x2xbf16>, vector<64x2xf32> -> vector<64x2xf32>
    %c0_15 = arith.constant 0 : index
    %c0_16 = arith.constant 0 : index
    %56 = vector.load %arg7[%c0_15, %c0_16] : memref<64x1xf32, #tpu.memory_space<vmem>>, vector<64x1xf32>
    %57 = vector.broadcast %56 : vector<64x1xf32> to vector<64x2xf32>
    %58 = arith.addf %55, %57 : vector<64x2xf32>
    %cst_17 = arith.constant 0.000000e+00 : f32
    %59 = vector.broadcast %cst_17 : f32 to vector<64x2xf32>
    %60 = arith.maximumf %58, %59 : vector<64x2xf32>
    %61 = arith.truncf %60 : vector<64x2xf32> to vector<64x2xbf16>
    %c0_18 = arith.constant 0 : index
    %c0_19 = arith.constant 0 : index
    %62 = vector.load %arg8[%c0_18, %c0_19] : memref<64x64xbf16, #tpu.memory_space<vmem>>, vector<64x64xbf16>
    %cst_20 = arith.constant dense<0.000000e+00> : vector<64x2xf32>
    %63 = tpu.matmul %62, %61, %cst_20 {dimension_numbers = #tpu.dot_dimension_numbers<[1], [0], [0], [1], [0, 0, 1, 1], [], []>} : vector<64x64xbf16>, vector<64x2xbf16>, vector<64x2xf32> -> vector<64x2xf32>
    %c0_21 = arith.constant 0 : index
    %c0_22 = arith.constant 0 : index
    %64 = vector.load %arg9[%c0_21, %c0_22] : memref<64x1xf32, #tpu.memory_space<vmem>>, vector<64x1xf32>
    %65 = vector.broadcast %64 : vector<64x1xf32> to vector<64x2xf32>
    %66 = arith.addf %63, %65 : vector<64x2xf32>
    %67 = math.tanh %66 : vector<64x2xf32>
    %c0_23 = arith.constant 0 : index
    %c0_24 = arith.constant 0 : index
    %68 = vector.load %arg10[%c0_23, %c0_24] : memref<64x1xf32, #tpu.memory_space<vmem>>, vector<64x1xf32>
    %69 = vector.broadcast %68 : vector<64x1xf32> to vector<64x2xf32>
    %70 = arith.mulf %67, %69 : vector<64x2xf32>
    %cst_25 = arith.constant dense<0.000000e+00> : vector<2xf32>
    %71 = vector.multi_reduction <add>, %70, %cst_25 [0] : vector<64x2xf32> to vector<2xf32>
    %72 = vector.shape_cast %71 : vector<2xf32> to vector<1x2xf32>
    %c0_26 = arith.constant 0 : index
    %c0_27 = arith.constant 0 : index
    %73 = vector.load %arg11[%c0_26, %c0_27] : memref<1x1xf32, #tpu.memory_space<vmem>>, vector<1x1xf32>
    %74 = vector.broadcast %73 : vector<1x1xf32> to vector<1x2xf32>
    %75 = arith.addf %72, %74 : vector<1x2xf32>
    %c0_28 = arith.constant 0 : index
    %c0_29 = arith.constant 0 : index
    %76 = vector.load %arg12[%c0_28, %c0_29] : memref<1x2xf32, #tpu.memory_space<vmem>>, vector<1x2xf32>
    tpu.vector_store %arg12[%c0_28, %c0_29], %75 {strides = array<i32>} : memref<1x2xf32, #tpu.memory_space<vmem>>, vector<1x2xf32>,
    return
  }
  func.func @transform_0(%arg0: i32) -> (i32, i32) {
    %c0_i32 = arith.constant 0 : i32
    %c0_i32_0 = arith.constant 0 : i32
    return %c0_i32, %arg0 : i32, i32
  }
  func.func @transform_1(%arg0: i32) -> (i32, i32) {
    %c0_i32 = arith.constant 0 : i32
    %c0_i32_0 = arith.constant 0 : i32
    %c0_i32_1 = arith.constant 0 : i32
    return %c0_i32, %c0_i32_0 : i32, i32
  }
  func.func @transform_2(%arg0: i32) -> (i32, i32) {
    %c0_i32 = arith.constant 0 : i32
    %c0_i32_0 = arith.constant 0 : i32
    %c0_i32_1 = arith.constant 0 : i32
    return %c0_i32, %c0_i32_0 : i32, i32
  }
  func.func @transform_3(%arg0: i32) -> (i32, i32) {
    %c0_i32 = arith.constant 0 : i32
    %c0_i32_0 = arith.constant 0 : i32
    %c0_i32_1 = arith.constant 0 : i32
    return %c0_i32, %c0_i32_0 : i32, i32
  }
  func.func @transform_4(%arg0: i32) -> (i32, i32) {
    %c0_i32 = arith.constant 0 : i32
    %c0_i32_0 = arith.constant 0 : i32
    %c0_i32_1 = arith.constant 0 : i32
    return %c0_i32, %c0_i32_0 : i32, i32
  }
  func.func @transform_5(%arg0: i32) -> (i32, i32) {
    %c0_i32 = arith.constant 0 : i32
    %c0_i32_0 = arith.constant 0 : i32
    %c0_i32_1 = arith.constant 0 : i32
    return %c0_i32, %c0_i32_0 : i32, i32
  }
  func.func @transform_6(%arg0: i32) -> (i32, i32) {
    %c0_i32 = arith.constant 0 : i32
    %c0_i32_0 = arith.constant 0 : i32
    %c0_i32_1 = arith.constant 0 : i32
    return %c0_i32, %c0_i32_0 : i32, i32
  }
  func.func @transform_7(%arg0: i32) -> (i32, i32) {
    %c0_i32 = arith.constant 0 : i32
    %c0_i32_0 = arith.constant 0 : i32
    %c0_i32_1 = arith.constant 0 : i32
    return %c0_i32, %c0_i32_0 : i32, i32
  }
  func.func @transform_8(%arg0: i32) -> (i32, i32) {
    %c0_i32 = arith.constant 0 : i32
    %c0_i32_0 = arith.constant 0 : i32
    %c0_i32_1 = arith.constant 0 : i32
    return %c0_i32, %c0_i32_0 : i32, i32
  }
  func.func @transform_9(%arg0: i32) -> (i32, i32) {
    %c0_i32 = arith.constant 0 : i32
    %c0_i32_0 = arith.constant 0 : i32
    %c0_i32_1 = arith.constant 0 : i32
    return %c0_i32, %c0_i32_0 : i32, i32
  }
  func.func @transform_10(%arg0: i32) -> (i32, i32) {
    %c0_i32 = arith.constant 0 : i32
    %c0_i32_0 = arith.constant 0 : i32
    %c0_i32_1 = arith.constant 0 : i32
    return %c0_i32, %c0_i32_0 : i32, i32
  }
  func.func @transform_11(%arg0: i32) -> (i32, i32) {
    %c0_i32 = arith.constant 0 : i32
    %c0_i32_0 = arith.constant 0 : i32
    return %c0_i32, %arg0 : i32, i32
  }
}

</mosaic_0001>

<llo_original>
// kernel: tile.13
$region0: #{tile.13}
  #allocation0 [shape = 's32[1]{0}', space=sflag, size = 0x4, scoped, tag = 'scoped memory for tile.13']
  %s0 = inlined_call_operand.vmem [shape: f32[16], index: 0, kind: input, shape index: {}]
  %s1 = inlined_call_operand.vmem [shape: f32[36,16], index: 1, kind: output, shape index: {}]
  // Predicated region
  $region2: #{tile.13} parent=0 // pred_check
    _
  $region3: #{tile.13} parent=0 // pred_check_branch
    %3 = sbr.rel (0) target = $region5
  $region4: #{tile.13} parent=0 // pred_region
    _
  $region5: #{tile.13} parent=0 // pred_fallthru
    _
  %v4 = vld [vmem:[%s0] ss:$0 sm:$0xff]
  %5 = vst [vmem:[%s1] sm:$0xff] %v4
  %s6 = scalar_lea.vmem %s1, 8
  %7 = vst [vmem:[%s6] sm:$0xff] %v4
  %s8 = scalar_lea.vmem %s1, 16
  %9 = vst [vmem:[%s8] sm:$0xff] %v4
  %s10 = scalar_lea.vmem %s1, 24
  %11 = vst [vmem:[%s10] sm:$0xff] %v4
  %s12 = scalar_lea.vmem %s1, 32
  %13 = vst [vmem:[%s12] sm:$0xff] %v4

// kernel: tile.0
$region0: #{tile.0}
  %s0 = inlined_call_operand.vmem [shape: f32[36,16], index: 0, kind: input, shape index: {}]
  %s1 = inlined_call_operand.vmem [shape: f32[576,1], index: 1, kind: output, shape index: {}]
  %v2 = vld [vmem:[%s0] sm:$0xff]
  %vm3 = vcmask 7168
  %4 = vst.msk [vmem:[%s1] ss:$16 sm:$0x3] %vm3, %v2
  %5 = vst.msk [vmem:[%s1] ss:$16 sm:$0xc] %vm3, %v2
  %6 = vst.msk [vmem:[%s1] ss:$16 sm:$0x30] %vm3, %v2
  %7 = vst.msk [vmem:[%s1] ss:$16 sm:$0xc0] %vm3, %v2
  %s8 = scalar_lea.vmem %s0, 8
  %v9 = vld [vmem:[%s8] sm:$0xff]
  %vm10 = vcmask 7168
  %s11 = scalar_lea.vmem %s1, 128
  %12 = vst.msk [vmem:[%s11] ss:$16 sm:$0x3] %vm10, %v9
  %s13 = scalar_lea.vmem %s1, 128
  %14 = vst.msk [vmem:[%s13] ss:$16 sm:$0xc] %vm10, %v9
  %s15 = scalar_lea.vmem %s1, 128
  %16 = vst.msk [vmem:[%s15] ss:$16 sm:$0x30] %vm10, %v9
  %s17 = scalar_lea.vmem %s1, 128
  %18 = vst.msk [vmem:[%s17] ss:$16 sm:$0xc0] %vm10, %v9
  %s19 = scalar_lea.vmem %s0, 16
  %v20 = vld [vmem:[%s19] sm:$0xff]
  %vm21 = vcmask 7168
  %s22 = scalar_lea.vmem %s1, 256
  %23 = vst.msk [vmem:[%s22] ss:$16 sm:$0x3] %vm21, %v20
  %s24 = scalar_lea.vmem %s1, 256
  %25 = vst.msk [vmem:[%s24] ss:$16 sm:$0xc] %vm21, %v20
  %s26 = scalar_lea.vmem %s1, 256
  %27 = vst.msk [vmem:[%s26] ss:$16 sm:$0x30] %vm21, %v20
  %s28 = scalar_lea.vmem %s1, 256
  %29 = vst.msk [vmem:[%s28] ss:$16 sm:$0xc0] %vm21, %v20
  %s30 = scalar_lea.vmem %s0, 24
  %v31 = vld [vmem:[%s30] sm:$0xff]
  %vm32 = vcmask 7168
  %s33 = scalar_lea.vmem %s1, 384
  %34 = vst.msk [vmem:[%s33] ss:$16 sm:$0x3] %vm32, %v31
  %s35 = scalar_lea.vmem %s1, 384
  %36 = vst.msk [vmem:[%s35] ss:$16 sm:$0xc] %vm32, %v31
  %s37 = scalar_lea.vmem %s1, 384
  %38 = vst.msk [vmem:[%s37] ss:$16 sm:$0x30] %vm32, %v31
  %s39 = scalar_lea.vmem %s1, 384
  %40 = vst.msk [vmem:[%s39] ss:$16 sm:$0xc0] %vm32, %v31
  %s41 = scalar_lea.vmem %s0, 32
  %v42 = vld [vmem:[%s41] sm:$0xf]
  %vm43 = vcmask 7168
  %s44 = scalar_lea.vmem %s1, 512
  %45 = vst.msk [vmem:[%s44] ss:$16 sm:$0x3] %vm43, %v42
  %s46 = scalar_lea.vmem %s1, 512
  %47 = vst.msk [vmem:[%s46] ss:$16 sm:$0xc] %vm43, %v42
  %v48 = vld [vmem:[%s0] sm:$0xff]
  %49 = vrot.lane.b32.xlu0 %v48, 127
  %v50 = vpop.permute.xlu0 %49
  %vm51 = vcmask 7168
  %s52 = scalar_lea.vmem %s1, 1
  %53 = vst.msk [vmem:[%s52] ss:$16 sm:$0x3] %vm51, %v50
  %s54 = scalar_lea.vmem %s1, 1
  %55 = vst.msk [vmem:[%s54] ss:$16 sm:$0xc] %vm51, %v50
  %s56 = scalar_lea.vmem %s1, 1
  %57 = vst.msk [vmem:[%s56] ss:$16 sm:$0x30] %vm51, %v50
  %s58 = scalar_lea.vmem %s1, 1
  %59 = vst.msk [vmem:[%s58] ss:$16 sm:$0xc0] %vm51, %v50
  %s60 = scalar_lea.vmem %s0, 8
  %v61 = vld [vmem:[%s60] sm:$0xff]
  %62 = vrot.lane.b32.xlu0 %v61, 127
  %v63 = vpop.permute.xlu0 %62
  %vm64 = vcmask 7168
  %s65 = scalar_lea.vmem %s1, 129
  %66 = vst.msk [vmem:[%s65] ss:$16 sm:$0x3] %vm64, %v63
  %s67 = scalar_lea.vmem %s1, 129
  %68 = vst.msk [vmem:[%s67] ss:$16 sm:$0xc] %vm64, %v63
  %s69 = scalar_lea.vmem %s1, 129
  %70 = vst.msk [vmem:[%s69] ss:$16 sm:$0x30] %vm64, %v63
  %s71 = scalar_lea.vmem %s1, 129
  %72 = vst.msk [vmem:[%s71] ss:$16 sm:$0xc0] %vm64, %v63
  %s73 = scalar_lea.vmem %s0, 16
  %v74 = vld [vmem:[%s73] sm:$0xff]
  %75 = vrot.lane.b32.xlu0 %v74, 127
  %v76 = vpop.permute.xlu0 %75
  %vm77 = vcmask 7168
  %s78 = scalar_lea.vmem %s1, 257
  %79 = vst.msk [vmem:[%s78] ss:$16 sm:$0x3] %vm77, %v76
  %s80 = scalar_lea.vmem %s1, 257
  %81 = vst.msk [vmem:[%s80] ss:$16 sm:$0xc] %vm77, %v76
  %s82 = scalar_lea.vmem %s1, 257
  %83 = vst.msk [vmem:[%s82] ss:$16 sm:$0x30] %vm77, %v76
  %s84 = scalar_lea.vmem %s1, 257
  %85 = vst.msk [vmem:[%s84] ss:$16 sm:$0xc0] %vm77, %v76
  %s86 = scalar_lea.vmem %s0, 24
  %v87 = vld [vmem:[%s86] sm:$0xff]
  %88 = vrot.lane.b32.xlu0 %v87, 127
  %v89 = vpop.permute.xlu0 %88
  %vm90 = vcmask 7168
  %s91 = scalar_lea.vmem %s1, 385
  %92 = vst.msk [vmem:[%s91] ss:$16 sm:$0x3] %vm90, %v89
  %s93 = scalar_lea.vmem %s1, 385
  %94 = vst.msk [vmem:[%s93] ss:$16 sm:$0xc] %vm90, %v89
  %s95 = scalar_lea.vmem %s1, 385
  %96 = vst.msk [vmem:[%s95] ss:$16 sm:$0x30] %vm90, %v89
  %s97 = scalar_lea.vmem %s1, 385
  %98 = vst.msk [vmem:[%s97] ss:$16 sm:$0xc0] %vm90, %v89
  %s99 = scalar_lea.vmem %s0, 32
  %v100 = vld [vmem:[%s99] sm:$0xf]
  %101 = vrot.lane.b32.xlu0 %v100, 127
  %v102 = vpop.permute.xlu0 %101
  %vm103 = vcmask 7168
  %s104 = scalar_lea.vmem %s1, 513
  %105 = vst.msk [vmem:[%s104] ss:$16 sm:$0x3] %vm103, %v102
  %s106 = scalar_lea.vmem %s1, 513
  %107 = vst.msk [vmem:[%s106] ss:$16 sm:$0xc] %vm103, %v102
  %v108 = vld [vmem:[%s0] sm:$0xff]
  %109 = vrot.lane.b32.xlu0 %v108, 126
  %v110 = vpop.permute.xlu0 %109
  %vm111 = vcmask 7168
  %s112 = scalar_lea.vmem %s1, 2
  %113 = vst.msk [vmem:[%s112] ss:$16 sm:$0x3] %vm111, %v110
  %s114 = scalar_lea.vmem %s1, 2
  %115 = vst.msk [vmem:[%s114] ss:$16 sm:$0xc] %vm111, %v110
  %s116 = scalar_lea.vmem %s1, 2
  %117 = vst.msk [vmem:[%s116] ss:$16 sm:$0x30] %vm111, %v110
  %s118 = scalar_lea.vmem %s1, 2
  %119 = vst.msk [vmem:[%s118] ss:$16 sm:$0xc0] %vm111, %v110
  %s120 = scalar_lea.vmem %s0, 8
  %v121 = vld [vmem:[%s120] sm:$0xff]
  %122 = vrot.lane.b32.xlu0 %v121, 126
  %v123 = vpop.permute.xlu0 %122
  %vm124 = vcmask 7168
  %s125 = scalar_lea.vmem %s1, 130
  %126 = vst.msk [vmem:[%s125] ss:$16 sm:$0x3] %vm124, %v123
  %s127 = scalar_lea.vmem %s1, 130
  %128 = vst.msk [vmem:[%s127] ss:$16 sm:$0xc] %vm124, %v123
  %s129 = scalar_lea.vmem %s1, 130
  %130 = vst.msk [vmem:[%s129] ss:$16 sm:$0x30] %vm124, %v123
  %s131 = scalar_lea.vmem %s1, 130
  %132 = vst.msk [vmem:[%s131] ss:$16 sm:$0xc0] %vm124, %v123
  %s133 = scalar_lea.vmem %s0, 16
  %v134 = vld [vmem:[%s133] sm:$0xff]
  %135 = vrot.lane.b32.xlu0 %v134, 126
  %v136 = vpop.permute.xlu0 %135
  %vm137 = vcmask 7168
  %s138 = scalar_lea.vmem %s1, 258
  %139 = vst.msk [vmem:[%s138] ss:$16 sm:$0x3] %vm137, %v136
  %s140 = scalar_lea.vmem %s1, 258
  %141 = vst.msk [vmem:[%s140] ss:$16 sm:$0xc] %vm137, %v136
  %s142 = scalar_lea.vmem %s1, 258
  %143 = vst.msk [vmem:[%s142] ss:$16 sm:$0x30] %vm137, %v136
  %s144 = scalar_lea.vmem %s1, 258
  %145 = vst.msk [vmem:[%s144] ss:$16 sm:$0xc0] %vm137, %v136
  %s146 = scalar_lea.vmem %s0, 24
  %v147 = vld [vmem:[%s146] sm:$0xff]
  %148 = vrot.lane.b32.xlu0 %v147, 126
  %v149 = vpop.permute.xlu0 %148
  %vm150 = vcmask 7168
  %s151 = scalar_lea.vmem %s1, 386
  %152 = vst.msk [vmem:[%s151] ss:$16 sm:$0x3] %vm150, %v149
  %s153 = scalar_lea.vmem %s1, 386
  %154 = vst.msk [vmem:[%s153] ss:$16 sm:$0xc] %vm150, %v149
  %s155 = scalar_lea.vmem %s1, 386
  %156 = vst.msk [vmem:[%s155] ss:$16 sm:$0x30] %vm150, %v149
  %s157 = scalar_lea.vmem %s1, 386
  %158 = vst.msk [vmem:[%s157] ss:$16 sm:$0xc0] %vm150, %v149
  %s159 = scalar_lea.vmem %s0, 32
  %v160 = vld [vmem:[%s159] sm:$0xf]
  %161 = vrot.lane.b32.xlu0 %v160, 126
  %v162 = vpop.permute.xlu0 %161
  %vm163 = vcmask 7168
  %s164 = scalar_lea.vmem %s1, 514
  %165 = vst.msk [vmem:[%s164] ss:$16 sm:$0x3] %vm163, %v162
  %s166 = scalar_lea.vmem %s1, 514
  %167 = vst.msk [vmem:[%s166] ss:$16 sm:$0xc] %vm163, %v162
  %v168 = vld [vmem:[%s0] sm:$0xff]
  %169 = vrot.lane.b32.xlu0 %v168, 125
  %v170 = vpop.permute.xlu0 %169
  %vm171 = vcmask 7168
  %s172 = scalar_lea.vmem %s1, 3
  %173 = vst.msk [vmem:[%s172] ss:$16 sm:$0x3] %vm171, %v170
  %s174 = scalar_lea.vmem %s1, 3
  %175 = vst.msk [vmem:[%s174] ss:$16 sm:$0xc] %vm171, %v170
  %s176 = scalar_lea.vmem %s1, 3
  %177 = vst.msk [vmem:[%s176] ss:$16 sm:$0x30] %vm171, %v170
  %s178 = scalar_lea.vmem %s1, 3
  %179 = vst.msk [vmem:[%s178] ss:$16 sm:$0xc0] %vm171, %v170
  %s180 = scalar_lea.vmem %s0, 8
  %v181 = vld [vmem:[%s180] sm:$0xff]
  %182 = vrot.lane.b32.xlu0 %v181, 125
  %v183 = vpop.permute.xlu0 %182
  %vm184 = vcmask 7168
  %s185 = scalar_lea.vmem %s1, 131
  %186 = vst.msk [vmem:[%s185] ss:$16 sm:$0x3] %vm184, %v183
  %s187 = scalar_lea.vmem %s1, 131
  %188 = vst.msk [vmem:[%s187] ss:$16 sm:$0xc] %vm184, %v183
  %s189 = scalar_lea.vmem %s1, 131
  %190 = vst.msk [vmem:[%s189] ss:$16 sm:$0x30] %vm184, %v183
  %s191 = scalar_lea.vmem %s1, 131
  %192 = vst.msk [vmem:[%s191] ss:$16 sm:$0xc0] %vm184, %v183
  %s193 = scalar_lea.vmem %s0, 16
  %v194 = vld [vmem:[%s193] sm:$0xff]
  %195 = vrot.lane.b32.xlu0 %v194, 125
  %v196 = vpop.permute.xlu0 %195
  %vm197 = vcmask 7168
  %s198 = scalar_lea.vmem %s1, 259
  %199 = vst.msk [vmem:[%s198] ss:$16 sm:$0x3] %vm197, %v196
  %s200 = scalar_lea.vmem %s1, 259
  %201 = vst.msk [vmem:[%s200] ss:$16 sm:$0xc] %vm197, %v196
  %s202 = scalar_lea.vmem %s1, 259
  %203 = vst.msk [vmem:[%s202] ss:$16 sm:$0x30] %vm197, %v196
  %s204 = scalar_lea.vmem %s1, 259
  %205 = vst.msk [vmem:[%s204] ss:$16 sm:$0xc0] %vm197, %v196
  %s206 = scalar_lea.vmem %s0, 24
  %v207 = vld [vmem:[%s206] sm:$0xff]
  %208 = vrot.lane.b32.xlu0 %v207, 125
  %v209 = vpop.permute.xlu0 %208
  %vm210 = vcmask 7168
  %s211 = scalar_lea.vmem %s1, 387
  %212 = vst.msk [vmem:[%s211] ss:$16 sm:$0x3] %vm210, %v209
  %s213 = scalar_lea.vmem %s1, 387
  %214 = vst.msk [vmem:[%s213] ss:$16 sm:$0xc] %vm210, %v209
  %s215 = scalar_lea.vmem %s1, 387
  %216 = vst.msk [vmem:[%s215] ss:$16 sm:$0x30] %vm210, %v209
  %s217 = scalar_lea.vmem %s1, 387
  %218 = vst.msk [vmem:[%s217] ss:$16 sm:$0xc0] %vm210, %v209
  %s219 = scalar_lea.vmem %s0, 32
  %v220 = vld [vmem:[%s219] sm:$0xf]
  %221 = vrot.lane.b32.xlu0 %v220, 125
  %v222 = vpop.permute.xlu0 %221
  %vm223 = vcmask 7168
  %s224 = scalar_lea.vmem %s1, 515
  %225 = vst.msk [vmem:[%s224] ss:$16 sm:$0x3] %vm223, %v222
  %s226 = scalar_lea.vmem %s1, 515
  %227 = vst.msk [vmem:[%s226] ss:$16 sm:$0xc] %vm223, %v222
  %v228 = vld [vmem:[%s0] sm:$0xff]
  %229 = vrot.lane.b32.xlu0 %v228, 124
  %v230 = vpop.permute.xlu0 %229
  %vm231 = vcmask 7168
  %s232 = scalar_lea.vmem %s1, 4
  %233 = vst.msk [vmem:[%s232] ss:$16 sm:$0x3] %vm231, %v230
  %s234 = scalar_lea.vmem %s1, 4
  %235 = vst.msk [vmem:[%s234] ss:$16 sm:$0xc] %vm231, %v230
  %s236 = scalar_lea.vmem %s1, 4
  %237 = vst.msk [vmem:[%s236] ss:$16 sm:$0x30] %vm231, %v230
  %s238 = scalar_lea.vmem %s1, 4
  %239 = vst.msk [vmem:[%s238] ss:$16 sm:$0xc0] %vm231, %v230
  %s240 = scalar_lea.vmem %s0, 8
  %v241 = vld [vmem:[%s240] sm:$0xff]
  %242 = vrot.lane.b32.xlu0 %v241, 124
  %v243 = vpop.permute.xlu0 %242
  %vm244 = vcmask 7168
  %s245 = scalar_lea.vmem %s1, 132
  %246 = vst.msk [vmem:[%s245] ss:$16 sm:$0x3] %vm244, %v243
  %s247 = scalar_lea.vmem %s1, 132
  %248 = vst.msk [vmem:[%s247] ss:$16 sm:$0xc] %vm244, %v243
  %s249 = scalar_lea.vmem %s1, 132
  %250 = vst.msk [vmem:[%s249] ss:$16 sm:$0x30] %vm244, %v243
  %s251 = scalar_lea.vmem %s1, 132
  %252 = vst.msk [vmem:[%s251] ss:$16 sm:$0xc0] %vm244, %v243
  %s253 = scalar_lea.vmem %s0, 16
  %v254 = vld [vmem:[%s253] sm:$0xff]
  %255 = vrot.lane.b32.xlu0 %v254, 124
  %v256 = vpop.permute.xlu0 %255
  %vm257 = vcmask 7168
  %s258 = scalar_lea.vmem %s1, 260
  %259 = vst.msk [vmem:[%s258] ss:$16 sm:$0x3] %vm257, %v256
  %s260 = scalar_lea.vmem %s1, 260
  %261 = vst.msk [vmem:[%s260] ss:$16 sm:$0xc] %vm257, %v256
  %s262 = scalar_lea.vmem %s1, 260
  %263 = vst.msk [vmem:[%s262] ss:$16 sm:$0x30] %vm257, %v256
  %s264 = scalar_lea.vmem %s1, 260
  %265 = vst.msk [vmem:[%s264] ss:$16 sm:$0xc0] %vm257, %v256
  %s266 = scalar_lea.vmem %s0, 24
  %v267 = vld [vmem:[%s266] sm:$0xff]
  %268 = vrot.lane.b32.xlu0 %v267, 124
  %v269 = vpop.permute.xlu0 %268
  %vm270 = vcmask 7168
  %s271 = scalar_lea.vmem %s1, 388
  %272 = vst.msk [vmem:[%s271] ss:$16 sm:$0x3] %vm270, %v269
  %s273 = scalar_lea.vmem %s1, 388
  %274 = vst.msk [vmem:[%s273] ss:$16 sm:$0xc] %vm270, %v269
  %s275 = scalar_lea.vmem %s1, 388
  %276 = vst.msk [vmem:[%s275] ss:$16 sm:$0x30] %vm270, %v269
  %s277 = scalar_lea.vmem %s1, 388
  %278 = vst.msk [vmem:[%s277] ss:$16 sm:$0xc0] %vm270, %v269
  %s279 = scalar_lea.vmem %s0, 32
  %v280 = vld [vmem:[%s279] sm:$0xf]
  %281 = vrot.lane.b32.xlu0 %v280, 124
  %v282 = vpop.permute.xlu0 %281
  %vm283 = vcmask 7168
  %s284 = scalar_lea.vmem %s1, 516
  %285 = vst.msk [vmem:[%s284] ss:$16 sm:$0x3] %vm283, %v282
  %s286 = scalar_lea.vmem %s1, 516
  %287 = vst.msk [vmem:[%s286] ss:$16 sm:$0xc] %vm283, %v282
  %v288 = vld [vmem:[%s0] sm:$0xff]
  %289 = vrot.lane.b32.xlu0 %v288, 123
  %v290 = vpop.permute.xlu0 %289
  %vm291 = vcmask 7168
  %s292 = scalar_lea.vmem %s1, 5
  %293 = vst.msk [vmem:[%s292] ss:$16 sm:$0x3] %vm291, %v290
  %s294 = scalar_lea.vmem %s1, 5
  %295 = vst.msk [vmem:[%s294] ss:$16 sm:$0xc] %vm291, %v290
  %s296 = scalar_lea.vmem %s1, 5
  %297 = vst.msk [vmem:[%s296] ss:$16 sm:$0x30] %vm291, %v290
  %s298 = scalar_lea.vmem %s1, 5
  %299 = vst.msk [vmem:[%s298] ss:$16 sm:$0xc0] %vm291, %v290
  %s300 = scalar_lea.vmem %s0, 8
  %v301 = vld [vmem:[%s300] sm:$0xff]
  %302 = vrot.lane.b32.xlu0 %v301, 123
  %v303 = vpop.permute.xlu0 %302
  %vm304 = vcmask 7168
  %s305 = scalar_lea.vmem %s1, 133
  %306 = vst.msk [vmem:[%s305] ss:$16 sm:$0x3] %vm304, %v303
  %s307 = scalar_lea.vmem %s1, 133
  %308 = vst.msk [vmem:[%s307] ss:$16 sm:$0xc] %vm304, %v303
  %s309 = scalar_lea.vmem %s1, 133
  %310 = vst.msk [vmem:[%s309] ss:$16 sm:$0x30] %vm304, %v303
  %s311 = scalar_lea.vmem %s1, 133
  %312 = vst.msk [vmem:[%s311] ss:$16 sm:$0xc0] %vm304, %v303
  %s313 = scalar_lea.vmem %s0, 16
  %v314 = vld [vmem:[%s313] sm:$0xff]
  %315 = vrot.lane.b32.xlu0 %v314, 123
  %v316 = vpop.permute.xlu0 %315
  %vm317 = vcmask 7168
  %s318 = scalar_lea.vmem %s1, 261
  %319 = vst.msk [vmem:[%s318] ss:$16 sm:$0x3] %vm317, %v316
  %s320 = scalar_lea.vmem %s1, 261
  %321 = vst.msk [vmem:[%s320] ss:$16 sm:$0xc] %vm317, %v316
  %s322 = scalar_lea.vmem %s1, 261
  %323 = vst.msk [vmem:[%s322] ss:$16 sm:$0x30] %vm317, %v316
  %s324 = scalar_lea.vmem %s1, 261
  %325 = vst.msk [vmem:[%s324] ss:$16 sm:$0xc0] %vm317, %v316
  %s326 = scalar_lea.vmem %s0, 24
  %v327 = vld [vmem:[%s326] sm:$0xff]
  %328 = vrot.lane.b32.xlu0 %v327, 123
  %v329 = vpop.permute.xlu0 %328
  %vm330 = vcmask 7168
  %s331 = scalar_lea.vmem %s1, 389
  %332 = vst.msk [vmem:[%s331] ss:$16 sm:$0x3] %vm330, %v329
  %s333 = scalar_lea.vmem %s1, 389
  %334 = vst.msk [vmem:[%s333] ss:$16 sm:$0xc] %vm330, %v329
  %s335 = scalar_lea.vmem %s1, 389
  %336 = vst.msk [vmem:[%s335] ss:$16 sm:$0x30] %vm330, %v329
  %s337 = scalar_lea.vmem %s1, 389
  %338 = vst.msk [vmem:[%s337] ss:$16 sm:$0xc0] %vm330, %v329
  %s339 = scalar_lea.vmem %s0, 32
  %v340 = vld [vmem:[%s339] sm:$0xf]
  %341 = vrot.lane.b32.xlu0 %v340, 123
  %v342 = vpop.permute.xlu0 %341
  %vm343 = vcmask 7168
  %s344 = scalar_lea.vmem %s1, 517
  %345 = vst.msk [vmem:[%s344] ss:$16 sm:$0x3] %vm343, %v342
  %s346 = scalar_lea.vmem %s1, 517
  %347 = vst.msk [vmem:[%s346] ss:$16 sm:$0xc] %vm343, %v342
  %v348 = vld [vmem:[%s0] sm:$0xff]
  %349 = vrot.lane.b32.xlu0 %v348, 122
  %v350 = vpop.permute.xlu0 %349
  %vm351 = vcmask 7168
  %s352 = scalar_lea.vmem %s1, 6
  %353 = vst.msk [vmem:[%s352] ss:$16 sm:$0x3] %vm351, %v350
  %s354 = scalar_lea.vmem %s1, 6
  %355 = vst.msk [vmem:[%s354] ss:$16 sm:$0xc] %vm351, %v350
  %s356 = scalar_lea.vmem %s1, 6
  %357 = vst.msk [vmem:[%s356] ss:$16 sm:$0x30] %vm351, %v350
  %s358 = scalar_lea.vmem %s1, 6
  %359 = vst.msk [vmem:[%s358] ss:$16 sm:$0xc0] %vm351, %v350
  %s360 = scalar_lea.vmem %s0, 8
  %v361 = vld [vmem:[%s360] sm:$0xff]
  %362 = vrot.lane.b32.xlu0 %v361, 122
  %v363 = vpop.permute.xlu0 %362
  %vm364 = vcmask 7168
  %s365 = scalar_lea.vmem %s1, 134
  %366 = vst.msk [vmem:[%s365] ss:$16 sm:$0x3] %vm364, %v363
  %s367 = scalar_lea.vmem %s1, 134
  %368 = vst.msk [vmem:[%s367] ss:$16 sm:$0xc] %vm364, %v363
  %s369 = scalar_lea.vmem %s1, 134
  %370 = vst.msk [vmem:[%s369] ss:$16 sm:$0x30] %vm364, %v363
  %s371 = scalar_lea.vmem %s1, 134
  %372 = vst.msk [vmem:[%s371] ss:$16 sm:$0xc0] %vm364, %v363
  %s373 = scalar_lea.vmem %s0, 16
  %v374 = vld [vmem:[%s373] sm:$0xff]
  %375 = vrot.lane.b32.xlu0 %v374, 122
  %v376 = vpop.permute.xlu0 %375
  %vm377 = vcmask 7168
  %s378 = scalar_lea.vmem %s1, 262
  %379 = vst.msk [vmem:[%s378] ss:$16 sm:$0x3] %vm377, %v376
  %s380 = scalar_lea.vmem %s1, 262
  %381 = vst.msk [vmem:[%s380] ss:$16 sm:$0xc] %vm377, %v376
  %s382 = scalar_lea.vmem %s1, 262
  %383 = vst.msk [vmem:[%s382] ss:$16 sm:$0x30] %vm377, %v376
  %s384 = scalar_lea.vmem %s1, 262
  %385 = vst.msk [vmem:[%s384] ss:$16 sm:$0xc0] %vm377, %v376
  %s386 = scalar_lea.vmem %s0, 24
  %v387 = vld [vmem:[%s386] sm:$0xff]
  %388 = vrot.lane.b32.xlu0 %v387, 122
  %v389 = vpop.permute.xlu0 %388
  %vm390 = vcmask 7168
  %s391 = scalar_lea.vmem %s1, 390
  %392 = vst.msk [vmem:[%s391] ss:$16 sm:$0x3] %vm390, %v389
  %s393 = scalar_lea.vmem %s1, 390
  %394 = vst.msk [vmem:[%s393] ss:$16 sm:$0xc] %vm390, %v389
  %s395 = scalar_lea.vmem %s1, 390
  %396 = vst.msk [vmem:[%s395] ss:$16 sm:$0x30] %vm390, %v389
  %s397 = scalar_lea.vmem %s1, 390
  %398 = vst.msk [vmem:[%s397] ss:$16 sm:$0xc0] %vm390, %v389
  %s399 = scalar_lea.vmem %s0, 32
  %v400 = vld [vmem:[%s399] sm:$0xf]
  %401 = vrot.lane.b32.xlu0 %v400, 122
  %v402 = vpop.permute.xlu0 %401
  %vm403 = vcmask 7168
  %s404 = scalar_lea.vmem %s1, 518
  %405 = vst.msk [vmem:[%s404] ss:$16 sm:$0x3] %vm403, %v402
  %s406 = scalar_lea.vmem %s1, 518
  %407 = vst.msk [vmem:[%s406] ss:$16 sm:$0xc] %vm403, %v402
  %v408 = vld [vmem:[%s0] sm:$0xff]
  %409 = vrot.lane.b32.xlu0 %v408, 121
  %v410 = vpop.permute.xlu0 %409
  %vm411 = vcmask 7168
  %s412 = scalar_lea.vmem %s1, 7
  %413 = vst.msk [vmem:[%s412] ss:$16 sm:$0x3] %vm411, %v410
  %s414 = scalar_lea.vmem %s1, 7
  %415 = vst.msk [vmem:[%s414] ss:$16 sm:$0xc] %vm411, %v410
  %s416 = scalar_lea.vmem %s1, 7
  %417 = vst.msk [vmem:[%s416] ss:$16 sm:$0x30] %vm411, %v410
  %s418 = scalar_lea.vmem %s1, 7
  %419 = vst.msk [vmem:[%s418] ss:$16 sm:$0xc0] %vm411, %v410
  %s420 = scalar_lea.vmem %s0, 8
  %v421 = vld [vmem:[%s420] sm:$0xff]
  %422 = vrot.lane.b32.xlu0 %v421, 121
  %v423 = vpop.permute.xlu0 %422
  %vm424 = vcmask 7168
  %s425 = scalar_lea.vmem %s1, 135
  %426 = vst.msk [vmem:[%s425] ss:$16 sm:$0x3] %vm424, %v423
  %s427 = scalar_lea.vmem %s1, 135
  %428 = vst.msk [vmem:[%s427] ss:$16 sm:$0xc] %vm424, %v423
  %s429 = scalar_lea.vmem %s1, 135
  %430 = vst.msk [vmem:[%s429] ss:$16 sm:$0x30] %vm424, %v423
  %s431 = scalar_lea.vmem %s1, 135
  %432 = vst.msk [vmem:[%s431] ss:$16 sm:$0xc0] %vm424, %v423
  %s433 = scalar_lea.vmem %s0, 16
  %v434 = vld [vmem:[%s433] sm:$0xff]
  %435 = vrot.lane.b32.xlu0 %v434, 121
  %v436 = vpop.permute.xlu0 %435
  %vm437 = vcmask 7168
  %s438 = scalar_lea.vmem %s1, 263
  %439 = vst.msk [vmem:[%s438] ss:$16 sm:$0x3] %vm437, %v436
  %s440 = scalar_lea.vmem %s1, 263
  %441 = vst.msk [vmem:[%s440] ss:$16 sm:$0xc] %vm437, %v436
  %s442 = scalar_lea.vmem %s1, 263
  %443 = vst.msk [vmem:[%s442] ss:$16 sm:$0x30] %vm437, %v436
  %s444 = scalar_lea.vmem %s1, 263
  %445 = vst.msk [vmem:[%s444] ss:$16 sm:$0xc0] %vm437, %v436
  %s446 = scalar_lea.vmem %s0, 24
  %v447 = vld [vmem:[%s446] sm:$0xff]
  %448 = vrot.lane.b32.xlu0 %v447, 121
  %v449 = vpop.permute.xlu0 %448
  %vm450 = vcmask 7168
  %s451 = scalar_lea.vmem %s1, 391
  %452 = vst.msk [vmem:[%s451] ss:$16 sm:$0x3] %vm450, %v449
  %s453 = scalar_lea.vmem %s1, 391
  %454 = vst.msk [vmem:[%s453] ss:$16 sm:$0xc] %vm450, %v449
  %s455 = scalar_lea.vmem %s1, 391
  %456 = vst.msk [vmem:[%s455] ss:$16 sm:$0x30] %vm450, %v449
  %s457 = scalar_lea.vmem %s1, 391
  %458 = vst.msk [vmem:[%s457] ss:$16 sm:$0xc0] %vm450, %v449
  %s459 = scalar_lea.vmem %s0, 32
  %v460 = vld [vmem:[%s459] sm:$0xf]
  %461 = vrot.lane.b32.xlu0 %v460, 121
  %v462 = vpop.permute.xlu0 %461
  %vm463 = vcmask 7168
  %s464 = scalar_lea.vmem %s1, 519
  %465 = vst.msk [vmem:[%s464] ss:$16 sm:$0x3] %vm463, %v462
  %s466 = scalar_lea.vmem %s1, 519
  %467 = vst.msk [vmem:[%s466] ss:$16 sm:$0xc] %vm463, %v462
  %v468 = vld [vmem:[%s0] sm:$0xff]
  %469 = vrot.lane.b32.xlu0 %v468, 120
  %v470 = vpop.permute.xlu0 %469
  %vm471 = vcmask 7168
  %s472 = scalar_lea.vmem %s1, 8
  %473 = vst.msk [vmem:[%s472] ss:$16 sm:$0x3] %vm471, %v470
  %s474 = scalar_lea.vmem %s1, 8
  %475 = vst.msk [vmem:[%s474] ss:$16 sm:$0xc] %vm471, %v470
  %s476 = scalar_lea.vmem %s1, 8
  %477 = vst.msk [vmem:[%s476] ss:$16 sm:$0x30] %vm471, %v470
  %s478 = scalar_lea.vmem %s1, 8
  %479 = vst.msk [vmem:[%s478] ss:$16 sm:$0xc0] %vm471, %v470
  %s480 = scalar_lea.vmem %s0, 8
  %v481 = vld [vmem:[%s480] sm:$0xff]
  %482 = vrot.lane.b32.xlu0 %v481, 120
  %v483 = vpop.permute.xlu0 %482
  %vm484 = vcmask 7168
  %s485 = scalar_lea.vmem %s1, 136
  %486 = vst.msk [vmem:[%s485] ss:$16 sm:$0x3] %vm484, %v483
  %s487 = scalar_lea.vmem %s1, 136
  %488 = vst.msk [vmem:[%s487] ss:$16 sm:$0xc] %vm484, %v483
  %s489 = scalar_lea.vmem %s1, 136
  %490 = vst.msk [vmem:[%s489] ss:$16 sm:$0x30] %vm484, %v483
  %s491 = scalar_lea.vmem %s1, 136
  %492 = vst.msk [vmem:[%s491] ss:$16 sm:$0xc0] %vm484, %v483
  %s493 = scalar_lea.vmem %s0, 16
  %v494 = vld [vmem:[%s493] sm:$0xff]
  %495 = vrot.lane.b32.xlu0 %v494, 120
  %v496 = vpop.permute.xlu0 %495
  %vm497 = vcmask 7168
  %s498 = scalar_lea.vmem %s1, 264
  %499 = vst.msk [vmem:[%s498] ss:$16 sm:$0x3] %vm497, %v496
  %s500 = scalar_lea.vmem %s1, 264
  %501 = vst.msk [vmem:[%s500] ss:$16 sm:$0xc] %vm497, %v496
  %s502 = scalar_lea.vmem %s1, 264
  %503 = vst.msk [vmem:[%s502] ss:$16 sm:$0x30] %vm497, %v496
  %s504 = scalar_lea.vmem %s1, 264
  %505 = vst.msk [vmem:[%s504] ss:$16 sm:$0xc0] %vm497, %v496
  %s506 = scalar_lea.vmem %s0, 24
  %v507 = vld [vmem:[%s506] sm:$0xff]
  %508 = vrot.lane.b32.xlu0 %v507, 120
  %v509 = vpop.permute.xlu0 %508
  %vm510 = vcmask 7168
  %s511 = scalar_lea.vmem %s1, 392
  %512 = vst.msk [vmem:[%s511] ss:$16 sm:$0x3] %vm510, %v509
  %s513 = scalar_lea.vmem %s1, 392
  %514 = vst.msk [vmem:[%s513] ss:$16 sm:$0xc] %vm510, %v509
  %s515 = scalar_lea.vmem %s1, 392
  %516 = vst.msk [vmem:[%s515] ss:$16 sm:$0x30] %vm510, %v509
  %s517 = scalar_lea.vmem %s1, 392
  %518 = vst.msk [vmem:[%s517] ss:$16 sm:$0xc0] %vm510, %v509
  %s519 = scalar_lea.vmem %s0, 32
  %v520 = vld [vmem:[%s519] sm:$0xf]
  %521 = vrot.lane.b32.xlu0 %v520, 120
  %v522 = vpop.permute.xlu0 %521
  %vm523 = vcmask 7168
  %s524 = scalar_lea.vmem %s1, 520
  %525 = vst.msk [vmem:[%s524] ss:$16 sm:$0x3] %vm523, %v522
  %s526 = scalar_lea.vmem %s1, 520
  %527 = vst.msk [vmem:[%s526] ss:$16 sm:$0xc] %vm523, %v522
  %v528 = vld [vmem:[%s0] sm:$0xff]
  %529 = vrot.lane.b32.xlu0 %v528, 119
  %v530 = vpop.permute.xlu0 %529
  %vm531 = vcmask 7168
  %s532 = scalar_lea.vmem %s1, 9
  %533 = vst.msk [vmem:[%s532] ss:$16 sm:$0x3] %vm531, %v530
  %s534 = scalar_lea.vmem %s1, 9
  %535 = vst.msk [vmem:[%s534] ss:$16 sm:$0xc] %vm531, %v530
  %s536 = scalar_lea.vmem %s1, 9
  %537 = vst.msk [vmem:[%s536] ss:$16 sm:$0x30] %vm531, %v530
  %s538 = scalar_lea.vmem %s1, 9
  %539 = vst.msk [vmem:[%s538] ss:$16 sm:$0xc0] %vm531, %v530
  %s540 = scalar_lea.vmem %s0, 8
  %v541 = vld [vmem:[%s540] sm:$0xff]
  %542 = vrot.lane.b32.xlu0 %v541, 119
  %v543 = vpop.permute.xlu0 %542
  %vm544 = vcmask 7168
  %s545 = scalar_lea.vmem %s1, 137
  %546 = vst.msk [vmem:[%s545] ss:$16 sm:$0x3] %vm544, %v543
  %s547 = scalar_lea.vmem %s1, 137
  %548 = vst.msk [vmem:[%s547] ss:$16 sm:$0xc] %vm544, %v543
  %s549 = scalar_lea.vmem %s1, 137
  %550 = vst.msk [vmem:[%s549] ss:$16 sm:$0x30] %vm544, %v543
  %s551 = scalar_lea.vmem %s1, 137
  %552 = vst.msk [vmem:[%s551] ss:$16 sm:$0xc0] %vm544, %v543
  %s553 = scalar_lea.vmem %s0, 16
  %v554 = vld [vmem:[%s553] sm:$0xff]
  %555 = vrot.lane.b32.xlu0 %v554, 119
  %v556 = vpop.permute.xlu0 %555
  %vm557 = vcmask 7168
  %s558 = scalar_lea.vmem %s1, 265
  %559 = vst.msk [vmem:[%s558] ss:$16 sm:$0x3] %vm557, %v556
  %s560 = scalar_lea.vmem %s1, 265
  %561 = vst.msk [vmem:[%s560] ss:$16 sm:$0xc] %vm557, %v556
  %s562 = scalar_lea.vmem %s1, 265
  %563 = vst.msk [vmem:[%s562] ss:$16 sm:$0x30] %vm557, %v556
  %s564 = scalar_lea.vmem %s1, 265
  %565 = vst.msk [vmem:[%s564] ss:$16 sm:$0xc0] %vm557, %v556
  %s566 = scalar_lea.vmem %s0, 24
  %v567 = vld [vmem:[%s566] sm:$0xff]
  %568 = vrot.lane.b32.xlu0 %v567, 119
  %v569 = vpop.permute.xlu0 %568
  %vm570 = vcmask 7168
  %s571 = scalar_lea.vmem %s1, 393
  %572 = vst.msk [vmem:[%s571] ss:$16 sm:$0x3] %vm570, %v569
  %s573 = scalar_lea.vmem %s1, 393
  %574 = vst.msk [vmem:[%s573] ss:$16 sm:$0xc] %vm570, %v569
  %s575 = scalar_lea.vmem %s1, 393
  %576 = vst.msk [vmem:[%s575] ss:$16 sm:$0x30] %vm570, %v569
  %s577 = scalar_lea.vmem %s1, 393
  %578 = vst.msk [vmem:[%s577] ss:$16 sm:$0xc0] %vm570, %v569
  %s579 = scalar_lea.vmem %s0, 32
  %v580 = vld [vmem:[%s579] sm:$0xf]
  %581 = vrot.lane.b32.xlu0 %v580, 119
  %v582 = vpop.permute.xlu0 %581
  %vm583 = vcmask 7168
  %s584 = scalar_lea.vmem %s1, 521
  %585 = vst.msk [vmem:[%s584] ss:$16 sm:$0x3] %vm583, %v582
  %s586 = scalar_lea.vmem %s1, 521
  %587 = vst.msk [vmem:[%s586] ss:$16 sm:$0xc] %vm583, %v582
  %v588 = vld [vmem:[%s0] sm:$0xff]
  %589 = vrot.lane.b32.xlu0 %v588, 118
  %v590 = vpop.permute.xlu0 %589
  %vm591 = vcmask 7168
  %s592 = scalar_lea.vmem %s1, 10
  %593 = vst.msk [vmem:[%s592] ss:$16 sm:$0x3] %vm591, %v590
  %s594 = scalar_lea.vmem %s1, 10
  %595 = vst.msk [vmem:[%s594] ss:$16 sm:$0xc] %vm591, %v590
  %s596 = scalar_lea.vmem %s1, 10
  %597 = vst.msk [vmem:[%s596] ss:$16 sm:$0x30] %vm591, %v590
  %s598 = scalar_lea.vmem %s1, 10
  %599 = vst.msk [vmem:[%s598] ss:$16 sm:$0xc0] %vm591, %v590
  %s600 = scalar_lea.vmem %s0, 8
  %v601 = vld [vmem:[%s600] sm:$0xff]
  %602 = vrot.lane.b32.xlu0 %v601, 118
  %v603 = vpop.permute.xlu0 %602
  %vm604 = vcmask 7168
  %s605 = scalar_lea.vmem %s1, 138
  %606 = vst.msk [vmem:[%s605] ss:$16 sm:$0x3] %vm604, %v603
  %s607 = scalar_lea.vmem %s1, 138
  %608 = vst.msk [vmem:[%s607] ss:$16 sm:$0xc] %vm604, %v603
  %s609 = scalar_lea.vmem %s1, 138
  %610 = vst.msk [vmem:[%s609] ss:$16 sm:$0x30] %vm604, %v603
  %s611 = scalar_lea.vmem %s1, 138
  %612 = vst.msk [vmem:[%s611] ss:$16 sm:$0xc0] %vm604, %v603
  %s613 = scalar_lea.vmem %s0, 16
  %v614 = vld [vmem:[%s613] sm:$0xff]
  %615 = vrot.lane.b32.xlu0 %v614, 118
  %v616 = vpop.permute.xlu0 %615
  %vm617 = vcmask 7168
  %s618 = scalar_lea.vmem %s1, 266
  %619 = vst.msk [vmem:[%s618] ss:$16 sm:$0x3] %vm617, %v616
  %s620 = scalar_lea.vmem %s1, 266
  %621 = vst.msk [vmem:[%s620] ss:$16 sm:$0xc] %vm617, %v616
  %s622 = scalar_lea.vmem %s1, 266
  %623 = vst.msk [vmem:[%s622] ss:$16 sm:$0x30] %vm617, %v616
  %s624 = scalar_lea.vmem %s1, 266
  %625 = vst.msk [vmem:[%s624] ss:$16 sm:$0xc0] %vm617, %v616
  %s626 = scalar_lea.vmem %s0, 24
  %v627 = vld [vmem:[%s626] sm:$0xff]
  %628 = vrot.lane.b32.xlu0 %v627, 118
  %v629 = vpop.permute.xlu0 %628
  %vm630 = vcmask 7168
  %s631 = scalar_lea.vmem %s1, 394
  %632 = vst.msk [vmem:[%s631] ss:$16 sm:$0x3] %vm630, %v629
  %s633 = scalar_lea.vmem %s1, 394
  %634 = vst.msk [vmem:[%s633] ss:$16 sm:$0xc] %vm630, %v629
  %s635 = scalar_lea.vmem %s1, 394
  %636 = vst.msk [vmem:[%s635] ss:$16 sm:$0x30] %vm630, %v629
  %s637 = scalar_lea.vmem %s1, 394
  %638 = vst.msk [vmem:[%s637] ss:$16 sm:$0xc0] %vm630, %v629
  %s639 = scalar_lea.vmem %s0, 32
  %v640 = vld [vmem:[%s639] sm:$0xf]
  %641 = vrot.lane.b32.xlu0 %v640, 118
  %v642 = vpop.permute.xlu0 %641
  %vm643 = vcmask 7168
  %s644 = scalar_lea.vmem %s1, 522
  %645 = vst.msk [vmem:[%s644] ss:$16 sm:$0x3] %vm643, %v642
  %s646 = scalar_lea.vmem %s1, 522
  %647 = vst.msk [vmem:[%s646] ss:$16 sm:$0xc] %vm643, %v642
  %v648 = vld [vmem:[%s0] sm:$0xff]
  %649 = vrot.lane.b32.xlu0 %v648, 117
  %v650 = vpop.permute.xlu0 %649
  %vm651 = vcmask 7168
  %s652 = scalar_lea.vmem %s1, 11
  %653 = vst.msk [vmem:[%s652] ss:$16 sm:$0x3] %vm651, %v650
  %s654 = scalar_lea.vmem %s1, 11
  %655 = vst.msk [vmem:[%s654] ss:$16 sm:$0xc] %vm651, %v650
  %s656 = scalar_lea.vmem %s1, 11
  %657 = vst.msk [vmem:[%s656] ss:$16 sm:$0x30] %vm651, %v650
  %s658 = scalar_lea.vmem %s1, 11
  %659 = vst.msk [vmem:[%s658] ss:$16 sm:$0xc0] %vm651, %v650
  %s660 = scalar_lea.vmem %s0, 8
  %v661 = vld [vmem:[%s660] sm:$0xff]
  %662 = vrot.lane.b32.xlu0 %v661, 117
  %v663 = vpop.permute.xlu0 %662
  %vm664 = vcmask 7168
  %s665 = scalar_lea.vmem %s1, 139
  %666 = vst.msk [vmem:[%s665] ss:$16 sm:$0x3] %vm664, %v663
  %s667 = scalar_lea.vmem %s1, 139
  %668 = vst.msk [vmem:[%s667] ss:$16 sm:$0xc] %vm664, %v663
  %s669 = scalar_lea.vmem %s1, 139
  %670 = vst.msk [vmem:[%s669] ss:$16 sm:$0x30] %vm664, %v663
  %s671 = scalar_lea.vmem %s1, 139
  %672 = vst.msk [vmem:[%s671] ss:$16 sm:$0xc0] %vm664, %v663
  %s673 = scalar_lea.vmem %s0, 16
  %v674 = vld [vmem:[%s673] sm:$0xff]
  %675 = vrot.lane.b32.xlu0 %v674, 117
  %v676 = vpop.permute.xlu0 %675
  %vm677 = vcmask 7168
  %s678 = scalar_lea.vmem %s1, 267
  %679 = vst.msk [vmem:[%s678] ss:$16 sm:$0x3] %vm677, %v676
  %s680 = scalar_lea.vmem %s1, 267
  %681 = vst.msk [vmem:[%s680] ss:$16 sm:$0xc] %vm677, %v676
  %s682 = scalar_lea.vmem %s1, 267
  %683 = vst.msk [vmem:[%s682] ss:$16 sm:$0x30] %vm677, %v676
  %s684 = scalar_lea.vmem %s1, 267
  %685 = vst.msk [vmem:[%s684] ss:$16 sm:$0xc0] %vm677, %v676
  %s686 = scalar_lea.vmem %s0, 24
  %v687 = vld [vmem:[%s686] sm:$0xff]
  %688 = vrot.lane.b32.xlu0 %v687, 117
  %v689 = vpop.permute.xlu0 %688
  %vm690 = vcmask 7168
  %s691 = scalar_lea.vmem %s1, 395
  %692 = vst.msk [vmem:[%s691] ss:$16 sm:$0x3] %vm690, %v689
  %s693 = scalar_lea.vmem %s1, 395
  %694 = vst.msk [vmem:[%s693] ss:$16 sm:$0xc] %vm690, %v689
  %s695 = scalar_lea.vmem %s1, 395
  %696 = vst.msk [vmem:[%s695] ss:$16 sm:$0x30] %vm690, %v689
  %s697 = scalar_lea.vmem %s1, 395
  %698 = vst.msk [vmem:[%s697] ss:$16 sm:$0xc0] %vm690, %v689
  %s699 = scalar_lea.vmem %s0, 32
  %v700 = vld [vmem:[%s699] sm:$0xf]
  %701 = vrot.lane.b32.xlu0 %v700, 117
  %v702 = vpop.permute.xlu0 %701
  %vm703 = vcmask 7168
  %s704 = scalar_lea.vmem %s1, 523
  %705 = vst.msk [vmem:[%s704] ss:$16 sm:$0x3] %vm703, %v702
  %s706 = scalar_lea.vmem %s1, 523
  %707 = vst.msk [vmem:[%s706] ss:$16 sm:$0xc] %vm703, %v702
  %v708 = vld [vmem:[%s0] sm:$0xff]
  %709 = vrot.lane.b32.xlu0 %v708, 116
  %v710 = vpop.permute.xlu0 %709
  %vm711 = vcmask 7168
  %s712 = scalar_lea.vmem %s1, 12
  %713 = vst.msk [vmem:[%s712] ss:$16 sm:$0x3] %vm711, %v710
  %s714 = scalar_lea.vmem %s1, 12
  %715 = vst.msk [vmem:[%s714] ss:$16 sm:$0xc] %vm711, %v710
  %s716 = scalar_lea.vmem %s1, 12
  %717 = vst.msk [vmem:[%s716] ss:$16 sm:$0x30] %vm711, %v710
  %s718 = scalar_lea.vmem %s1, 12
  %719 = vst.msk [vmem:[%s718] ss:$16 sm:$0xc0] %vm711, %v710
  %s720 = scalar_lea.vmem %s0, 8
  %v721 = vld [vmem:[%s720] sm:$0xff]
  %722 = vrot.lane.b32.xlu0 %v721, 116
  %v723 = vpop.permute.xlu0 %722
  %vm724 = vcmask 7168
  %s725 = scalar_lea.vmem %s1, 140
  %726 = vst.msk [vmem:[%s725] ss:$16 sm:$0x3] %vm724, %v723
  %s727 = scalar_lea.vmem %s1, 140
  %728 = vst.msk [vmem:[%s727] ss:$16 sm:$0xc] %vm724, %v723
  %s729 = scalar_lea.vmem %s1, 140
  %730 = vst.msk [vmem:[%s729] ss:$16 sm:$0x30] %vm724, %v723
  %s731 = scalar_lea.vmem %s1, 140
  %732 = vst.msk [vmem:[%s731] ss:$16 sm:$0xc0] %vm724, %v723
  %s733 = scalar_lea.vmem %s0, 16
  %v734 = vld [vmem:[%s733] sm:$0xff]
  %735 = vrot.lane.b32.xlu0 %v734, 116
  %v736 = vpop.permute.xlu0 %735
  %vm737 = vcmask 7168
  %s738 = scalar_lea.vmem %s1, 268
  %739 = vst.msk [vmem:[%s738] ss:$16 sm:$0x3] %vm737, %v736
  %s740 = scalar_lea.vmem %s1, 268
  %741 = vst.msk [vmem:[%s740] ss:$16 sm:$0xc] %vm737, %v736
  %s742 = scalar_lea.vmem %s1, 268
  %743 = vst.msk [vmem:[%s742] ss:$16 sm:$0x30] %vm737, %v736
  %s744 = scalar_lea.vmem %s1, 268
  %745 = vst.msk [vmem:[%s744] ss:$16 sm:$0xc0] %vm737, %v736
  %s746 = scalar_lea.vmem %s0, 24
  %v747 = vld [vmem:[%s746] sm:$0xff]
  %748 = vrot.lane.b32.xlu0 %v747, 116
  %v749 = vpop.permute.xlu0 %748
  %vm750 = vcmask 7168
  %s751 = scalar_lea.vmem %s1, 396
  %752 = vst.msk [vmem:[%s751] ss:$16 sm:$0x3] %vm750, %v749
  %s753 = scalar_lea.vmem %s1, 396
  %754 = vst.msk [vmem:[%s753] ss:$16 sm:$0xc] %vm750, %v749
  %s755 = scalar_lea.vmem %s1, 396
  %756 = vst.msk [vmem:[%s755] ss:$16 sm:$0x30] %vm750, %v749
  %s757 = scalar_lea.vmem %s1, 396
  %758 = vst.msk [vmem:[%s757] ss:$16 sm:$0xc0] %vm750, %v749
  %s759 = scalar_lea.vmem %s0, 32
  %v760 = vld [vmem:[%s759] sm:$0xf]
  %761 = vrot.lane.b32.xlu0 %v760, 116
  %v762 = vpop.permute.xlu0 %761
  %vm763 = vcmask 7168
  %s764 = scalar_lea.vmem %s1, 524
  %765 = vst.msk [vmem:[%s764] ss:$16 sm:$0x3] %vm763, %v762
  %s766 = scalar_lea.vmem %s1, 524
  %767 = vst.msk [vmem:[%s766] ss:$16 sm:$0xc] %vm763, %v762
  %v768 = vld [vmem:[%s0] sm:$0xff]
  %769 = vrot.lane.b32.xlu0 %v768, 115
  %v770 = vpop.permute.xlu0 %769
  %vm771 = vcmask 7168
  %s772 = scalar_lea.vmem %s1, 13
  %773 = vst.msk [vmem:[%s772] ss:$16 sm:$0x3] %vm771, %v770
  %s774 = scalar_lea.vmem %s1, 13
  %775 = vst.msk [vmem:[%s774] ss:$16 sm:$0xc] %vm771, %v770
  %s776 = scalar_lea.vmem %s1, 13
  %777 = vst.msk [vmem:[%s776] ss:$16 sm:$0x30] %vm771, %v770
  %s778 = scalar_lea.vmem %s1, 13
  %779 = vst.msk [vmem:[%s778] ss:$16 sm:$0xc0] %vm771, %v770
  %s780 = scalar_lea.vmem %s0, 8
  %v781 = vld [vmem:[%s780] sm:$0xff]
  %782 = vrot.lane.b32.xlu0 %v781, 115
  %v783 = vpop.permute.xlu0 %782
  %vm784 = vcmask 7168
  %s785 = scalar_lea.vmem %s1, 141
  %786 = vst.msk [vmem:[%s785] ss:$16 sm:$0x3] %vm784, %v783
  %s787 = scalar_lea.vmem %s1, 141
  %788 = vst.msk [vmem:[%s787] ss:$16 sm:$0xc] %vm784, %v783
  %s789 = scalar_lea.vmem %s1, 141
  %790 = vst.msk [vmem:[%s789] ss:$16 sm:$0x30] %vm784, %v783
  %s791 = scalar_lea.vmem %s1, 141
  %792 = vst.msk [vmem:[%s791] ss:$16 sm:$0xc0] %vm784, %v783
  %s793 = scalar_lea.vmem %s0, 16
  %v794 = vld [vmem:[%s793] sm:$0xff]
  %795 = vrot.lane.b32.xlu0 %v794, 115
  %v796 = vpop.permute.xlu0 %795
  %vm797 = vcmask 7168
  %s798 = scalar_lea.vmem %s1, 269
  %799 = vst.msk [vmem:[%s798] ss:$16 sm:$0x3] %vm797, %v796
  %s800 = scalar_lea.vmem %s1, 269
  %801 = vst.msk [vmem:[%s800] ss:$16 sm:$0xc] %vm797, %v796
  %s802 = scalar_lea.vmem %s1, 269
  %803 = vst.msk [vmem:[%s802] ss:$16 sm:$0x30] %vm797, %v796
  %s804 = scalar_lea.vmem %s1, 269
  %805 = vst.msk [vmem:[%s804] ss:$16 sm:$0xc0] %vm797, %v796
  %s806 = scalar_lea.vmem %s0, 24
  %v807 = vld [vmem:[%s806] sm:$0xff]
  %808 = vrot.lane.b32.xlu0 %v807, 115
  %v809 = vpop.permute.xlu0 %808
  %vm810 = vcmask 7168
  %s811 = scalar_lea.vmem %s1, 397
  %812 = vst.msk [vmem:[%s811] ss:$16 sm:$0x3] %vm810, %v809
  %s813 = scalar_lea.vmem %s1, 397
  %814 = vst.msk [vmem:[%s813] ss:$16 sm:$0xc] %vm810, %v809
  %s815 = scalar_lea.vmem %s1, 397
  %816 = vst.msk [vmem:[%s815] ss:$16 sm:$0x30] %vm810, %v809
  %s817 = scalar_lea.vmem %s1, 397
  %818 = vst.msk [vmem:[%s817] ss:$16 sm:$0xc0] %vm810, %v809
  %s819 = scalar_lea.vmem %s0, 32
  %v820 = vld [vmem:[%s819] sm:$0xf]
  %821 = vrot.lane.b32.xlu0 %v820, 115
  %v822 = vpop.permute.xlu0 %821
  %vm823 = vcmask 7168
  %s824 = scalar_lea.vmem %s1, 525
  %825 = vst.msk [vmem:[%s824] ss:$16 sm:$0x3] %vm823, %v822
  %s826 = scalar_lea.vmem %s1, 525
  %827 = vst.msk [vmem:[%s826] ss:$16 sm:$0xc] %vm823, %v822
  %v828 = vld [vmem:[%s0] sm:$0xff]
  %829 = vrot.lane.b32.xlu0 %v828, 114
  %v830 = vpop.permute.xlu0 %829
  %vm831 = vcmask 7168
  %s832 = scalar_lea.vmem %s1, 14
  %833 = vst.msk [vmem:[%s832] ss:$16 sm:$0x3] %vm831, %v830
  %s834 = scalar_lea.vmem %s1, 14
  %835 = vst.msk [vmem:[%s834] ss:$16 sm:$0xc] %vm831, %v830
  %s836 = scalar_lea.vmem %s1, 14
  %837 = vst.msk [vmem:[%s836] ss:$16 sm:$0x30] %vm831, %v830
  %s838 = scalar_lea.vmem %s1, 14
  %839 = vst.msk [vmem:[%s838] ss:$16 sm:$0xc0] %vm831, %v830
  %s840 = scalar_lea.vmem %s0, 8
  %v841 = vld [vmem:[%s840] sm:$0xff]
  %842 = vrot.lane.b32.xlu0 %v841, 114
  %v843 = vpop.permute.xlu0 %842
  %vm844 = vcmask 7168
  %s845 = scalar_lea.vmem %s1, 142
  %846 = vst.msk [vmem:[%s845] ss:$16 sm:$0x3] %vm844, %v843
  %s847 = scalar_lea.vmem %s1, 142
  %848 = vst.msk [vmem:[%s847] ss:$16 sm:$0xc] %vm844, %v843
  %s849 = scalar_lea.vmem %s1, 142
  %850 = vst.msk [vmem:[%s849] ss:$16 sm:$0x30] %vm844, %v843
  %s851 = scalar_lea.vmem %s1, 142
  %852 = vst.msk [vmem:[%s851] ss:$16 sm:$0xc0] %vm844, %v843
  %s853 = scalar_lea.vmem %s0, 16
  %v854 = vld [vmem:[%s853] sm:$0xff]
  %855 = vrot.lane.b32.xlu0 %v854, 114
  %v856 = vpop.permute.xlu0 %855
  %vm857 = vcmask 7168
  %s858 = scalar_lea.vmem %s1, 270
  %859 = vst.msk [vmem:[%s858] ss:$16 sm:$0x3] %vm857, %v856
  %s860 = scalar_lea.vmem %s1, 270
  %861 = vst.msk [vmem:[%s860] ss:$16 sm:$0xc] %vm857, %v856
  %s862 = scalar_lea.vmem %s1, 270
  %863 = vst.msk [vmem:[%s862] ss:$16 sm:$0x30] %vm857, %v856
  %s864 = scalar_lea.vmem %s1, 270
  %865 = vst.msk [vmem:[%s864] ss:$16 sm:$0xc0] %vm857, %v856
  %s866 = scalar_lea.vmem %s0, 24
  %v867 = vld [vmem:[%s866] sm:$0xff]
  %868 = vrot.lane.b32.xlu0 %v867, 114
  %v869 = vpop.permute.xlu0 %868
  %vm870 = vcmask 7168
  %s871 = scalar_lea.vmem %s1, 398
  %872 = vst.msk [vmem:[%s871] ss:$16 sm:$0x3] %vm870, %v869
  %s873 = scalar_lea.vmem %s1, 398
  %874 = vst.msk [vmem:[%s873] ss:$16 sm:$0xc] %vm870, %v869
  %s875 = scalar_lea.vmem %s1, 398
  %876 = vst.msk [vmem:[%s875] ss:$16 sm:$0x30] %vm870, %v869
  %s877 = scalar_lea.vmem %s1, 398
  %878 = vst.msk [vmem:[%s877] ss:$16 sm:$0xc0] %vm870, %v869
  %s879 = scalar_lea.vmem %s0, 32
  %v880 = vld [vmem:[%s879] sm:$0xf]
  %881 = vrot.lane.b32.xlu0 %v880, 114
  %v882 = vpop.permute.xlu0 %881
  %vm883 = vcmask 7168
  %s884 = scalar_lea.vmem %s1, 526
  %885 = vst.msk [vmem:[%s884] ss:$16 sm:$0x3] %vm883, %v882
  %s886 = scalar_lea.vmem %s1, 526
  %887 = vst.msk [vmem:[%s886] ss:$16 sm:$0xc] %vm883, %v882
  %v888 = vld [vmem:[%s0] sm:$0xff]
  %889 = vrot.lane.b32.xlu0 %v888, 113
  %v890 = vpop.permute.xlu0 %889
  %vm891 = vcmask 7168
  %s892 = scalar_lea.vmem %s1, 15
  %893 = vst.msk [vmem:[%s892] ss:$16 sm:$0x3] %vm891, %v890
  %s894 = scalar_lea.vmem %s1, 15
  %895 = vst.msk [vmem:[%s894] ss:$16 sm:$0xc] %vm891, %v890
  %s896 = scalar_lea.vmem %s1, 15
  %897 = vst.msk [vmem:[%s896] ss:$16 sm:$0x30] %vm891, %v890
  %s898 = scalar_lea.vmem %s1, 15
  %899 = vst.msk [vmem:[%s898] ss:$16 sm:$0xc0] %vm891, %v890
  %s900 = scalar_lea.vmem %s0, 8
  %v901 = vld [vmem:[%s900] sm:$0xff]
  %902 = vrot.lane.b32.xlu0 %v901, 113
  %v903 = vpop.permute.xlu0 %902
  %vm904 = vcmask 7168
  %s905 = scalar_lea.vmem %s1, 143
  %906 = vst.msk [vmem:[%s905] ss:$16 sm:$0x3] %vm904, %v903
  %s907 = scalar_lea.vmem %s1, 143
  %908 = vst.msk [vmem:[%s907] ss:$16 sm:$0xc] %vm904, %v903
  %s909 = scalar_lea.vmem %s1, 143
  %910 = vst.msk [vmem:[%s909] ss:$16 sm:$0x30] %vm904, %v903
  %s911 = scalar_lea.vmem %s1, 143
  %912 = vst.msk [vmem:[%s911] ss:$16 sm:$0xc0] %vm904, %v903
  %s913 = scalar_lea.vmem %s0, 16
  %v914 = vld [vmem:[%s913] sm:$0xff]
  %915 = vrot.lane.b32.xlu0 %v914, 113
  %v916 = vpop.permute.xlu0 %915
  %vm917 = vcmask 7168
  %s918 = scalar_lea.vmem %s1, 271
  %919 = vst.msk [vmem:[%s918] ss:$16 sm:$0x3] %vm917, %v916
  %s920 = scalar_lea.vmem %s1, 271
  %921 = vst.msk [vmem:[%s920] ss:$16 sm:$0xc] %vm917, %v916
  %s922 = scalar_lea.vmem %s1, 271
  %923 = vst.msk [vmem:[%s922] ss:$16 sm:$0x30] %vm917, %v916
  %s924 = scalar_lea.vmem %s1, 271
  %925 = vst.msk [vmem:[%s924] ss:$16 sm:$0xc0] %vm917, %v916
  %s926 = scalar_lea.vmem %s0, 24
  %v927 = vld [vmem:[%s926] sm:$0xff]
  %928 = vrot.lane.b32.xlu0 %v927, 113
  %v929 = vpop.permute.xlu0 %928
  %vm930 = vcmask 7168
  %s931 = scalar_lea.vmem %s1, 399
  %932 = vst.msk [vmem:[%s931] ss:$16 sm:$0x3] %vm930, %v929
  %s933 = scalar_lea.vmem %s1, 399
  %934 = vst.msk [vmem:[%s933] ss:$16 sm:$0xc] %vm930, %v929
  %s935 = scalar_lea.vmem %s1, 399
  %936 = vst.msk [vmem:[%s935] ss:$16 sm:$0x30] %vm930, %v929
  %s937 = scalar_lea.vmem %s1, 399
  %938 = vst.msk [vmem:[%s937] ss:$16 sm:$0xc0] %vm930, %v929
  %s939 = scalar_lea.vmem %s0, 32
  %v940 = vld [vmem:[%s939] sm:$0xf]
  %941 = vrot.lane.b32.xlu0 %v940, 113
  %v942 = vpop.permute.xlu0 %941
  %vm943 = vcmask 7168
  %s944 = scalar_lea.vmem %s1, 527
  %945 = vst.msk [vmem:[%s944] ss:$16 sm:$0x3] %vm943, %v942
  %s946 = scalar_lea.vmem %s1, 527
  %947 = vst.msk [vmem:[%s946] ss:$16 sm:$0xc] %vm943, %v942

// kernel: tile.18
$region0: #{tile.18}
  #allocation0 [shape = 's32[1]{0}', space=sflag, size = 0x4, scoped, tag = 'scoped memory for tile.18']
  %s0 = inlined_call_operand.vmem [shape: f32[32], index: 0, kind: input, shape index: {}]
  %s1 = inlined_call_operand.vmem [shape: f32[4,32], index: 1, kind: output, shape index: {}]
  // Predicated region
  $region2: #{tile.18} parent=0 // pred_check
    _
  $region3: #{tile.18} parent=0 // pred_check_branch
    %3 = sbr.rel (0) target = $region5
  $region4: #{tile.18} parent=0 // pred_region
    _
  $region5: #{tile.18} parent=0 // pred_fallthru
    _
  %v4 = vld [vmem:[%s0] ss:$0 sm:$0xff]
  %5 = vst [vmem:[%s1] sm:$0xf] %v4

// kernel: tile.1
$region0: #{tile.1}
  %s0 = inlined_call_operand.vmem [shape: f32[4,32], index: 0, kind: input, shape index: {}]
  %s1 = inlined_call_operand.vmem [shape: f32[128,1], index: 1, kind: output, shape index: {}]
  $region1: #{tile.1} parent=0
    #allocation0 [shape = 'u8[4096]{0}', space=vmem, size = 0x1000, scoped, tag = 'scoped mem for input reshape']
    %s3 = sshllo.u32 0, 4
    %v4 = vld [vmem:[%s0] sm:%s3]
    %5 = vst [vmem:[#allocation0] sm:%s3] %v4
    %v6 = vld [vmem:[#allocation0] sm:$0xf]
    %vm7 = vcmask 7168
    %8 = vst.msk [vmem:[%s1] sm:$0x1] %vm7, %v6
    %s9 = scalar_lea.vmem %s1, 31
    %10 = vst.msk [vmem:[%s9] sm:$0x2] %vm7, %v6
    %s11 = scalar_lea.vmem %s1, 62
    %12 = vst.msk [vmem:[%s11] sm:$0x4] %vm7, %v6
    %s13 = scalar_lea.vmem %s1, 93
    %14 = vst.msk [vmem:[%s13] sm:$0x8] %vm7, %v6
    %v15 = vld [vmem:[#allocation0] sm:$0xf]
    %16 = vrot.lane.b32.xlu0 %v15, 127
    %v17 = vpop.permute.xlu0 %16
    %vm18 = vcmask 7168
    %s19 = scalar_lea.vmem %s1, 1
    %20 = vst.msk [vmem:[%s19] sm:$0x1] %vm18, %v17
    %s21 = scalar_lea.vmem %s1, 32
    %22 = vst.msk [vmem:[%s21] sm:$0x2] %vm18, %v17
    %s23 = scalar_lea.vmem %s1, 63
    %24 = vst.msk [vmem:[%s23] sm:$0x4] %vm18, %v17
    %s25 = scalar_lea.vmem %s1, 94
    %26 = vst.msk [vmem:[%s25] sm:$0x8] %vm18, %v17
    %v27 = vld [vmem:[#allocation0] sm:$0xf]
    %28 = vrot.lane.b32.xlu0 %v27, 126
    %v29 = vpop.permute.xlu0 %28
    %vm30 = vcmask 7168
    %s31 = scalar_lea.vmem %s1, 2
    %32 = vst.msk [vmem:[%s31] sm:$0x1] %vm30, %v29
    %s33 = scalar_lea.vmem %s1, 33
    %34 = vst.msk [vmem:[%s33] sm:$0x2] %vm30, %v29
    %s35 = scalar_lea.vmem %s1, 64
    %36 = vst.msk [vmem:[%s35] sm:$0x4] %vm30, %v29
    %s37 = scalar_lea.vmem %s1, 95
    %38 = vst.msk [vmem:[%s37] sm:$0x8] %vm30, %v29
    %v39 = vld [vmem:[#allocation0] sm:$0xf]
    %40 = vrot.lane.b32.xlu0 %v39, 125
    %v41 = vpop.permute.xlu0 %40
    %vm42 = vcmask 7168
    %s43 = scalar_lea.vmem %s1, 3
    %44 = vst.msk [vmem:[%s43] sm:$0x1] %vm42, %v41
    %s45 = scalar_lea.vmem %s1, 34
    %46 = vst.msk [vmem:[%s45] sm:$0x2] %vm42, %v41
    %s47 = scalar_lea.vmem %s1, 65
    %48 = vst.msk [vmem:[%s47] sm:$0x4] %vm42, %v41
    %s49 = scalar_lea.vmem %s1, 96
    %50 = vst.msk [vmem:[%s49] sm:$0x8] %vm42, %v41
    %v51 = vld [vmem:[#allocation0] sm:$0xf]
    %52 = vrot.lane.b32.xlu0 %v51, 124
    %v53 = vpop.permute.xlu0 %52
    %vm54 = vcmask 7168
    %s55 = scalar_lea.vmem %s1, 4
    %56 = vst.msk [vmem:[%s55] sm:$0x1] %vm54, %v53
    %s57 = scalar_lea.vmem %s1, 35
    %58 = vst.msk [vmem:[%s57] sm:$0x2] %vm54, %v53
    %s59 = scalar_lea.vmem %s1, 66
    %60 = vst.msk [vmem:[%s59] sm:$0x4] %vm54, %v53
    %s61 = scalar_lea.vmem %s1, 97
    %62 = vst.msk [vmem:[%s61] sm:$0x8] %vm54, %v53
    %v63 = vld [vmem:[#allocation0] sm:$0xf]
    %64 = vrot.lane.b32.xlu0 %v63, 123
    %v65 = vpop.permute.xlu0 %64
    %vm66 = vcmask 7168
    %s67 = scalar_lea.vmem %s1, 5
    %68 = vst.msk [vmem:[%s67] sm:$0x1] %vm66, %v65
    %s69 = scalar_lea.vmem %s1, 36
    %70 = vst.msk [vmem:[%s69] sm:$0x2] %vm66, %v65
    %s71 = scalar_lea.vmem %s1, 67
    %72 = vst.msk [vmem:[%s71] sm:$0x4] %vm66, %v65
    %s73 = scalar_lea.vmem %s1, 98
    %74 = vst.msk [vmem:[%s73] sm:$0x8] %vm66, %v65
    %v75 = vld [vmem:[#allocation0] sm:$0xf]
    %76 = vrot.lane.b32.xlu0 %v75, 122
    %v77 = vpop.permute.xlu0 %76
    %vm78 = vcmask 7168
    %s79 = scalar_lea.vmem %s1, 6
    %80 = vst.msk [vmem:[%s79] sm:$0x1] %vm78, %v77
    %s81 = scalar_lea.vmem %s1, 37
    %82 = vst.msk [vmem:[%s81] sm:$0x2] %vm78, %v77
    %s83 = scalar_lea.vmem %s1, 68
    %84 = vst.msk [vmem:[%s83] sm:$0x4] %vm78, %v77
    %s85 = scalar_lea.vmem %s1, 99
    %86 = vst.msk [vmem:[%s85] sm:$0x8] %vm78, %v77
    %v87 = vld [vmem:[#allocation0] sm:$0xf]
    %88 = vrot.lane.b32.xlu0 %v87, 121
    %v89 = vpop.permute.xlu0 %88
    %vm90 = vcmask 7168
    %s91 = scalar_lea.vmem %s1, 7
    %92 = vst.msk [vmem:[%s91] sm:$0x1] %vm90, %v89
    %s93 = scalar_lea.vmem %s1, 38
    %94 = vst.msk [vmem:[%s93] sm:$0x2] %vm90, %v89
    %s95 = scalar_lea.vmem %s1, 69
    %96 = vst.msk [vmem:[%s95] sm:$0x4] %vm90, %v89
    %s97 = scalar_lea.vmem %s1, 100
    %98 = vst.msk [vmem:[%s97] sm:$0x8] %vm90, %v89
    %v99 = vld [vmem:[#allocation0] sm:$0xf]
    %100 = vrot.lane.b32.xlu0 %v99, 120
    %v101 = vpop.permute.xlu0 %100
    %vm102 = vcmask 7168
    %s103 = scalar_lea.vmem %s1, 8
    %104 = vst.msk [vmem:[%s103] sm:$0x1] %vm102, %v101
    %s105 = scalar_lea.vmem %s1, 39
    %106 = vst.msk [vmem:[%s105] sm:$0x2] %vm102, %v101
    %s107 = scalar_lea.vmem %s1, 70
    %108 = vst.msk [vmem:[%s107] sm:$0x4] %vm102, %v101
    %s109 = scalar_lea.vmem %s1, 101
    %110 = vst.msk [vmem:[%s109] sm:$0x8] %vm102, %v101
    %v111 = vld [vmem:[#allocation0] sm:$0xf]
    %112 = vrot.lane.b32.xlu0 %v111, 119
    %v113 = vpop.permute.xlu0 %112
    %vm114 = vcmask 7168
    %s115 = scalar_lea.vmem %s1, 9
    %116 = vst.msk [vmem:[%s115] sm:$0x1] %vm114, %v113
    %s117 = scalar_lea.vmem %s1, 40
    %118 = vst.msk [vmem:[%s117] sm:$0x2] %vm114, %v113
    %s119 = scalar_lea.vmem %s1, 71
    %120 = vst.msk [vmem:[%s119] sm:$0x4] %vm114, %v113
    %s121 = scalar_lea.vmem %s1, 102
    %122 = vst.msk [vmem:[%s121] sm:$0x8] %vm114, %v113
    %v123 = vld [vmem:[#allocation0] sm:$0xf]
    %124 = vrot.lane.b32.xlu0 %v123, 118
    %v125 = vpop.permute.xlu0 %124
    %vm126 = vcmask 7168
    %s127 = scalar_lea.vmem %s1, 10
    %128 = vst.msk [vmem:[%s127] sm:$0x1] %vm126, %v125
    %s129 = scalar_lea.vmem %s1, 41
    %130 = vst.msk [vmem:[%s129] sm:$0x2] %vm126, %v125
    %s131 = scalar_lea.vmem %s1, 72
    %132 = vst.msk [vmem:[%s131] sm:$0x4] %vm126, %v125
    %s133 = scalar_lea.vmem %s1, 103
    %134 = vst.msk [vmem:[%s133] sm:$0x8] %vm126, %v125
    %v135 = vld [vmem:[#allocation0] sm:$0xf]
    %136 = vrot.lane.b32.xlu0 %v135, 117
    %v137 = vpop.permute.xlu0 %136
    %vm138 = vcmask 7168
    %s139 = scalar_lea.vmem %s1, 11
    %140 = vst.msk [vmem:[%s139] sm:$0x1] %vm138, %v137
    %s141 = scalar_lea.vmem %s1, 42
    %142 = vst.msk [vmem:[%s141] sm:$0x2] %vm138, %v137
    %s143 = scalar_lea.vmem %s1, 73
    %144 = vst.msk [vmem:[%s143] sm:$0x4] %vm138, %v137
    %s145 = scalar_lea.vmem %s1, 104
    %146 = vst.msk [vmem:[%s145] sm:$0x8] %vm138, %v137
    %v147 = vld [vmem:[#allocation0] sm:$0xf]
    %148 = vrot.lane.b32.xlu0 %v147, 116
    %v149 = vpop.permute.xlu0 %148
    %vm150 = vcmask 7168
    %s151 = scalar_lea.vmem %s1, 12
    %152 = vst.msk [vmem:[%s151] sm:$0x1] %vm150, %v149
    %s153 = scalar_lea.vmem %s1, 43
    %154 = vst.msk [vmem:[%s153] sm:$0x2] %vm150, %v149
    %s155 = scalar_lea.vmem %s1, 74
    %156 = vst.msk [vmem:[%s155] sm:$0x4] %vm150, %v149
    %s157 = scalar_lea.vmem %s1, 105
    %158 = vst.msk [vmem:[%s157] sm:$0x8] %vm150, %v149
    %v159 = vld [vmem:[#allocation0] sm:$0xf]
    %160 = vrot.lane.b32.xlu0 %v159, 115
    %v161 = vpop.permute.xlu0 %160
    %vm162 = vcmask 7168
    %s163 = scalar_lea.vmem %s1, 13
    %164 = vst.msk [vmem:[%s163] sm:$0x1] %vm162, %v161
    %s165 = scalar_lea.vmem %s1, 44
    %166 = vst.msk [vmem:[%s165] sm:$0x2] %vm162, %v161
    %s167 = scalar_lea.vmem %s1, 75
    %168 = vst.msk [vmem:[%s167] sm:$0x4] %vm162, %v161
    %s169 = scalar_lea.vmem %s1, 106
    %170 = vst.msk [vmem:[%s169] sm:$0x8] %vm162, %v161
    %v171 = vld [vmem:[#allocation0] sm:$0xf]
    %172 = vrot.lane.b32.xlu0 %v171, 114
    %v173 = vpop.permute.xlu0 %172
    %vm174 = vcmask 7168
    %s175 = scalar_lea.vmem %s1, 14
    %176 = vst.msk [vmem:[%s175] sm:$0x1] %vm174, %v173
    %s177 = scalar_lea.vmem %s1, 45
    %178 = vst.msk [vmem:[%s177] sm:$0x2] %vm174, %v173
    %s179 = scalar_lea.vmem %s1, 76
    %180 = vst.msk [vmem:[%s179] sm:$0x4] %vm174, %v173
    %s181 = scalar_lea.vmem %s1, 107
    %182 = vst.msk [vmem:[%s181] sm:$0x8] %vm174, %v173
    %v183 = vld [vmem:[#allocation0] sm:$0xf]
    %184 = vrot.lane.b32.xlu0 %v183, 113
    %v185 = vpop.permute.xlu0 %184
    %vm186 = vcmask 7168
    %s187 = scalar_lea.vmem %s1, 15
    %188 = vst.msk [vmem:[%s187] sm:$0x1] %vm186, %v185
    %s189 = scalar_lea.vmem %s1, 46
    %190 = vst.msk [vmem:[%s189] sm:$0x2] %vm186, %v185
    %s191 = scalar_lea.vmem %s1, 77
    %192 = vst.msk [vmem:[%s191] sm:$0x4] %vm186, %v185
    %s193 = scalar_lea.vmem %s1, 108
    %194 = vst.msk [vmem:[%s193] sm:$0x8] %vm186, %v185
    %v195 = vld [vmem:[#allocation0] sm:$0xf]
    %196 = vrot.lane.b32.xlu0 %v195, 112
    %v197 = vpop.permute.xlu0 %196
    %vm198 = vcmask 7168
    %s199 = scalar_lea.vmem %s1, 16
    %200 = vst.msk [vmem:[%s199] sm:$0x1] %vm198, %v197
    %s201 = scalar_lea.vmem %s1, 47
    %202 = vst.msk [vmem:[%s201] sm:$0x2] %vm198, %v197
    %s203 = scalar_lea.vmem %s1, 78
    %204 = vst.msk [vmem:[%s203] sm:$0x4] %vm198, %v197
    %s205 = scalar_lea.vmem %s1, 109
    %206 = vst.msk [vmem:[%s205] sm:$0x8] %vm198, %v197
    %v207 = vld [vmem:[#allocation0] sm:$0xf]
    %208 = vrot.lane.b32.xlu0 %v207, 111
    %v209 = vpop.permute.xlu0 %208
    %vm210 = vcmask 7168
    %s211 = scalar_lea.vmem %s1, 17
    %212 = vst.msk [vmem:[%s211] sm:$0x1] %vm210, %v209
    %s213 = scalar_lea.vmem %s1, 48
    %214 = vst.msk [vmem:[%s213] sm:$0x2] %vm210, %v209
    %s215 = scalar_lea.vmem %s1, 79
    %216 = vst.msk [vmem:[%s215] sm:$0x4] %vm210, %v209
    %s217 = scalar_lea.vmem %s1, 110
    %218 = vst.msk [vmem:[%s217] sm:$0x8] %vm210, %v209
    %v219 = vld [vmem:[#allocation0] sm:$0xf]
    %220 = vrot.lane.b32.xlu0 %v219, 110
    %v221 = vpop.permute.xlu0 %220
    %vm222 = vcmask 7168
    %s223 = scalar_lea.vmem %s1, 18
    %224 = vst.msk [vmem:[%s223] sm:$0x1] %vm222, %v221
    %s225 = scalar_lea.vmem %s1, 49
    %226 = vst.msk [vmem:[%s225] sm:$0x2] %vm222, %v221
    %s227 = scalar_lea.vmem %s1, 80
    %228 = vst.msk [vmem:[%s227] sm:$0x4] %vm222, %v221
    %s229 = scalar_lea.vmem %s1, 111
    %230 = vst.msk [vmem:[%s229] sm:$0x8] %vm222, %v221
    %v231 = vld [vmem:[#allocation0] sm:$0xf]
    %232 = vrot.lane.b32.xlu0 %v231, 109
    %v233 = vpop.permute.xlu0 %232
    %vm234 = vcmask 7168
    %s235 = scalar_lea.vmem %s1, 19
    %236 = vst.msk [vmem:[%s235] sm:$0x1] %vm234, %v233
    %s237 = scalar_lea.vmem %s1, 50
    %238 = vst.msk [vmem:[%s237] sm:$0x2] %vm234, %v233
    %s239 = scalar_lea.vmem %s1, 81
    %240 = vst.msk [vmem:[%s239] sm:$0x4] %vm234, %v233
    %s241 = scalar_lea.vmem %s1, 112
    %242 = vst.msk [vmem:[%s241] sm:$0x8] %vm234, %v233
    %v243 = vld [vmem:[#allocation0] sm:$0xf]
    %244 = vrot.lane.b32.xlu0 %v243, 108
    %v245 = vpop.permute.xlu0 %244
    %vm246 = vcmask 7168
    %s247 = scalar_lea.vmem %s1, 20
    %248 = vst.msk [vmem:[%s247] sm:$0x1] %vm246, %v245
    %s249 = scalar_lea.vmem %s1, 51
    %250 = vst.msk [vmem:[%s249] sm:$0x2] %vm246, %v245
    %s251 = scalar_lea.vmem %s1, 82
    %252 = vst.msk [vmem:[%s251] sm:$0x4] %vm246, %v245
    %s253 = scalar_lea.vmem %s1, 113
    %254 = vst.msk [vmem:[%s253] sm:$0x8] %vm246, %v245
    %v255 = vld [vmem:[#allocation0] sm:$0xf]
    %256 = vrot.lane.b32.xlu0 %v255, 107
    %v257 = vpop.permute.xlu0 %256
    %vm258 = vcmask 7168
    %s259 = scalar_lea.vmem %s1, 21
    %260 = vst.msk [vmem:[%s259] sm:$0x1] %vm258, %v257
    %s261 = scalar_lea.vmem %s1, 52
    %262 = vst.msk [vmem:[%s261] sm:$0x2] %vm258, %v257
    %s263 = scalar_lea.vmem %s1, 83
    %264 = vst.msk [vmem:[%s263] sm:$0x4] %vm258, %v257
    %s265 = scalar_lea.vmem %s1, 114
    %266 = vst.msk [vmem:[%s265] sm:$0x8] %vm258, %v257
    %v267 = vld [vmem:[#allocation0] sm:$0xf]
    %268 = vrot.lane.b32.xlu0 %v267, 106
    %v269 = vpop.permute.xlu0 %268
    %vm270 = vcmask 7168
    %s271 = scalar_lea.vmem %s1, 22
    %272 = vst.msk [vmem:[%s271] sm:$0x1] %vm270, %v269
    %s273 = scalar_lea.vmem %s1, 53
    %274 = vst.msk [vmem:[%s273] sm:$0x2] %vm270, %v269
    %s275 = scalar_lea.vmem %s1, 84
    %276 = vst.msk [vmem:[%s275] sm:$0x4] %vm270, %v269
    %s277 = scalar_lea.vmem %s1, 115
    %278 = vst.msk [vmem:[%s277] sm:$0x8] %vm270, %v269
    %v279 = vld [vmem:[#allocation0] sm:$0xf]
    %280 = vrot.lane.b32.xlu0 %v279, 105
    %v281 = vpop.permute.xlu0 %280
    %vm282 = vcmask 7168
    %s283 = scalar_lea.vmem %s1, 23
    %284 = vst.msk [vmem:[%s283] sm:$0x1] %vm282, %v281
    %s285 = scalar_lea.vmem %s1, 54
    %286 = vst.msk [vmem:[%s285] sm:$0x2] %vm282, %v281
    %s287 = scalar_lea.vmem %s1, 85
    %288 = vst.msk [vmem:[%s287] sm:$0x4] %vm282, %v281
    %s289 = scalar_lea.vmem %s1, 116
    %290 = vst.msk [vmem:[%s289] sm:$0x8] %vm282, %v281
    %v291 = vld [vmem:[#allocation0] sm:$0xf]
    %292 = vrot.lane.b32.xlu0 %v291, 104
    %v293 = vpop.permute.xlu0 %292
    %vm294 = vcmask 7168
    %s295 = scalar_lea.vmem %s1, 24
    %296 = vst.msk [vmem:[%s295] sm:$0x1] %vm294, %v293
    %s297 = scalar_lea.vmem %s1, 55
    %298 = vst.msk [vmem:[%s297] sm:$0x2] %vm294, %v293
    %s299 = scalar_lea.vmem %s1, 86
    %300 = vst.msk [vmem:[%s299] sm:$0x4] %vm294, %v293
    %s301 = scalar_lea.vmem %s1, 117
    %302 = vst.msk [vmem:[%s301] sm:$0x8] %vm294, %v293
    %v303 = vld [vmem:[#allocation0] sm:$0xf]
    %304 = vrot.lane.b32.xlu0 %v303, 103
    %v305 = vpop.permute.xlu0 %304
    %vm306 = vcmask 7168
    %s307 = scalar_lea.vmem %s1, 25
    %308 = vst.msk [vmem:[%s307] sm:$0x1] %vm306, %v305
    %s309 = scalar_lea.vmem %s1, 56
    %310 = vst.msk [vmem:[%s309] sm:$0x2] %vm306, %v305
    %s311 = scalar_lea.vmem %s1, 87
    %312 = vst.msk [vmem:[%s311] sm:$0x4] %vm306, %v305
    %s313 = scalar_lea.vmem %s1, 118
    %314 = vst.msk [vmem:[%s313] sm:$0x8] %vm306, %v305
    %v315 = vld [vmem:[#allocation0] sm:$0xf]
    %316 = vrot.lane.b32.xlu0 %v315, 102
    %v317 = vpop.permute.xlu0 %316
    %vm318 = vcmask 7168
    %s319 = scalar_lea.vmem %s1, 26
    %320 = vst.msk [vmem:[%s319] sm:$0x1] %vm318, %v317
    %s321 = scalar_lea.vmem %s1, 57
    %322 = vst.msk [vmem:[%s321] sm:$0x2] %vm318, %v317
    %s323 = scalar_lea.vmem %s1, 88
    %324 = vst.msk [vmem:[%s323] sm:$0x4] %vm318, %v317
    %s325 = scalar_lea.vmem %s1, 119
    %326 = vst.msk [vmem:[%s325] sm:$0x8] %vm318, %v317
    %v327 = vld [vmem:[#allocation0] sm:$0xf]
    %328 = vrot.lane.b32.xlu0 %v327, 101
    %v329 = vpop.permute.xlu0 %328
    %vm330 = vcmask 7168
    %s331 = scalar_lea.vmem %s1, 27
    %332 = vst.msk [vmem:[%s331] sm:$0x1] %vm330, %v329
    %s333 = scalar_lea.vmem %s1, 58
    %334 = vst.msk [vmem:[%s333] sm:$0x2] %vm330, %v329
    %s335 = scalar_lea.vmem %s1, 89
    %336 = vst.msk [vmem:[%s335] sm:$0x4] %vm330, %v329
    %s337 = scalar_lea.vmem %s1, 120
    %338 = vst.msk [vmem:[%s337] sm:$0x8] %vm330, %v329
    %v339 = vld [vmem:[#allocation0] sm:$0xf]
    %340 = vrot.lane.b32.xlu0 %v339, 100
    %v341 = vpop.permute.xlu0 %340
    %vm342 = vcmask 7168
    %s343 = scalar_lea.vmem %s1, 28
    %344 = vst.msk [vmem:[%s343] sm:$0x1] %vm342, %v341
    %s345 = scalar_lea.vmem %s1, 59
    %346 = vst.msk [vmem:[%s345] sm:$0x2] %vm342, %v341
    %s347 = scalar_lea.vmem %s1, 90
    %348 = vst.msk [vmem:[%s347] sm:$0x4] %vm342, %v341
    %s349 = scalar_lea.vmem %s1, 121
    %350 = vst.msk [vmem:[%s349] sm:$0x8] %vm342, %v341
    %v351 = vld [vmem:[#allocation0] sm:$0xf]
    %352 = vrot.lane.b32.xlu0 %v351, 99
    %v353 = vpop.permute.xlu0 %352
    %vm354 = vcmask 7168
    %s355 = scalar_lea.vmem %s1, 29
    %356 = vst.msk [vmem:[%s355] sm:$0x1] %vm354, %v353
    %s357 = scalar_lea.vmem %s1, 60
    %358 = vst.msk [vmem:[%s357] sm:$0x2] %vm354, %v353
    %s359 = scalar_lea.vmem %s1, 91
    %360 = vst.msk [vmem:[%s359] sm:$0x4] %vm354, %v353
    %s361 = scalar_lea.vmem %s1, 122
    %362 = vst.msk [vmem:[%s361] sm:$0x8] %vm354, %v353
    %v363 = vld [vmem:[#allocation0] sm:$0xf]
    %364 = vrot.lane.b32.xlu0 %v363, 98
    %v365 = vpop.permute.xlu0 %364
    %vm366 = vcmask 7168
    %s367 = scalar_lea.vmem %s1, 30
    %368 = vst.msk [vmem:[%s367] sm:$0x1] %vm366, %v365
    %s369 = scalar_lea.vmem %s1, 61
    %370 = vst.msk [vmem:[%s369] sm:$0x2] %vm366, %v365
    %s371 = scalar_lea.vmem %s1, 92
    %372 = vst.msk [vmem:[%s371] sm:$0x4] %vm366, %v365
    %s373 = scalar_lea.vmem %s1, 123
    %374 = vst.msk [vmem:[%s373] sm:$0x8] %vm366, %v365
    %v375 = vld [vmem:[#allocation0] sm:$0xf]
    %376 = vrot.lane.b32.xlu0 %v375, 97
    %v377 = vpop.permute.xlu0 %376
    %vm378 = vcmask 7168
    %s379 = scalar_lea.vmem %s1, 31
    %380 = vst.msk [vmem:[%s379] sm:$0x1] %vm378, %v377
    %s381 = scalar_lea.vmem %s1, 62
    %382 = vst.msk [vmem:[%s381] sm:$0x2] %vm378, %v377
    %s383 = scalar_lea.vmem %s1, 93
    %384 = vst.msk [vmem:[%s383] sm:$0x4] %vm378, %v377
    %s385 = scalar_lea.vmem %s1, 124
    %386 = vst.msk [vmem:[%s385] sm:$0x8] %vm378, %v377

// kernel: critic_model_forward.1
$region0: #{critic_model_forward.1}
  #allocation0 [shape = 'u32[]', space=smem, size = 0x4, offset = 0x4, fixed_abs, tag = 'smem constant byte address 0x4 - core index']
  #allocation1 [shape = 'u32[144,128]{1,0:T(1,128)}', space=vmem, size = 0x12000, scoped, tag = 'internal scratch']
  #allocation2 [shape = 'f32[1,1]{1,0:T(1,128)S(1)}', space=vmem, size = 0x200, scoped, tag = 'scoped memory for critic_model_forward.1']
  %s0 = inlined_call_operand.vmem [shape: bf16[160,2], index: 0, kind: input, shape index: {}]
  %s1 = inlined_call_operand.vmem [shape: bf16[576,160], index: 1, kind: input, shape index: {}]
  %s2 = inlined_call_operand.vmem [shape: f32[576,1], index: 2, kind: input, shape index: {}]
  %s3 = inlined_call_operand.vmem [shape: bf16[128,144], index: 3, kind: input, shape index: {}]
  %s4 = inlined_call_operand.vmem [shape: f32[128,1], index: 4, kind: input, shape index: {}]
  %s5 = inlined_call_operand.vmem [shape: bf16[64,128], index: 5, kind: input, shape index: {}]
  %s6 = inlined_call_operand.vmem [shape: f32[64,1], index: 6, kind: input, shape index: {}]
  %s7 = inlined_call_operand.vmem [shape: bf16[64,64], index: 7, kind: input, shape index: {}]
  %s8 = inlined_call_operand.vmem [shape: f32[64,1], index: 8, kind: input, shape index: {}]
  %s9 = inlined_call_operand.vmem [shape: f32[64,1], index: 9, kind: input, shape index: {}]
  %s10 = inlined_call_operand.<no memory space> [shape: f32[1,1], index: 10, kind: input, shape index: {}]
  %s11 = inlined_call_operand.hbm [shape: f32[1,2], index: 11, kind: output, shape index: {}]
  %s12 = sld [smem:[#allocation0]]
  $region54: #{critic_model_forward.1} parent=0
    _
  %s14 = ssub.s32 1, %s12
  %s15 = scalar_select 0, %s14, %s12
  %v16 = vstv %s10
  %17 = vst [vmem:[#allocation2] sm:$0x1] %v16
  $region1: #{critic_model_forward.1} parent=0
    #allocation3 [shape = 'u8[512]{0}', space=vmem, size = 0x400, scoped, tag = 'output window, operand 0, single buffered']
    #allocation4 [shape = 's32[1]{0}', space=sflag, size = 0x4, scoped, tag = 'scoped memory for critic_model_forward.1']
    %18 = vsyncpa [#allocation4], 0
    // Predicated region
    $region2: #{critic_model_forward.1} parent=1 // pred_check
      _
    $region3: #{critic_model_forward.1} parent=1 // pred_check_branch
      %20 = sbr.rel (0) target = $region5
    $region4: #{critic_model_forward.1} parent=1 // pred_region
      _
    $region5: #{critic_model_forward.1} parent=1 // pred_fallthru
      _
    // Predicated region
    $region6: #{critic_model_forward.1} parent=1 // pred_check
      _
    $region7: #{critic_model_forward.1} parent=1 // pred_check_branch
      %22 = sbr.rel (0) target = $region9
    $region8: #{critic_model_forward.1} parent=1 // pred_region
      _
    $region9: #{critic_model_forward.1} parent=1 // pred_fallthru
      _
    // Predicated region
    $region10: #{critic_model_forward.1} parent=1 // pred_check
      _
    $region11: #{critic_model_forward.1} parent=1 // pred_check_branch
      %24 = sbr.rel (0) target = $region13
    $region12: #{critic_model_forward.1} parent=1 // pred_region
      _
    $region13: #{critic_model_forward.1} parent=1 // pred_fallthru
      _
    // Predicated region
    $region14: #{critic_model_forward.1} parent=1 // pred_check
      _
    $region15: #{critic_model_forward.1} parent=1 // pred_check_branch
      %26 = sbr.rel (0) target = $region17
    $region16: #{critic_model_forward.1} parent=1 // pred_region
      _
    $region17: #{critic_model_forward.1} parent=1 // pred_fallthru
      _
    // Predicated region
    $region18: #{critic_model_forward.1} parent=1 // pred_check
      _
    $region19: #{critic_model_forward.1} parent=1 // pred_check_branch
      %28 = sbr.rel (0) target = $region21
    $region20: #{critic_model_forward.1} parent=1 // pred_region
      _
    $region21: #{critic_model_forward.1} parent=1 // pred_fallthru
      _
    // Predicated region
    $region22: #{critic_model_forward.1} parent=1 // pred_check
      _
    $region23: #{critic_model_forward.1} parent=1 // pred_check_branch
      %30 = sbr.rel (0) target = $region25
    $region24: #{critic_model_forward.1} parent=1 // pred_region
      _
    $region25: #{critic_model_forward.1} parent=1 // pred_fallthru
      _
    // Predicated region
    $region26: #{critic_model_forward.1} parent=1 // pred_check
      _
    $region27: #{critic_model_forward.1} parent=1 // pred_check_branch
      %32 = sbr.rel (0) target = $region29
    $region28: #{critic_model_forward.1} parent=1 // pred_region
      _
    $region29: #{critic_model_forward.1} parent=1 // pred_fallthru
      _
    // Predicated region
    $region30: #{critic_model_forward.1} parent=1 // pred_check
      _
    $region31: #{critic_model_forward.1} parent=1 // pred_check_branch
      %34 = sbr.rel (0) target = $region33
    $region32: #{critic_model_forward.1} parent=1 // pred_region
      _
    $region33: #{critic_model_forward.1} parent=1 // pred_fallthru
      _
    // Predicated region
    $region34: #{critic_model_forward.1} parent=1 // pred_check
      _
    $region35: #{critic_model_forward.1} parent=1 // pred_check_branch
      %36 = sbr.rel (0) target = $region37
    $region36: #{critic_model_forward.1} parent=1 // pred_region
      _
    $region37: #{critic_model_forward.1} parent=1 // pred_fallthru
      _
    // Predicated region
    $region38: #{critic_model_forward.1} parent=1 // pred_check
      _
    $region39: #{critic_model_forward.1} parent=1 // pred_check_branch
      %38 = sbr.rel (0) target = $region41
    $region40: #{critic_model_forward.1} parent=1 // pred_region
      _
    $region41: #{critic_model_forward.1} parent=1 // pred_fallthru
      _
    // Predicated region
    $region42: #{critic_model_forward.1} parent=1 // pred_check
      _
    $region43: #{critic_model_forward.1} parent=1 // pred_check_branch
      %40 = sbr.rel (0) target = $region45
    $region44: #{critic_model_forward.1} parent=1 // pred_region
      _
    $region45: #{critic_model_forward.1} parent=1 // pred_fallthru
      _
    %v42 = vld [vmem:[%s1] sm:$0xff]
    %v43 = vld [vmem:[%s1 + $0x8] sm:$0xff]
    %v44 = vld [vmem:[%s1 + $0x10] sm:$0xff]
    %v45 = vld [vmem:[%s1 + $0x18] sm:$0xff]
    %v46 = vld [vmem:[%s1 + $0x20] sm:$0xff]
    %v47 = vld [vmem:[%s1 + $0x28] sm:$0xff]
    %v48 = vld [vmem:[%s1 + $0x30] sm:$0xff]
    %v49 = vld [vmem:[%s1 + $0x38] sm:$0xff]
    %v50 = vld [vmem:[%s1 + $0x40] sm:$0xff]
    %v51 = vld [vmem:[%s1 + $0x48] sm:$0xff]
    %v52 = vld [vmem:[%s1 + $0x50] sm:$0xff]
    %v53 = vld [vmem:[%s1 + $0x58] sm:$0xff]
    %v54 = vld [vmem:[%s1 + $0x60] sm:$0xff]
    %v55 = vld [vmem:[%s1 + $0x68] sm:$0xff]
    %v56 = vld [vmem:[%s1 + $0x70] sm:$0xff]
    %v57 = vld [vmem:[%s1 + $0x78] sm:$0xff]
    %v58 = vld [vmem:[%s1 + $0x80] sm:$0xff]
    %v59 = vld [vmem:[%s1 + $0x88] sm:$0xff]
    %v60 = vld [vmem:[%s1 + $0x90] sm:$0xff]
    %v61 = vld [vmem:[%s1 + $0x98] sm:$0xff]
    %v62 = vld [vmem:[%s1 + $0xa0] sm:$0xff]
    %v63 = vld [vmem:[%s1 + $0xa8] sm:$0xff]
    %v64 = vld [vmem:[%s1 + $0xb0] sm:$0xff]
    %v65 = vld [vmem:[%s1 + $0xb8] sm:$0xff]
    %v66 = vld [vmem:[%s1 + $0xc0] sm:$0xff]
    %v67 = vld [vmem:[%s1 + $0xc8] sm:$0xff]
    %v68 = vld [vmem:[%s1 + $0xd0] sm:$0xff]
    %v69 = vld [vmem:[%s1 + $0xd8] sm:$0xff]
    %v70 = vld [vmem:[%s1 + $0xe0] sm:$0xff]
    %v71 = vld [vmem:[%s1 + $0xe8] sm:$0xff]
    %v72 = vld [vmem:[%s1 + $0xf0] sm:$0xff]
    %v73 = vld [vmem:[%s1 + $0xf8] sm:$0xff]
    %v74 = vld [vmem:[%s1 + $0x100] sm:$0xff]
    %v75 = vld [vmem:[%s1 + $0x108] sm:$0xff]
    %v76 = vld [vmem:[%s1 + $0x110] sm:$0xff]
    %v77 = vld [vmem:[%s1 + $0x118] sm:$0xff]
    %v78 = vld [vmem:[%s1 + $0x120] sm:$0xff]
    %v79 = vld [vmem:[%s1 + $0x128] sm:$0xff]
    %v80 = vld [vmem:[%s1 + $0x130] sm:$0xff]
    %v81 = vld [vmem:[%s1 + $0x138] sm:$0xff]
    %v82 = vld [vmem:[%s1 + $0x140] sm:$0xff]
    %v83 = vld [vmem:[%s1 + $0x148] sm:$0xff]
    %v84 = vld [vmem:[%s1 + $0x150] sm:$0xff]
    %v85 = vld [vmem:[%s1 + $0x158] sm:$0xff]
    %v86 = vld [vmem:[%s1 + $0x160] sm:$0xff]
    %v87 = vld [vmem:[%s1 + $0x168] sm:$0xff]
    %v88 = vld [vmem:[%s1 + $0x170] sm:$0xff]
    %v89 = vld [vmem:[%s1 + $0x178] sm:$0xff]
    %v90 = vld [vmem:[%s1 + $0x180] sm:$0xff]
    %v91 = vld [vmem:[%s1 + $0x188] sm:$0xff]
    %v92 = vld [vmem:[%s1 + $0x190] sm:$0xff]
    %v93 = vld [vmem:[%s1 + $0x198] sm:$0xff]
    %v94 = vld [vmem:[%s1 + $0x1a0] sm:$0xff]
    %v95 = vld [vmem:[%s1 + $0x1a8] sm:$0xff]
    %v96 = vld [vmem:[%s1 + $0x1b0] sm:$0xff]
    %v97 = vld [vmem:[%s1 + $0x1b8] sm:$0xff]
    %v98 = vld [vmem:[%s1 + $0x1c0] sm:$0xff]
    %v99 = vld [vmem:[%s1 + $0x1c8] sm:$0xff]
    %v100 = vld [vmem:[%s1 + $0x1d0] sm:$0xff]
    %v101 = vld [vmem:[%s1 + $0x1d8] sm:$0xff]
    %v102 = vld [vmem:[%s1 + $0x1e0] sm:$0xff]
    %v103 = vld [vmem:[%s1 + $0x1e8] sm:$0xff]
    %v104 = vld [vmem:[%s1 + $0x1f0] sm:$0xff]
    %v105 = vld [vmem:[%s1 + $0x1f8] sm:$0xff]
    %v106 = vld [vmem:[%s1 + $0x200] sm:$0xff]
    %v107 = vld [vmem:[%s1 + $0x208] sm:$0xff]
    %v108 = vld [vmem:[%s1 + $0x210] sm:$0xff]
    %v109 = vld [vmem:[%s1 + $0x218] sm:$0xff]
    %v110 = vld [vmem:[%s1 + $0x220] sm:$0xff]
    %v111 = vld [vmem:[%s1 + $0x228] sm:$0xff]
    %v112 = vld [vmem:[%s1 + $0x230] sm:$0xff]
    %v113 = vld [vmem:[%s1 + $0x238] sm:$0xff]
    %v114 = vld [vmem:[%s0] sm:$0xf]
    %v115 = vld [vmem:[%s0 + $0x4] sm:$0xf]
    %v116 = vld [vmem:[%s0 + $0x8] sm:$0xf]
    %v117 = vld [vmem:[%s0 + $0xc] sm:$0xf]
    %v118 = vld [vmem:[%s0 + $0x10] sm:$0xf]
    %v119 = vld [vmem:[%s0 + $0x14] sm:$0xf]
    %v120 = vld [vmem:[%s0 + $0x18] sm:$0xf]
    %v121 = vld [vmem:[%s0 + $0x1c] sm:$0xf]
    %v122 = vld [vmem:[%s0 + $0x20] sm:$0xf]
    %v123 = vld [vmem:[%s0 + $0x24] sm:$0xf]
    %v124 = vld [vmem:[%s0 + $0x28] sm:$0xf]
    %v125 = vld [vmem:[%s0 + $0x2c] sm:$0xf]
    %v126 = vld [vmem:[%s0 + $0x30] sm:$0xf]
    %v127 = vld [vmem:[%s0 + $0x34] sm:$0xf]
    %v128 = vld [vmem:[%s0 + $0x38] sm:$0xf]
    %v129 = vld [vmem:[%s0 + $0x3c] sm:$0xf]
    %v130 = vld [vmem:[%s0 + $0x40] sm:$0xf]
    %v131 = vld [vmem:[%s0 + $0x44] sm:$0xf]
    %v132 = vld [vmem:[%s0 + $0x48] sm:$0xf]
    %v133 = vld [vmem:[%s0 + $0x4c] sm:$0xf]
    %v134 = vld [vmem:[%s2] sm:$0xff]
    %v135 = vld [vmem:[%s2 + $0x8] sm:$0xff]
    %v136 = vld [vmem:[%s2 + $0x10] sm:$0xff]
    %v137 = vld [vmem:[%s2 + $0x18] sm:$0xff]
    %v138 = vld [vmem:[%s2 + $0x20] sm:$0xff]
    %v139 = vld [vmem:[%s2 + $0x28] sm:$0xff]
    %v140 = vld [vmem:[%s2 + $0x30] sm:$0xff]
    %v141 = vld [vmem:[%s2 + $0x38] sm:$0xff]
    %v142 = vld [vmem:[%s2 + $0x40] sm:$0xff]
    %v143 = vld [vmem:[%s2 + $0x48] sm:$0xff]
    %v144 = vld [vmem:[%s2 + $0x50] sm:$0xff]
    %v145 = vld [vmem:[%s2 + $0x58] sm:$0xff]
    %v146 = vld [vmem:[%s2 + $0x60] sm:$0xff]
    %v147 = vld [vmem:[%s2 + $0x68] sm:$0xff]
    %v148 = vld [vmem:[%s2 + $0x70] sm:$0xff]
    %v149 = vld [vmem:[%s2 + $0x78] sm:$0xff]
    %v150 = vld [vmem:[%s2 + $0x80] sm:$0xff]
    %v151 = vld [vmem:[%s2 + $0x88] sm:$0xff]
    %v152 = vld [vmem:[%s2 + $0x90] sm:$0xff]
    %v153 = vld [vmem:[%s2 + $0x98] sm:$0xff]
    %v154 = vld [vmem:[%s2 + $0xa0] sm:$0xff]
    %v155 = vld [vmem:[%s2 + $0xa8] sm:$0xff]
    %v156 = vld [vmem:[%s2 + $0xb0] sm:$0xff]
    %v157 = vld [vmem:[%s2 + $0xb8] sm:$0xff]
    %v158 = vld [vmem:[%s2 + $0xc0] sm:$0xff]
    %v159 = vld [vmem:[%s2 + $0xc8] sm:$0xff]
    %v160 = vld [vmem:[%s2 + $0xd0] sm:$0xff]
    %v161 = vld [vmem:[%s2 + $0xd8] sm:$0xff]
    %v162 = vld [vmem:[%s2 + $0xe0] sm:$0xff]
    %v163 = vld [vmem:[%s2 + $0xe8] sm:$0xff]
    %v164 = vld [vmem:[%s2 + $0xf0] sm:$0xff]
    %v165 = vld [vmem:[%s2 + $0xf8] sm:$0xff]
    %v166 = vld [vmem:[%s2 + $0x100] sm:$0xff]
    %v167 = vld [vmem:[%s2 + $0x108] sm:$0xff]
    %v168 = vld [vmem:[%s2 + $0x110] sm:$0xff]
    %v169 = vld [vmem:[%s2 + $0x118] sm:$0xff]
    %v170 = vld [vmem:[%s2 + $0x120] sm:$0xff]
    %v171 = vld [vmem:[%s2 + $0x128] sm:$0xff]
    %v172 = vld [vmem:[%s2 + $0x130] sm:$0xff]
    %v173 = vld [vmem:[%s2 + $0x138] sm:$0xff]
    %v174 = vld [vmem:[%s2 + $0x140] sm:$0xff]
    %v175 = vld [vmem:[%s2 + $0x148] sm:$0xff]
    %v176 = vld [vmem:[%s2 + $0x150] sm:$0xff]
    %v177 = vld [vmem:[%s2 + $0x158] sm:$0xff]
    %v178 = vld [vmem:[%s2 + $0x160] sm:$0xff]
    %v179 = vld [vmem:[%s2 + $0x168] sm:$0xff]
    %v180 = vld [vmem:[%s2 + $0x170] sm:$0xff]
    %v181 = vld [vmem:[%s2 + $0x178] sm:$0xff]
    %v182 = vld [vmem:[%s2 + $0x180] sm:$0xff]
    %v183 = vld [vmem:[%s2 + $0x188] sm:$0xff]
    %v184 = vld [vmem:[%s2 + $0x190] sm:$0xff]
    %v185 = vld [vmem:[%s2 + $0x198] sm:$0xff]
    %v186 = vld [vmem:[%s2 + $0x1a0] sm:$0xff]
    %v187 = vld [vmem:[%s2 + $0x1a8] sm:$0xff]
    %v188 = vld [vmem:[%s2 + $0x1b0] sm:$0xff]
    %v189 = vld [vmem:[%s2 + $0x1b8] sm:$0xff]
    %v190 = vld [vmem:[%s2 + $0x1c0] sm:$0xff]
    %v191 = vld [vmem:[%s2 + $0x1c8] sm:$0xff]
    %v192 = vld [vmem:[%s2 + $0x1d0] sm:$0xff]
    %v193 = vld [vmem:[%s2 + $0x1d8] sm:$0xff]
    %v194 = vld [vmem:[%s2 + $0x1e0] sm:$0xff]
    %v195 = vld [vmem:[%s2 + $0x1e8] sm:$0xff]
    %v196 = vld [vmem:[%s2 + $0x1f0] sm:$0xff]
    %v197 = vld [vmem:[%s2 + $0x1f8] sm:$0xff]
    %v198 = vld [vmem:[%s2 + $0x200] sm:$0xff]
    %v199 = vld [vmem:[%s2 + $0x208] sm:$0xff]
    %v200 = vld [vmem:[%s2 + $0x210] sm:$0xff]
    %v201 = vld [vmem:[%s2 + $0x218] sm:$0xff]
    %v202 = vld [vmem:[%s2 + $0x220] sm:$0xff]
    %v203 = vld [vmem:[%s2 + $0x228] sm:$0xff]
    %v204 = vld [vmem:[%s2 + $0x230] sm:$0xff]
    %v205 = vld [vmem:[%s2 + $0x238] sm:$0xff]
    %207 = vset.pattern.permute.xlu0 0
    %208 = vperm.xlu0 %207, %v134
    %v209 = vpop.permute.xlu0 %208
    %212 = vset.pattern.permute.xlu0 0
    %213 = vperm.xlu0 %212, %v135
    %v214 = vpop.permute.xlu0 %213
    %217 = vset.pattern.permute.xlu0 0
    %218 = vperm.xlu0 %217, %v136
    %v219 = vpop.permute.xlu0 %218
    %222 = vset.pattern.permute.xlu0 0
    %223 = vperm.xlu0 %222, %v137
    %v224 = vpop.permute.xlu0 %223
    %227 = vset.pattern.permute.xlu0 0
    %228 = vperm.xlu0 %227, %v138
    %v229 = vpop.permute.xlu0 %228
    %232 = vset.pattern.permute.xlu0 0
    %233 = vperm.xlu0 %232, %v139
    %v234 = vpop.permute.xlu0 %233
    %237 = vset.pattern.permute.xlu0 0
    %238 = vperm.xlu0 %237, %v140
    %v239 = vpop.permute.xlu0 %238
    %242 = vset.pattern.permute.xlu0 0
    %243 = vperm.xlu0 %242, %v141
    %v244 = vpop.permute.xlu0 %243
    %247 = vset.pattern.permute.xlu0 0
    %248 = vperm.xlu0 %247, %v142
    %v249 = vpop.permute.xlu0 %248
    %252 = vset.pattern.permute.xlu0 0
    %253 = vperm.xlu0 %252, %v143
    %v254 = vpop.permute.xlu0 %253
    %257 = vset.pattern.permute.xlu0 0
    %258 = vperm.xlu0 %257, %v144
    %v259 = vpop.permute.xlu0 %258
    %262 = vset.pattern.permute.xlu0 0
    %263 = vperm.xlu0 %262, %v145
    %v264 = vpop.permute.xlu0 %263
    %267 = vset.pattern.permute.xlu0 0
    %268 = vperm.xlu0 %267, %v146
    %v269 = vpop.permute.xlu0 %268
    %272 = vset.pattern.permute.xlu0 0
    %273 = vperm.xlu0 %272, %v147
    %v274 = vpop.permute.xlu0 %273
    %277 = vset.pattern.permute.xlu0 0
    %278 = vperm.xlu0 %277, %v148
    %v279 = vpop.permute.xlu0 %278
    %282 = vset.pattern.permute.xlu0 0
    %283 = vperm.xlu0 %282, %v149
    %v284 = vpop.permute.xlu0 %283
    %287 = vset.pattern.permute.xlu0 0
    %288 = vperm.xlu0 %287, %v150
    %v289 = vpop.permute.xlu0 %288
    %292 = vset.pattern.permute.xlu0 0
    %293 = vperm.xlu0 %292, %v151
    %v294 = vpop.permute.xlu0 %293
    %297 = vset.pattern.permute.xlu0 0
    %298 = vperm.xlu0 %297, %v152
    %v299 = vpop.permute.xlu0 %298
    %302 = vset.pattern.permute.xlu0 0
    %303 = vperm.xlu0 %302, %v153
    %v304 = vpop.permute.xlu0 %303
    %307 = vset.pattern.permute.xlu0 0
    %308 = vperm.xlu0 %307, %v154
    %v309 = vpop.permute.xlu0 %308
    %312 = vset.pattern.permute.xlu0 0
    %313 = vperm.xlu0 %312, %v155
    %v314 = vpop.permute.xlu0 %313
    %317 = vset.pattern.permute.xlu0 0
    %318 = vperm.xlu0 %317, %v156
    %v319 = vpop.permute.xlu0 %318
    %322 = vset.pattern.permute.xlu0 0
    %323 = vperm.xlu0 %322, %v157
    %v324 = vpop.permute.xlu0 %323
    %327 = vset.pattern.permute.xlu0 0
    %328 = vperm.xlu0 %327, %v158
    %v329 = vpop.permute.xlu0 %328
    %332 = vset.pattern.permute.xlu0 0
    %333 = vperm.xlu0 %332, %v159
    %v334 = vpop.permute.xlu0 %333
    %337 = vset.pattern.permute.xlu0 0
    %338 = vperm.xlu0 %337, %v160
    %v339 = vpop.permute.xlu0 %338
    %342 = vset.pattern.permute.xlu0 0
    %343 = vperm.xlu0 %342, %v161
    %v344 = vpop.permute.xlu0 %343
    %347 = vset.pattern.permute.xlu0 0
    %348 = vperm.xlu0 %347, %v162
    %v349 = vpop.permute.xlu0 %348
    %352 = vset.pattern.permute.xlu0 0
    %353 = vperm.xlu0 %352, %v163
    %v354 = vpop.permute.xlu0 %353
    %357 = vset.pattern.permute.xlu0 0
    %358 = vperm.xlu0 %357, %v164
    %v359 = vpop.permute.xlu0 %358
    %362 = vset.pattern.permute.xlu0 0
    %363 = vperm.xlu0 %362, %v165
    %v364 = vpop.permute.xlu0 %363
    %367 = vset.pattern.permute.xlu0 0
    %368 = vperm.xlu0 %367, %v166
    %v369 = vpop.permute.xlu0 %368
    %372 = vset.pattern.permute.xlu0 0
    %373 = vperm.xlu0 %372, %v167
    %v374 = vpop.permute.xlu0 %373
    %377 = vset.pattern.permute.xlu0 0
    %378 = vperm.xlu0 %377, %v168
    %v379 = vpop.permute.xlu0 %378
    %382 = vset.pattern.permute.xlu0 0
    %383 = vperm.xlu0 %382, %v169
    %v384 = vpop.permute.xlu0 %383
    %387 = vset.pattern.permute.xlu0 0
    %388 = vperm.xlu0 %387, %v170
    %v389 = vpop.permute.xlu0 %388
    %392 = vset.pattern.permute.xlu0 0
    %393 = vperm.xlu0 %392, %v171
    %v394 = vpop.permute.xlu0 %393
    %397 = vset.pattern.permute.xlu0 0
    %398 = vperm.xlu0 %397, %v172
    %v399 = vpop.permute.xlu0 %398
    %402 = vset.pattern.permute.xlu0 0
    %403 = vperm.xlu0 %402, %v173
    %v404 = vpop.permute.xlu0 %403
    %407 = vset.pattern.permute.xlu0 0
    %408 = vperm.xlu0 %407, %v174
    %v409 = vpop.permute.xlu0 %408
    %412 = vset.pattern.permute.xlu0 0
    %413 = vperm.xlu0 %412, %v175
    %v414 = vpop.permute.xlu0 %413
    %417 = vset.pattern.permute.xlu0 0
    %418 = vperm.xlu0 %417, %v176
    %v419 = vpop.permute.xlu0 %418
    %422 = vset.pattern.permute.xlu0 0
    %423 = vperm.xlu0 %422, %v177
    %v424 = vpop.permute.xlu0 %423
    %427 = vset.pattern.permute.xlu0 0
    %428 = vperm.xlu0 %427, %v178
    %v429 = vpop.permute.xlu0 %428
    %432 = vset.pattern.permute.xlu0 0
    %433 = vperm.xlu0 %432, %v179
    %v434 = vpop.permute.xlu0 %433
    %437 = vset.pattern.permute.xlu0 0
    %438 = vperm.xlu0 %437, %v180
    %v439 = vpop.permute.xlu0 %438
    %442 = vset.pattern.permute.xlu0 0
    %443 = vperm.xlu0 %442, %v181
    %v444 = vpop.permute.xlu0 %443
    %447 = vset.pattern.permute.xlu0 0
    %448 = vperm.xlu0 %447, %v182
    %v449 = vpop.permute.xlu0 %448
    %452 = vset.pattern.permute.xlu0 0
    %453 = vperm.xlu0 %452, %v183
    %v454 = vpop.permute.xlu0 %453
    %457 = vset.pattern.permute.xlu0 0
    %458 = vperm.xlu0 %457, %v184
    %v459 = vpop.permute.xlu0 %458
    %462 = vset.pattern.permute.xlu0 0
    %463 = vperm.xlu0 %462, %v185
    %v464 = vpop.permute.xlu0 %463
    %467 = vset.pattern.permute.xlu0 0
    %468 = vperm.xlu0 %467, %v186
    %v469 = vpop.permute.xlu0 %468
    %472 = vset.pattern.permute.xlu0 0
    %473 = vperm.xlu0 %472, %v187
    %v474 = vpop.permute.xlu0 %473
    %477 = vset.pattern.permute.xlu0 0
    %478 = vperm.xlu0 %477, %v188
    %v479 = vpop.permute.xlu0 %478
    %482 = vset.pattern.permute.xlu0 0
    %483 = vperm.xlu0 %482, %v189
    %v484 = vpop.permute.xlu0 %483
    %487 = vset.pattern.permute.xlu0 0
    %488 = vperm.xlu0 %487, %v190
    %v489 = vpop.permute.xlu0 %488
    %492 = vset.pattern.permute.xlu0 0
    %493 = vperm.xlu0 %492, %v191
    %v494 = vpop.permute.xlu0 %493
    %497 = vset.pattern.permute.xlu0 0
    %498 = vperm.xlu0 %497, %v192
    %v499 = vpop.permute.xlu0 %498
    %502 = vset.pattern.permute.xlu0 0
    %503 = vperm.xlu0 %502, %v193
    %v504 = vpop.permute.xlu0 %503
    %507 = vset.pattern.permute.xlu0 0
    %508 = vperm.xlu0 %507, %v194
    %v509 = vpop.permute.xlu0 %508
    %512 = vset.pattern.permute.xlu0 0
    %513 = vperm.xlu0 %512, %v195
    %v514 = vpop.permute.xlu0 %513
    %517 = vset.pattern.permute.xlu0 0
    %518 = vperm.xlu0 %517, %v196
    %v519 = vpop.permute.xlu0 %518
    %522 = vset.pattern.permute.xlu0 0
    %523 = vperm.xlu0 %522, %v197
    %v524 = vpop.permute.xlu0 %523
    %527 = vset.pattern.permute.xlu0 0
    %528 = vperm.xlu0 %527, %v198
    %v529 = vpop.permute.xlu0 %528
    %532 = vset.pattern.permute.xlu0 0
    %533 = vperm.xlu0 %532, %v199
    %v534 = vpop.permute.xlu0 %533
    %537 = vset.pattern.permute.xlu0 0
    %538 = vperm.xlu0 %537, %v200
    %v539 = vpop.permute.xlu0 %538
    %542 = vset.pattern.permute.xlu0 0
    %543 = vperm.xlu0 %542, %v201
    %v544 = vpop.permute.xlu0 %543
    %547 = vset.pattern.permute.xlu0 0
    %548 = vperm.xlu0 %547, %v202
    %v549 = vpop.permute.xlu0 %548
    %552 = vset.pattern.permute.xlu0 0
    %553 = vperm.xlu0 %552, %v203
    %v554 = vpop.permute.xlu0 %553
    %557 = vset.pattern.permute.xlu0 0
    %558 = vperm.xlu0 %557, %v204
    %v559 = vpop.permute.xlu0 %558
    %562 = vset.pattern.permute.xlu0 0
    %563 = vperm.xlu0 %562, %v205
    %v564 = vpop.permute.xlu0 %563
    %v638 = vunpack.c.l.b16 %v42
    %v639 = vunpack.c.h.b16 %v42
    %v640 = vunpack.c.l.b16 %v43
    %v641 = vunpack.c.h.b16 %v43
    %v642 = vunpack.c.l.b16 %v44
    %v643 = vunpack.c.h.b16 %v44
    %v644 = vunpack.c.l.b16 %v45
    %v645 = vunpack.c.h.b16 %v45
    %v646 = vunpack.c.l.b16 %v46
    %v647 = vunpack.c.h.b16 %v46
    %v648 = vunpack.c.l.b16 %v47
    %v649 = vunpack.c.h.b16 %v47
    %v650 = vunpack.c.l.b16 %v48
    %v651 = vunpack.c.h.b16 %v48
    %v652 = vunpack.c.l.b16 %v49
    %v653 = vunpack.c.h.b16 %v49
    %v654 = vunpack.c.l.b16 %v50
    %v655 = vunpack.c.h.b16 %v50
    %v656 = vunpack.c.l.b16 %v51
    %v657 = vunpack.c.h.b16 %v51
    %v658 = vunpack.c.l.b16 %v52
    %v659 = vunpack.c.h.b16 %v52
    %v660 = vunpack.c.l.b16 %v53
    %v661 = vunpack.c.h.b16 %v53
    %v662 = vunpack.c.l.b16 %v54
    %v663 = vunpack.c.h.b16 %v54
    %v664 = vunpack.c.l.b16 %v55
    %v665 = vunpack.c.h.b16 %v55
    %v666 = vunpack.c.l.b16 %v56
    %v667 = vunpack.c.h.b16 %v56
    %v668 = vunpack.c.l.b16 %v57
    %v669 = vunpack.c.h.b16 %v57
    %v670 = vunpack.c.l.b16 %v58
    %v671 = vunpack.c.h.b16 %v58
    %v672 = vunpack.c.l.b16 %v59
    %v673 = vunpack.c.h.b16 %v59
    %v674 = vunpack.c.l.b16 %v60
    %v675 = vunpack.c.h.b16 %v60
    %v676 = vunpack.c.l.b16 %v61
    %v677 = vunpack.c.h.b16 %v61
    %v678 = vunpack.c.l.b16 %v62
    %v679 = vunpack.c.h.b16 %v62
    %v680 = vunpack.c.l.b16 %v63
    %v681 = vunpack.c.h.b16 %v63
    %v682 = vunpack.c.l.b16 %v64
    %v683 = vunpack.c.h.b16 %v64
    %v684 = vunpack.c.l.b16 %v65
    %v685 = vunpack.c.h.b16 %v65
    %v686 = vunpack.c.l.b16 %v66
    %v687 = vunpack.c.h.b16 %v66
    %v688 = vunpack.c.l.b16 %v67
    %v689 = vunpack.c.h.b16 %v67
    %v690 = vunpack.c.l.b16 %v68
    %v691 = vunpack.c.h.b16 %v68
    %v692 = vunpack.c.l.b16 %v69
    %v693 = vunpack.c.h.b16 %v69
    %v694 = vunpack.c.l.b16 %v70
    %v695 = vunpack.c.h.b16 %v70
    %v696 = vunpack.c.l.b16 %v71
    %v697 = vunpack.c.h.b16 %v71
    %v698 = vunpack.c.l.b16 %v72
    %v699 = vunpack.c.h.b16 %v72
    %v700 = vunpack.c.l.b16 %v73
    %v701 = vunpack.c.h.b16 %v73
    %v702 = vunpack.c.l.b16 %v74
    %v703 = vunpack.c.h.b16 %v74
    %v704 = vunpack.c.l.b16 %v75
    %v705 = vunpack.c.h.b16 %v75
    %v706 = vunpack.c.l.b16 %v76
    %v707 = vunpack.c.h.b16 %v76
    %v708 = vunpack.c.l.b16 %v77
    %v709 = vunpack.c.h.b16 %v77
    %v710 = vunpack.c.l.b16 %v78
    %v711 = vunpack.c.h.b16 %v78
    %v712 = vunpack.c.l.b16 %v79
    %v713 = vunpack.c.h.b16 %v79
    %v714 = vunpack.c.l.b16 %v80
    %v715 = vunpack.c.h.b16 %v80
    %v716 = vunpack.c.l.b16 %v81
    %v717 = vunpack.c.h.b16 %v81
    %v718 = vunpack.c.l.b16 %v82
    %v719 = vunpack.c.h.b16 %v82
    %v720 = vunpack.c.l.b16 %v83
    %v721 = vunpack.c.h.b16 %v83
    %v722 = vunpack.c.l.b16 %v84
    %v723 = vunpack.c.h.b16 %v84
    %v724 = vunpack.c.l.b16 %v85
    %v725 = vunpack.c.h.b16 %v85
    %v726 = vunpack.c.l.b16 %v86
    %v727 = vunpack.c.h.b16 %v86
    %v728 = vunpack.c.l.b16 %v87
    %v729 = vunpack.c.h.b16 %v87
    %v730 = vunpack.c.l.b16 %v88
    %v731 = vunpack.c.h.b16 %v88
    %v732 = vunpack.c.l.b16 %v89
    %v733 = vunpack.c.h.b16 %v89
    %v734 = vunpack.c.l.b16 %v90
    %v735 = vunpack.c.h.b16 %v90
    %v736 = vunpack.c.l.b16 %v91
    %v737 = vunpack.c.h.b16 %v91
    %v738 = vunpack.c.l.b16 %v92
    %v739 = vunpack.c.h.b16 %v92
    %v740 = vunpack.c.l.b16 %v93
    %v741 = vunpack.c.h.b16 %v93
    %v742 = vunpack.c.l.b16 %v94
    %v743 = vunpack.c.h.b16 %v94
    %v744 = vunpack.c.l.b16 %v95
    %v745 = vunpack.c.h.b16 %v95
    %v746 = vunpack.c.l.b16 %v96
    %v747 = vunpack.c.h.b16 %v96
    %v748 = vunpack.c.l.b16 %v97
    %v749 = vunpack.c.h.b16 %v97
    %v750 = vunpack.c.l.b16 %v98
    %v751 = vunpack.c.h.b16 %v98
    %v752 = vunpack.c.l.b16 %v99
    %v753 = vunpack.c.h.b16 %v99
    %v754 = vunpack.c.l.b16 %v100
    %v755 = vunpack.c.h.b16 %v100
    %v756 = vunpack.c.l.b16 %v101
    %v757 = vunpack.c.h.b16 %v101
    %v758 = vunpack.c.l.b16 %v102
    %v759 = vunpack.c.h.b16 %v102
    %v760 = vunpack.c.l.b16 %v103
    %v761 = vunpack.c.h.b16 %v103
    %v762 = vunpack.c.l.b16 %v104
    %v763 = vunpack.c.h.b16 %v104
    %v764 = vunpack.c.l.b16 %v105
    %v765 = vunpack.c.h.b16 %v105
    %v766 = vunpack.c.l.b16 %v106
    %v767 = vunpack.c.h.b16 %v106
    %v768 = vunpack.c.l.b16 %v107
    %v769 = vunpack.c.h.b16 %v107
    %v770 = vunpack.c.l.b16 %v108
    %v771 = vunpack.c.h.b16 %v108
    %v772 = vunpack.c.l.b16 %v109
    %v773 = vunpack.c.h.b16 %v109
    %v774 = vunpack.c.l.b16 %v110
    %v775 = vunpack.c.h.b16 %v110
    %v776 = vunpack.c.l.b16 %v111
    %v777 = vunpack.c.h.b16 %v111
    %v778 = vunpack.c.l.b16 %v112
    %v779 = vunpack.c.h.b16 %v112
    %v780 = vunpack.c.l.b16 %v113
    %v781 = vunpack.c.h.b16 %v113
    %v782 = vpack.c.b16 %v640, %v638
    %v783 = vpack.c.b16 %v641, %v639
    %v784 = vpack.c.b16 %v644, %v642
    %v785 = vpack.c.b16 %v645, %v643
    %v786 = vpack.c.b16 %v648, %v646
    %v787 = vpack.c.b16 %v649, %v647
    %v788 = vpack.c.b16 %v652, %v650
    %v789 = vpack.c.b16 %v653, %v651
    %v790 = vpack.c.b16 %v656, %v654
    %v791 = vpack.c.b16 %v657, %v655
    %v792 = vpack.c.b16 %v660, %v658
    %v793 = vpack.c.b16 %v661, %v659
    %v794 = vpack.c.b16 %v664, %v662
    %v795 = vpack.c.b16 %v665, %v663
    %v796 = vpack.c.b16 %v668, %v666
    %v797 = vpack.c.b16 %v669, %v667
    %v798 = vpack.c.b16 %v672, %v670
    %v799 = vpack.c.b16 %v673, %v671
    %v800 = vpack.c.b16 %v676, %v674
    %v801 = vpack.c.b16 %v677, %v675
    %v802 = vpack.c.b16 %v680, %v678
    %v803 = vpack.c.b16 %v681, %v679
    %v804 = vpack.c.b16 %v684, %v682
    %v805 = vpack.c.b16 %v685, %v683
    %v806 = vpack.c.b16 %v688, %v686
    %v807 = vpack.c.b16 %v689, %v687
    %v808 = vpack.c.b16 %v692, %v690
    %v809 = vpack.c.b16 %v693, %v691
    %v810 = vpack.c.b16 %v696, %v694
    %v811 = vpack.c.b16 %v697, %v695
    %v812 = vpack.c.b16 %v700, %v698
    %v813 = vpack.c.b16 %v701, %v699
    %v814 = vpack.c.b16 %v704, %v702
    %v815 = vpack.c.b16 %v705, %v703
    %v816 = vpack.c.b16 %v708, %v706
    %v817 = vpack.c.b16 %v709, %v707
    %v818 = vpack.c.b16 %v712, %v710
    %v819 = vpack.c.b16 %v713, %v711
    %v820 = vpack.c.b16 %v716, %v714
    %v821 = vpack.c.b16 %v717, %v715
    %v822 = vpack.c.b16 %v720, %v718
    %v823 = vpack.c.b16 %v721, %v719
    %v824 = vpack.c.b16 %v724, %v722
    %v825 = vpack.c.b16 %v725, %v723
    %v826 = vpack.c.b16 %v728, %v726
    %v827 = vpack.c.b16 %v729, %v727
    %v828 = vpack.c.b16 %v732, %v730
    %v829 = vpack.c.b16 %v733, %v731
    %v830 = vpack.c.b16 %v736, %v734
    %v831 = vpack.c.b16 %v737, %v735
    %v832 = vpack.c.b16 %v740, %v738
    %v833 = vpack.c.b16 %v741, %v739
    %v834 = vpack.c.b16 %v744, %v742
    %v835 = vpack.c.b16 %v745, %v743
    %v836 = vpack.c.b16 %v748, %v746
    %v837 = vpack.c.b16 %v749, %v747
    %v838 = vpack.c.b16 %v752, %v750
    %v839 = vpack.c.b16 %v753, %v751
    %v840 = vpack.c.b16 %v756, %v754
    %v841 = vpack.c.b16 %v757, %v755
    %v842 = vpack.c.b16 %v760, %v758
    %v843 = vpack.c.b16 %v761, %v759
    %v844 = vpack.c.b16 %v764, %v762
    %v845 = vpack.c.b16 %v765, %v763
    %v846 = vpack.c.b16 %v768, %v766
    %v847 = vpack.c.b16 %v769, %v767
    %v848 = vpack.c.b16 %v772, %v770
    %v849 = vpack.c.b16 %v773, %v771
    %v850 = vpack.c.b16 %v776, %v774
    %v851 = vpack.c.b16 %v777, %v775
    %v852 = vpack.c.b16 %v780, %v778
    %v853 = vpack.c.b16 %v781, %v779
    %v910 = vunpack.c.l.b16 %v114
    %v911 = vunpack.c.l.b16 %v115
    %v912 = vunpack.c.l.b16 %v116
    %v913 = vunpack.c.l.b16 %v117
    %v914 = vunpack.c.l.b16 %v118
    %v915 = vunpack.c.l.b16 %v119
    %v916 = vunpack.c.l.b16 %v120
    %v917 = vunpack.c.l.b16 %v121
    %v918 = vunpack.c.l.b16 %v122
    %v919 = vunpack.c.l.b16 %v123
    %v920 = vunpack.c.l.b16 %v124
    %v921 = vunpack.c.l.b16 %v125
    %v922 = vunpack.c.l.b16 %v126
    %v923 = vunpack.c.l.b16 %v127
    %v924 = vunpack.c.l.b16 %v128
    %v925 = vunpack.c.l.b16 %v129
    %v926 = vunpack.c.l.b16 %v130
    %v927 = vunpack.c.l.b16 %v131
    %v928 = vunpack.c.l.b16 %v132
    %v929 = vunpack.c.l.b16 %v133
    %v930 = vpack.c.b16 %v911, %v910
    %v931 = vpack.c.b16 %v913, %v912
    %v932 = vpack.c.b16 %v915, %v914
    %v933 = vpack.c.b16 %v917, %v916
    %v934 = vpack.c.b16 %v919, %v918
    %v935 = vpack.c.b16 %v921, %v920
    %v936 = vpack.c.b16 %v923, %v922
    %v937 = vpack.c.b16 %v925, %v924
    %v938 = vpack.c.b16 %v927, %v926
    %v939 = vpack.c.b16 %v929, %v928
    %vm950 = vcmask 261120
    %v952 = vsel %vm950, %v783, 0
    %v955 = vsel %vm950, %v785, 0
    %v958 = vsel %vm950, %v787, 0
    %v961 = vsel %vm950, %v789, 0
    %v964 = vsel %vm950, %v791, 0
    %v967 = vsel %vm950, %v793, 0
    %v970 = vsel %vm950, %v795, 0
    %v973 = vsel %vm950, %v797, 0
    %v976 = vsel %vm950, %v799, 0
    %v979 = vsel %vm950, %v801, 0
    %v982 = vsel %vm950, %v803, 0
    %v985 = vsel %vm950, %v805, 0
    %v988 = vsel %vm950, %v807, 0
    %v991 = vsel %vm950, %v809, 0
    %v994 = vsel %vm950, %v811, 0
    %v997 = vsel %vm950, %v813, 0
    %v1000 = vsel %vm950, %v815, 0
    %v1003 = vsel %vm950, %v817, 0
    %v1006 = vsel %vm950, %v819, 0
    %v1009 = vsel %vm950, %v821, 0
    %v1012 = vsel %vm950, %v823, 0
    %v1015 = vsel %vm950, %v825, 0
    %v1018 = vsel %vm950, %v827, 0
    %v1021 = vsel %vm950, %v829, 0
    %v1024 = vsel %vm950, %v831, 0
    %v1027 = vsel %vm950, %v833, 0
    %v1030 = vsel %vm950, %v835, 0
    %v1033 = vsel %vm950, %v837, 0
    %v1036 = vsel %vm950, %v839, 0
    %v1039 = vsel %vm950, %v841, 0
    %v1042 = vsel %vm950, %v843, 0
    %v1045 = vsel %vm950, %v845, 0
    %v1048 = vsel %vm950, %v847, 0
    %v1051 = vsel %vm950, %v849, 0
    %v1054 = vsel %vm950, %v851, 0
    %v1057 = vsel %vm950, %v853, 0
    %1059 = vmatprep.subr.bf16.mxu0 0
    %1060 = vmatpush1.bf16.msra.mxu0 %v930
    %1061 = vmatprep.subr.bf16.mxu0 0
    %1062 = vmatpush1.bf16.msra.mxu0 %v931
    %1063 = vmatprep.subr.bf16.mxu0 0
    %1064 = vmatpush1.bf16.msra.mxu0 %v932
    %1065 = vmatprep.subr.bf16.mxu0 0
    %1066 = vmatpush1.bf16.msra.mxu0 %v933
    %1067 = vmatprep.subr.bf16.mxu0 0
    %1068 = vmatpush1.bf16.msra.mxu0 %v934
    %1069 = vmatprep.subr.bf16.mxu0 0
    %1070 = vmatpush1.bf16.msra.mxu0 %v935
    %1071 = vmatprep.subr.bf16.mxu0 0
    %1072 = vmatpush1.bf16.msra.mxu0 %v936
    %1073 = vmatprep.subr.bf16.mxu0 0
    %1074 = vmatpush1.bf16.msra.mxu0 %v937
    %1075 = vmatprep.subr.bf16.mxu0 0
    %1076 = vmatpush1.bf16.msra.mxu0 %v938
    %1077 = vmatprep.subr.bf16.mxu0 0
    %1078 = vmatpush1.bf16.msra.mxu0 %v939
    %1079 = vmatprep.subr.bf16.mxu0 0
    %1080 = vmatpush1.bf16.msra.mxu0 0
    %1081 = vmatprep.subr.bf16.mxu0 0
    %1082 = vmatpush1.bf16.msra.mxu0 0
    %1083 = vmatprep.subr.bf16.mxu0 0
    %1084 = vmatpush1.bf16.msra.mxu0 0
    %1085 = vmatprep.subr.bf16.mxu0 0
    %1086 = vmatpush1.bf16.msra.mxu0 0
    %1087 = vmatprep.subr.bf16.mxu0 0
    %1088 = vmatpush1.bf16.msra.mxu0 0
    %1089 = vmatprep.subr.bf16.mxu0 0
    %1090 = vmatpush1.bf16.msra.mxu0 0
    %1091 = vmatprep.mubr.bf16.mxu0 %v952
    %1092 = vmatmul.mubr.bf16.gmra.mrb[0].mxu0 %v782
    %v1093 = vpop.f32.mrb[0].mxu0
    %v1094 = vadd.f32 %v209, %v1093
    %v1095 = vpop.f32.mrb[0].mxu0
    %v1096 = vpop.f32.mrb[0].mxu0
    %v1097 = vadd.f32 %v214, %v1096
    %v1098 = vpop.f32.mrb[0].mxu0
    %1099 = vmatprep.mubr.bf16.mxu0 %v955
    %1100 = vmatmul.mubr.bf16.gmra.mrb[0].mxu0 %v784
    %v1101 = vpop.f32.mrb[0].mxu0
    %v1102 = vadd.f32 %v219, %v1101
    %v1103 = vpop.f32.mrb[0].mxu0
    %v1104 = vpop.f32.mrb[0].mxu0
    %v1105 = vadd.f32 %v224, %v1104
    %v1106 = vpop.f32.mrb[0].mxu0
    %1107 = vmatprep.mubr.bf16.mxu0 %v958
    %1108 = vmatmul.mubr.bf16.gmra.mrb[0].mxu0 %v786
    %v1109 = vpop.f32.mrb[0].mxu0
    %v1110 = vadd.f32 %v229, %v1109
    %v1111 = vpop.f32.mrb[0].mxu0
    %v1112 = vpop.f32.mrb[0].mxu0
    %v1113 = vadd.f32 %v234, %v1112
    %v1114 = vpop.f32.mrb[0].mxu0
    %1115 = vmatprep.mubr.bf16.mxu0 %v961
    %1116 = vmatmul.mubr.bf16.gmra.mrb[0].mxu0 %v788
    %v1117 = vpop.f32.mrb[0].mxu0
    %v1118 = vadd.f32 %v239, %v1117
    %v1119 = vpop.f32.mrb[0].mxu0
    %v1120 = vpop.f32.mrb[0].mxu0
    %v1121 = vadd.f32 %v244, %v1120
    %v1122 = vpop.f32.mrb[0].mxu0
    %1123 = vmatprep.mubr.bf16.mxu0 %v964
    %1124 = vmatmul.mubr.bf16.gmra.mrb[0].mxu0 %v790
    %v1125 = vpop.f32.mrb[0].mxu0
    %v1126 = vadd.f32 %v249, %v1125
    %v1127 = vpop.f32.mrb[0].mxu0
    %v1128 = vpop.f32.mrb[0].mxu0
    %v1129 = vadd.f32 %v254, %v1128
    %v1130 = vpop.f32.mrb[0].mxu0
    %1131 = vmatprep.mubr.bf16.mxu0 %v967
    %1132 = vmatmul.mubr.bf16.gmra.mrb[0].mxu0 %v792
    %v1133 = vpop.f32.mrb[0].mxu0
    %v1134 = vadd.f32 %v259, %v1133
    %v1135 = vpop.f32.mrb[0].mxu0
    %v1136 = vpop.f32.mrb[0].mxu0
    %v1137 = vadd.f32 %v264, %v1136
    %v1138 = vpop.f32.mrb[0].mxu0
    %1139 = vmatprep.mubr.bf16.mxu0 %v970
    %1140 = vmatmul.mubr.bf16.gmra.mrb[0].mxu0 %v794
    %v1141 = vpop.f32.mrb[0].mxu0
    %v1142 = vadd.f32 %v269, %v1141
    %v1143 = vpop.f32.mrb[0].mxu0
    %v1144 = vpop.f32.mrb[0].mxu0
    %v1145 = vadd.f32 %v274, %v1144
    %v1146 = vpop.f32.mrb[0].mxu0
    %1147 = vmatprep.mubr.bf16.mxu0 %v973
    %1148 = vmatmul.mubr.bf16.gmra.mrb[0].mxu0 %v796
    %v1149 = vpop.f32.mrb[0].mxu0
    %v1150 = vadd.f32 %v279, %v1149
    %v1151 = vpop.f32.mrb[0].mxu0
    %v1152 = vpop.f32.mrb[0].mxu0
    %v1153 = vadd.f32 %v284, %v1152
    %v1154 = vpop.f32.mrb[0].mxu0
    %1155 = vmatprep.mubr.bf16.mxu0 %v976
    %1156 = vmatmul.mubr.bf16.gmra.mrb[0].mxu0 %v798
    %v1157 = vpop.f32.mrb[0].mxu0
    %v1158 = vadd.f32 %v289, %v1157
    %v1159 = vpop.f32.mrb[0].mxu0
    %v1160 = vpop.f32.mrb[0].mxu0
    %v1161 = vadd.f32 %v294, %v1160
    %v1162 = vpop.f32.mrb[0].mxu0
    %1163 = vmatprep.mubr.bf16.mxu0 %v979
    %1164 = vmatmul.mubr.bf16.gmra.mrb[0].mxu0 %v800
    %v1165 = vpop.f32.mrb[0].mxu0
    %v1166 = vadd.f32 %v299, %v1165
    %v1167 = vpop.f32.mrb[0].mxu0
    %v1168 = vpop.f32.mrb[0].mxu0
    %v1169 = vadd.f32 %v304, %v1168
    %v1170 = vpop.f32.mrb[0].mxu0
    %1171 = vmatprep.mubr.bf16.mxu0 %v982
    %1172 = vmatmul.mubr.bf16.gmra.mrb[0].mxu0 %v802
    %v1173 = vpop.f32.mrb[0].mxu0
    %v1174 = vadd.f32 %v309, %v1173
    %v1175 = vpop.f32.mrb[0].mxu0
    %v1176 = vpop.f32.mrb[0].mxu0
    %v1177 = vadd.f32 %v314, %v1176
    %v1178 = vpop.f32.mrb[0].mxu0
    %1179 = vmatprep.mubr.bf16.mxu0 %v985
    %1180 = vmatmul.mubr.bf16.gmra.mrb[0].mxu0 %v804
    %v1181 = vpop.f32.mrb[0].mxu0
    %v1182 = vadd.f32 %v319, %v1181
    %v1183 = vpop.f32.mrb[0].mxu0
    %v1184 = vpop.f32.mrb[0].mxu0
    %v1185 = vadd.f32 %v324, %v1184
    %v1186 = vpop.f32.mrb[0].mxu0
    %1187 = vmatprep.mubr.bf16.mxu0 %v988
    %1188 = vmatmul.mubr.bf16.gmra.mrb[0].mxu0 %v806
    %v1189 = vpop.f32.mrb[0].mxu0
    %v1190 = vadd.f32 %v329, %v1189
    %v1191 = vpop.f32.mrb[0].mxu0
    %v1192 = vpop.f32.mrb[0].mxu0
    %v1193 = vadd.f32 %v334, %v1192
    %v1194 = vpop.f32.mrb[0].mxu0
    %1195 = vmatprep.mubr.bf16.mxu0 %v991
    %1196 = vmatmul.mubr.bf16.gmra.mrb[0].mxu0 %v808
    %v1197 = vpop.f32.mrb[0].mxu0
    %v1198 = vadd.f32 %v339, %v1197
    %v1199 = vpop.f32.mrb[0].mxu0
    %v1200 = vpop.f32.mrb[0].mxu0
    %v1201 = vadd.f32 %v344, %v1200
    %v1202 = vpop.f32.mrb[0].mxu0
    %1203 = vmatprep.mubr.bf16.mxu0 %v994
    %1204 = vmatmul.mubr.bf16.gmra.mrb[0].mxu0 %v810
    %v1205 = vpop.f32.mrb[0].mxu0
    %v1206 = vadd.f32 %v349, %v1205
    %v1207 = vpop.f32.mrb[0].mxu0
    %v1208 = vpop.f32.mrb[0].mxu0
    %v1209 = vadd.f32 %v354, %v1208
    %v1210 = vpop.f32.mrb[0].mxu0
    %1211 = vmatprep.mubr.bf16.mxu0 %v997
    %1212 = vmatmul.mubr.bf16.gmra.mrb[0].mxu0 %v812
    %v1213 = vpop.f32.mrb[0].mxu0
    %v1214 = vadd.f32 %v359, %v1213
    %v1215 = vpop.f32.mrb[0].mxu0
    %v1216 = vpop.f32.mrb[0].mxu0
    %v1217 = vadd.f32 %v364, %v1216
    %v1218 = vpop.f32.mrb[0].mxu0
    %1219 = vmatprep.mubr.bf16.mxu0 %v1000
    %1220 = vmatmul.mubr.bf16.gmra.mrb[0].mxu0 %v814
    %v1221 = vpop.f32.mrb[0].mxu0
    %v1222 = vadd.f32 %v369, %v1221
    %v1223 = vpop.f32.mrb[0].mxu0
    %v1224 = vpop.f32.mrb[0].mxu0
    %v1225 = vadd.f32 %v374, %v1224
    %v1226 = vpop.f32.mrb[0].mxu0
    %1227 = vmatprep.mubr.bf16.mxu0 %v1003
    %1228 = vmatmul.mubr.bf16.gmra.mrb[0].mxu0 %v816
    %v1229 = vpop.f32.mrb[0].mxu0
    %v1230 = vadd.f32 %v379, %v1229
    %v1231 = vpop.f32.mrb[0].mxu0
    %v1232 = vpop.f32.mrb[0].mxu0
    %v1233 = vadd.f32 %v384, %v1232
    %v1234 = vpop.f32.mrb[0].mxu0
    %1235 = vmatprep.mubr.bf16.mxu0 %v1006
    %1236 = vmatmul.mubr.bf16.gmra.mrb[0].mxu0 %v818
    %v1237 = vpop.f32.mrb[0].mxu0
    %v1238 = vadd.f32 %v389, %v1237
    %v1239 = vpop.f32.mrb[0].mxu0
    %v1240 = vpop.f32.mrb[0].mxu0
    %v1241 = vadd.f32 %v394, %v1240
    %v1242 = vpop.f32.mrb[0].mxu0
    %1243 = vmatprep.mubr.bf16.mxu0 %v1009
    %1244 = vmatmul.mubr.bf16.gmra.mrb[0].mxu0 %v820
    %v1245 = vpop.f32.mrb[0].mxu0
    %v1246 = vadd.f32 %v399, %v1245
    %v1247 = vpop.f32.mrb[0].mxu0
    %v1248 = vpop.f32.mrb[0].mxu0
    %v1249 = vadd.f32 %v404, %v1248
    %v1250 = vpop.f32.mrb[0].mxu0
    %1251 = vmatprep.mubr.bf16.mxu0 %v1012
    %1252 = vmatmul.mubr.bf16.gmra.mrb[0].mxu0 %v822
    %v1253 = vpop.f32.mrb[0].mxu0
    %v1254 = vadd.f32 %v409, %v1253
    %v1255 = vpop.f32.mrb[0].mxu0
    %v1256 = vpop.f32.mrb[0].mxu0
    %v1257 = vadd.f32 %v414, %v1256
    %v1258 = vpop.f32.mrb[0].mxu0
    %1259 = vmatprep.mubr.bf16.mxu0 %v1015
    %1260 = vmatmul.mubr.bf16.gmra.mrb[0].mxu0 %v824
    %v1261 = vpop.f32.mrb[0].mxu0
    %v1262 = vadd.f32 %v419, %v1261
    %v1263 = vpop.f32.mrb[0].mxu0
    %v1264 = vpop.f32.mrb[0].mxu0
    %v1265 = vadd.f32 %v424, %v1264
    %v1266 = vpop.f32.mrb[0].mxu0
    %1267 = vmatprep.mubr.bf16.mxu0 %v1018
    %1268 = vmatmul.mubr.bf16.gmra.mrb[0].mxu0 %v826
    %v1269 = vpop.f32.mrb[0].mxu0
    %v1270 = vadd.f32 %v429, %v1269
    %v1271 = vpop.f32.mrb[0].mxu0
    %v1272 = vpop.f32.mrb[0].mxu0
    %v1273 = vadd.f32 %v434, %v1272
    %v1274 = vpop.f32.mrb[0].mxu0
    %1275 = vmatprep.mubr.bf16.mxu0 %v1021
    %1276 = vmatmul.mubr.bf16.gmra.mrb[0].mxu0 %v828
    %v1277 = vpop.f32.mrb[0].mxu0
    %v1278 = vadd.f32 %v439, %v1277
    %v1279 = vpop.f32.mrb[0].mxu0
    %v1280 = vpop.f32.mrb[0].mxu0
    %v1281 = vadd.f32 %v444, %v1280
    %v1282 = vpop.f32.mrb[0].mxu0
    %1283 = vmatprep.mubr.bf16.mxu0 %v1024
    %1284 = vmatmul.mubr.bf16.gmra.mrb[0].mxu0 %v830
    %v1285 = vpop.f32.mrb[0].mxu0
    %v1286 = vadd.f32 %v449, %v1285
    %v1287 = vpop.f32.mrb[0].mxu0
    %v1288 = vpop.f32.mrb[0].mxu0
    %v1289 = vadd.f32 %v454, %v1288
    %v1290 = vpop.f32.mrb[0].mxu0
    %1291 = vmatprep.mubr.bf16.mxu0 %v1027
    %1292 = vmatmul.mubr.bf16.gmra.mrb[0].mxu0 %v832
    %v1293 = vpop.f32.mrb[0].mxu0
    %v1294 = vadd.f32 %v459, %v1293
    %v1295 = vpop.f32.mrb[0].mxu0
    %v1296 = vpop.f32.mrb[0].mxu0
    %v1297 = vadd.f32 %v464, %v1296
    %v1298 = vpop.f32.mrb[0].mxu0
    %1299 = vmatprep.mubr.bf16.mxu0 %v1030
    %1300 = vmatmul.mubr.bf16.gmra.mrb[0].mxu0 %v834
    %v1301 = vpop.f32.mrb[0].mxu0
    %v1302 = vadd.f32 %v469, %v1301
    %v1303 = vpop.f32.mrb[0].mxu0
    %v1304 = vpop.f32.mrb[0].mxu0
    %v1305 = vadd.f32 %v474, %v1304
    %v1306 = vpop.f32.mrb[0].mxu0
    %1307 = vmatprep.mubr.bf16.mxu0 %v1033
    %1308 = vmatmul.mubr.bf16.gmra.mrb[0].mxu0 %v836
    %v1309 = vpop.f32.mrb[0].mxu0
    %v1310 = vadd.f32 %v479, %v1309
    %v1311 = vpop.f32.mrb[0].mxu0
    %v1312 = vpop.f32.mrb[0].mxu0
    %v1313 = vadd.f32 %v484, %v1312
    %v1314 = vpop.f32.mrb[0].mxu0
    %1315 = vmatprep.mubr.bf16.mxu0 %v1036
    %1316 = vmatmul.mubr.bf16.gmra.mrb[0].mxu0 %v838
    %v1317 = vpop.f32.mrb[0].mxu0
    %v1318 = vadd.f32 %v489, %v1317
    %v1319 = vpop.f32.mrb[0].mxu0
    %v1320 = vpop.f32.mrb[0].mxu0
    %v1321 = vadd.f32 %v494, %v1320
    %v1322 = vpop.f32.mrb[0].mxu0
    %1323 = vmatprep.mubr.bf16.mxu0 %v1039
    %1324 = vmatmul.mubr.bf16.gmra.mrb[0].mxu0 %v840
    %v1325 = vpop.f32.mrb[0].mxu0
    %v1326 = vadd.f32 %v499, %v1325
    %v1327 = vpop.f32.mrb[0].mxu0
    %v1328 = vpop.f32.mrb[0].mxu0
    %v1329 = vadd.f32 %v504, %v1328
    %v1330 = vpop.f32.mrb[0].mxu0
    %1331 = vmatprep.mubr.bf16.mxu0 %v1042
    %1332 = vmatmul.mubr.bf16.gmra.mrb[0].mxu0 %v842
    %v1333 = vpop.f32.mrb[0].mxu0
    %v1334 = vadd.f32 %v509, %v1333
    %v1335 = vpop.f32.mrb[0].mxu0
    %v1336 = vpop.f32.mrb[0].mxu0
    %v1337 = vadd.f32 %v514, %v1336
    %v1338 = vpop.f32.mrb[0].mxu0
    %1339 = vmatprep.mubr.bf16.mxu0 %v1045
    %1340 = vmatmul.mubr.bf16.gmra.mrb[0].mxu0 %v844
    %v1341 = vpop.f32.mrb[0].mxu0
    %v1342 = vadd.f32 %v519, %v1341
    %v1343 = vpop.f32.mrb[0].mxu0
    %v1344 = vpop.f32.mrb[0].mxu0
    %v1345 = vadd.f32 %v524, %v1344
    %v1346 = vpop.f32.mrb[0].mxu0
    %1347 = vmatprep.mubr.bf16.mxu0 %v1048
    %1348 = vmatmul.mubr.bf16.gmra.mrb[0].mxu0 %v846
    %v1349 = vpop.f32.mrb[0].mxu0
    %v1350 = vadd.f32 %v529, %v1349
    %v1351 = vpop.f32.mrb[0].mxu0
    %v1352 = vpop.f32.mrb[0].mxu0
    %v1353 = vadd.f32 %v534, %v1352
    %v1354 = vpop.f32.mrb[0].mxu0
    %1355 = vmatprep.mubr.bf16.mxu0 %v1051
    %1356 = vmatmul.mubr.bf16.gmra.mrb[0].mxu0 %v848
    %v1357 = vpop.f32.mrb[0].mxu0
    %v1358 = vadd.f32 %v539, %v1357
    %v1359 = vpop.f32.mrb[0].mxu0
    %v1360 = vpop.f32.mrb[0].mxu0
    %v1361 = vadd.f32 %v544, %v1360
    %v1362 = vpop.f32.mrb[0].mxu0
    %1363 = vmatprep.mubr.bf16.mxu0 %v1054
    %1364 = vmatmul.mubr.bf16.gmra.mrb[0].mxu0 %v850
    %v1365 = vpop.f32.mrb[0].mxu0
    %v1366 = vadd.f32 %v549, %v1365
    %v1367 = vpop.f32.mrb[0].mxu0
    %v1368 = vpop.f32.mrb[0].mxu0
    %v1369 = vadd.f32 %v554, %v1368
    %v1370 = vpop.f32.mrb[0].mxu0
    %1371 = vmatprep.mubr.bf16.mxu0 %v1057
    %1372 = vmatmul.mubr.bf16.gmra.mrb[0].mxu0 %v852
    %v1373 = vpop.f32.mrb[0].mxu0
    %v1374 = vadd.f32 %v559, %v1373
    %v1375 = vpop.f32.mrb[0].mxu0
    %v1376 = vpop.f32.mrb[0].mxu0
    %v1377 = vadd.f32 %v564, %v1376
    %v1378 = vpop.f32.mrb[0].mxu0
    %1379 = vdwg.mxu0
    %v1380 = vmax.f32 %v1094, 0.0
    %v1381 = vmax.f32 %v1097, 0.0
    %v1382 = vmax.f32 %v1102, 0.0
    %v1383 = vmax.f32 %v1105, 0.0
    %v1384 = vmax.f32 %v1110, 0.0
    %v1385 = vmax.f32 %v1113, 0.0
    %v1386 = vmax.f32 %v1118, 0.0
    %v1387 = vmax.f32 %v1121, 0.0
    %v1388 = vmax.f32 %v1126, 0.0
    %v1389 = vmax.f32 %v1129, 0.0
    %v1390 = vmax.f32 %v1134, 0.0
    %v1391 = vmax.f32 %v1137, 0.0
    %v1392 = vmax.f32 %v1142, 0.0
    %v1393 = vmax.f32 %v1145, 0.0
    %v1394 = vmax.f32 %v1150, 0.0
    %v1395 = vmax.f32 %v1153, 0.0
    %v1396 = vmax.f32 %v1158, 0.0
    %v1397 = vmax.f32 %v1161, 0.0
    %v1398 = vmax.f32 %v1166, 0.0
    %v1399 = vmax.f32 %v1169, 0.0
    %v1400 = vmax.f32 %v1174, 0.0
    %v1401 = vmax.f32 %v1177, 0.0
    %v1402 = vmax.f32 %v1182, 0.0
    %v1403 = vmax.f32 %v1185, 0.0
    %v1404 = vmax.f32 %v1190, 0.0
    %v1405 = vmax.f32 %v1193, 0.0
    %v1406 = vmax.f32 %v1198, 0.0
    %v1407 = vmax.f32 %v1201, 0.0
    %v1408 = vmax.f32 %v1206, 0.0
    %v1409 = vmax.f32 %v1209, 0.0
    %v1410 = vmax.f32 %v1214, 0.0
    %v1411 = vmax.f32 %v1217, 0.0
    %v1412 = vmax.f32 %v1222, 0.0
    %v1413 = vmax.f32 %v1225, 0.0
    %v1414 = vmax.f32 %v1230, 0.0
    %v1415 = vmax.f32 %v1233, 0.0
    %v1416 = vmax.f32 %v1238, 0.0
    %v1417 = vmax.f32 %v1241, 0.0
    %v1418 = vmax.f32 %v1246, 0.0
    %v1419 = vmax.f32 %v1249, 0.0
    %v1420 = vmax.f32 %v1254, 0.0
    %v1421 = vmax.f32 %v1257, 0.0
    %v1422 = vmax.f32 %v1262, 0.0
    %v1423 = vmax.f32 %v1265, 0.0
    %v1424 = vmax.f32 %v1270, 0.0
    %v1425 = vmax.f32 %v1273, 0.0
    %v1426 = vmax.f32 %v1278, 0.0
    %v1427 = vmax.f32 %v1281, 0.0
    %v1428 = vmax.f32 %v1286, 0.0
    %v1429 = vmax.f32 %v1289, 0.0
    %v1430 = vmax.f32 %v1294, 0.0
    %v1431 = vmax.f32 %v1297, 0.0
    %v1432 = vmax.f32 %v1302, 0.0
    %v1433 = vmax.f32 %v1305, 0.0
    %v1434 = vmax.f32 %v1310, 0.0
    %v1435 = vmax.f32 %v1313, 0.0
    %v1436 = vmax.f32 %v1318, 0.0
    %v1437 = vmax.f32 %v1321, 0.0
    %v1438 = vmax.f32 %v1326, 0.0
    %v1439 = vmax.f32 %v1329, 0.0
    %v1440 = vmax.f32 %v1334, 0.0
    %v1441 = vmax.f32 %v1337, 0.0
    %v1442 = vmax.f32 %v1342, 0.0
    %v1443 = vmax.f32 %v1345, 0.0
    %v1444 = vmax.f32 %v1350, 0.0
    %v1445 = vmax.f32 %v1353, 0.0
    %v1446 = vmax.f32 %v1358, 0.0
    %v1447 = vmax.f32 %v1361, 0.0
    %v1448 = vmax.f32 %v1366, 0.0
    %v1449 = vmax.f32 %v1369, 0.0
    %v1450 = vmax.f32 %v1374, 0.0
    %v1451 = vmax.f32 %v1377, 0.0
    %v1452 = vmax.f32 %v1380, %v1392
    %v1453 = vmax.f32 %v1381, %v1393
    %v1454 = vmax.f32 %v1382, %v1394
    %v1455 = vmax.f32 %v1383, %v1395
    %v1456 = vmax.f32 %v1384, %v1396
    %v1457 = vmax.f32 %v1385, %v1397
    %v1458 = vmax.f32 %v1386, %v1398
    %v1459 = vmax.f32 %v1387, %v1399
    %v1460 = vmax.f32 %v1388, %v1400
    %v1461 = vmax.f32 %v1389, %v1401
    %v1462 = vmax.f32 %v1390, %v1402
    %v1463 = vmax.f32 %v1391, %v1403
    %v1464 = vmax.f32 %v1452, %v1454
    %v1465 = vmax.f32 %v1453, %v1455
    %v1466 = vmax.f32 %v1456, %v1458
    %v1467 = vmax.f32 %v1457, %v1459
    %v1468 = vmax.f32 %v1460, %v1462
    %v1469 = vmax.f32 %v1461, %v1463
    %v1470 = vmax.f32 %v1404, %v1416
    %v1471 = vmax.f32 %v1405, %v1417
    %v1472 = vmax.f32 %v1406, %v1418
    %v1473 = vmax.f32 %v1407, %v1419
    %v1474 = vmax.f32 %v1408, %v1420
    %v1475 = vmax.f32 %v1409, %v1421
    %v1476 = vmax.f32 %v1410, %v1422
    %v1477 = vmax.f32 %v1411, %v1423
    %v1478 = vmax.f32 %v1412, %v1424
    %v1479 = vmax.f32 %v1413, %v1425
    %v1480 = vmax.f32 %v1414, %v1426
    %v1481 = vmax.f32 %v1415, %v1427
    %v1482 = vmax.f32 %v1470, %v1472
    %v1483 = vmax.f32 %v1471, %v1473
    %v1484 = vmax.f32 %v1474, %v1476
    %v1485 = vmax.f32 %v1475, %v1477
    %v1486 = vmax.f32 %v1478, %v1480
    %v1487 = vmax.f32 %v1479, %v1481
    %v1488 = vmax.f32 %v1428, %v1440
    %v1489 = vmax.f32 %v1429, %v1441
    %v1490 = vmax.f32 %v1430, %v1442
    %v1491 = vmax.f32 %v1431, %v1443
    %v1492 = vmax.f32 %v1432, %v1444
    %v1493 = vmax.f32 %v1433, %v1445
    %v1494 = vmax.f32 %v1434, %v1446
    %v1495 = vmax.f32 %v1435, %v1447
    %v1496 = vmax.f32 %v1436, %v1448
    %v1497 = vmax.f32 %v1437, %v1449
    %v1498 = vmax.f32 %v1438, %v1450
    %v1499 = vmax.f32 %v1439, %v1451
    %v1500 = vmax.f32 %v1488, %v1490
    %v1501 = vmax.f32 %v1489, %v1491
    %v1502 = vmax.f32 %v1492, %v1494
    %v1503 = vmax.f32 %v1493, %v1495
    %v1504 = vmax.f32 %v1496, %v1498
    %v1505 = vmax.f32 %v1497, %v1499
    %v1506 = vpack.c.bf16 %v1465, %v1464
    %v1507 = vpack.c.bf16 %v1467, %v1466
    %v1508 = vpack.c.bf16 %v1469, %v1468
    %v1509 = vpack.c.bf16 %v1483, %v1482
    %v1510 = vpack.c.bf16 %v1485, %v1484
    %v1511 = vpack.c.bf16 %v1487, %v1486
    %v1512 = vpack.c.bf16 %v1501, %v1500
    %v1513 = vpack.c.bf16 %v1503, %v1502
    %v1514 = vpack.c.bf16 %v1505, %v1504
    %v1515 = vld [vmem:[%s3] sm:$0xff]
    %v1516 = vld [vmem:[%s3 + $0x8] sm:$0xff]
    %v1517 = vld [vmem:[%s3 + $0x10] sm:$0xff]
    %v1518 = vld [vmem:[%s3 + $0x18] sm:$0xff]
    %v1519 = vld [vmem:[%s3 + $0x20] sm:$0xff]
    %v1520 = vld [vmem:[%s3 + $0x28] sm:$0xff]
    %v1521 = vld [vmem:[%s3 + $0x30] sm:$0xff]
    %v1522 = vld [vmem:[%s3 + $0x38] sm:$0xff]
    %v1523 = vld [vmem:[%s3 + $0x40] sm:$0xff]
    %v1524 = vld [vmem:[%s3 + $0x48] sm:$0xff]
    %v1525 = vld [vmem:[%s3 + $0x50] sm:$0xff]
    %v1526 = vld [vmem:[%s3 + $0x58] sm:$0xff]
    %v1527 = vld [vmem:[%s3 + $0x60] sm:$0xff]
    %v1528 = vld [vmem:[%s3 + $0x68] sm:$0xff]
    %v1529 = vld [vmem:[%s3 + $0x70] sm:$0xff]
    %v1530 = vld [vmem:[%s3 + $0x78] sm:$0xff]
    %v1531 = vld [vmem:[%s4] sm:$0xff]
    %v1532 = vld [vmem:[%s4 + $0x8] sm:$0xff]
    %v1533 = vld [vmem:[%s4 + $0x10] sm:$0xff]
    %v1534 = vld [vmem:[%s4 + $0x18] sm:$0xff]
    %v1535 = vld [vmem:[%s4 + $0x20] sm:$0xff]
    %v1536 = vld [vmem:[%s4 + $0x28] sm:$0xff]
    %v1537 = vld [vmem:[%s4 + $0x30] sm:$0xff]
    %v1538 = vld [vmem:[%s4 + $0x38] sm:$0xff]
    %v1539 = vld [vmem:[%s4 + $0x40] sm:$0xff]
    %v1540 = vld [vmem:[%s4 + $0x48] sm:$0xff]
    %v1541 = vld [vmem:[%s4 + $0x50] sm:$0xff]
    %v1542 = vld [vmem:[%s4 + $0x58] sm:$0xff]
    %v1543 = vld [vmem:[%s4 + $0x60] sm:$0xff]
    %v1544 = vld [vmem:[%s4 + $0x68] sm:$0xff]
    %v1545 = vld [vmem:[%s4 + $0x70] sm:$0xff]
    %v1546 = vld [vmem:[%s4 + $0x78] sm:$0xff]
    %1548 = vset.pattern.permute.xlu0 0
    %1549 = vperm.xlu0 %1548, %v1531
    %v1550 = vpop.permute.xlu0 %1549
    %1553 = vset.pattern.permute.xlu0 0
    %1554 = vperm.xlu0 %1553, %v1532
    %v1555 = vpop.permute.xlu0 %1554
    %1558 = vset.pattern.permute.xlu0 0
    %1559 = vperm.xlu0 %1558, %v1533
    %v1560 = vpop.permute.xlu0 %1559
    %1563 = vset.pattern.permute.xlu0 0
    %1564 = vperm.xlu0 %1563, %v1534
    %v1565 = vpop.permute.xlu0 %1564
    %1568 = vset.pattern.permute.xlu0 0
    %1569 = vperm.xlu0 %1568, %v1535
    %v1570 = vpop.permute.xlu0 %1569
    %1573 = vset.pattern.permute.xlu0 0
    %1574 = vperm.xlu0 %1573, %v1536
    %v1575 = vpop.permute.xlu0 %1574
    %1578 = vset.pattern.permute.xlu0 0
    %1579 = vperm.xlu0 %1578, %v1537
    %v1580 = vpop.permute.xlu0 %1579
    %1583 = vset.pattern.permute.xlu0 0
    %1584 = vperm.xlu0 %1583, %v1538
    %v1585 = vpop.permute.xlu0 %1584
    %1588 = vset.pattern.permute.xlu0 0
    %1589 = vperm.xlu0 %1588, %v1539
    %v1590 = vpop.permute.xlu0 %1589
    %1593 = vset.pattern.permute.xlu0 0
    %1594 = vperm.xlu0 %1593, %v1540
    %v1595 = vpop.permute.xlu0 %1594
    %1598 = vset.pattern.permute.xlu0 0
    %1599 = vperm.xlu0 %1598, %v1541
    %v1600 = vpop.permute.xlu0 %1599
    %1603 = vset.pattern.permute.xlu0 0
    %1604 = vperm.xlu0 %1603, %v1542
    %v1605 = vpop.permute.xlu0 %1604
    %1608 = vset.pattern.permute.xlu0 0
    %1609 = vperm.xlu0 %1608, %v1543
    %v1610 = vpop.permute.xlu0 %1609
    %1613 = vset.pattern.permute.xlu0 0
    %1614 = vperm.xlu0 %1613, %v1544
    %v1615 = vpop.permute.xlu0 %1614
    %1618 = vset.pattern.permute.xlu0 0
    %1619 = vperm.xlu0 %1618, %v1545
    %v1620 = vpop.permute.xlu0 %1619
    %1623 = vset.pattern.permute.xlu0 0
    %1624 = vperm.xlu0 %1623, %v1546
    %v1625 = vpop.permute.xlu0 %1624
    %v1643 = vunpack.c.l.b16 %v1515
    %v1644 = vunpack.c.h.b16 %v1515
    %v1645 = vunpack.c.l.b16 %v1516
    %v1646 = vunpack.c.h.b16 %v1516
    %v1647 = vunpack.c.l.b16 %v1517
    %v1648 = vunpack.c.h.b16 %v1517
    %v1649 = vunpack.c.l.b16 %v1518
    %v1650 = vunpack.c.h.b16 %v1518
    %v1651 = vunpack.c.l.b16 %v1519
    %v1652 = vunpack.c.h.b16 %v1519
    %v1653 = vunpack.c.l.b16 %v1520
    %v1654 = vunpack.c.h.b16 %v1520
    %v1655 = vunpack.c.l.b16 %v1521
    %v1656 = vunpack.c.h.b16 %v1521
    %v1657 = vunpack.c.l.b16 %v1522
    %v1658 = vunpack.c.h.b16 %v1522
    %v1659 = vunpack.c.l.b16 %v1523
    %v1660 = vunpack.c.h.b16 %v1523
    %v1661 = vunpack.c.l.b16 %v1524
    %v1662 = vunpack.c.h.b16 %v1524
    %v1663 = vunpack.c.l.b16 %v1525
    %v1664 = vunpack.c.h.b16 %v1525
    %v1665 = vunpack.c.l.b16 %v1526
    %v1666 = vunpack.c.h.b16 %v1526
    %v1667 = vunpack.c.l.b16 %v1527
    %v1668 = vunpack.c.h.b16 %v1527
    %v1669 = vunpack.c.l.b16 %v1528
    %v1670 = vunpack.c.h.b16 %v1528
    %v1671 = vunpack.c.l.b16 %v1529
    %v1672 = vunpack.c.h.b16 %v1529
    %v1673 = vunpack.c.l.b16 %v1530
    %v1674 = vunpack.c.h.b16 %v1530
    %v1675 = vpack.c.b16 %v1645, %v1643
    %v1676 = vpack.c.b16 %v1646, %v1644
    %v1677 = vpack.c.b16 %v1649, %v1647
    %v1678 = vpack.c.b16 %v1650, %v1648
    %v1679 = vpack.c.b16 %v1653, %v1651
    %v1680 = vpack.c.b16 %v1654, %v1652
    %v1681 = vpack.c.b16 %v1657, %v1655
    %v1682 = vpack.c.b16 %v1658, %v1656
    %v1683 = vpack.c.b16 %v1661, %v1659
    %v1684 = vpack.c.b16 %v1662, %v1660
    %v1685 = vpack.c.b16 %v1665, %v1663
    %v1686 = vpack.c.b16 %v1666, %v1664
    %v1687 = vpack.c.b16 %v1669, %v1667
    %v1688 = vpack.c.b16 %v1670, %v1668
    %v1689 = vpack.c.b16 %v1673, %v1671
    %v1690 = vpack.c.b16 %v1674, %v1672
    %vm1699 = vcmask 130048
    %v1701 = vsel %vm1699, %v1676, 0
    %v1704 = vsel %vm1699, %v1678, 0
    %v1707 = vsel %vm1699, %v1680, 0
    %v1710 = vsel %vm1699, %v1682, 0
    %v1713 = vsel %vm1699, %v1684, 0
    %v1716 = vsel %vm1699, %v1686, 0
    %v1719 = vsel %vm1699, %v1688, 0
    %v1722 = vsel %vm1699, %v1690, 0
    %1724 = vmatprep.subr.bf16.mxu0 0
    %1725 = vmatpush1.bf16.msra.mxu0 %v1506
    %1726 = vmatprep.subr.bf16.mxu0 0
    %1727 = vmatpush1.bf16.msra.mxu0 %v1507
    %1728 = vmatprep.subr.bf16.mxu0 0
    %1729 = vmatpush1.bf16.msra.mxu0 %v1508
    %1730 = vmatprep.subr.bf16.mxu0 0
    %1731 = vmatpush1.bf16.msra.mxu0 %v1509
    %1732 = vmatprep.subr.bf16.mxu0 0
    %1733 = vmatpush1.bf16.msra.mxu0 %v1510
    %1734 = vmatprep.subr.bf16.mxu0 0
    %1735 = vmatpush1.bf16.msra.mxu0 %v1511
    %1736 = vmatprep.subr.bf16.mxu0 0
    %1737 = vmatpush1.bf16.msra.mxu0 %v1512
    %1738 = vmatprep.subr.bf16.mxu0 0
    %1739 = vmatpush1.bf16.msra.mxu0 %v1513
    %1740 = vmatprep.subr.bf16.mxu0 0
    %1741 = vmatpush1.bf16.msra.mxu0 %v1514
    %1742 = vmatprep.subr.bf16.mxu0 0
    %1743 = vmatpush1.bf16.msra.mxu0 0
    %1744 = vmatprep.subr.bf16.mxu0 0
    %1745 = vmatpush1.bf16.msra.mxu0 0
    %1746 = vmatprep.subr.bf16.mxu0 0
    %1747 = vmatpush1.bf16.msra.mxu0 0
    %1748 = vmatprep.subr.bf16.mxu0 0
    %1749 = vmatpush1.bf16.msra.mxu0 0
    %1750 = vmatprep.subr.bf16.mxu0 0
    %1751 = vmatpush1.bf16.msra.mxu0 0
    %1752 = vmatprep.subr.bf16.mxu0 0
    %1753 = vmatpush1.bf16.msra.mxu0 0
    %1754 = vmatprep.subr.bf16.mxu0 0
    %1755 = vmatpush1.bf16.msra.mxu0 0
    %1756 = vmatprep.mubr.bf16.mxu0 %v1701
    %1757 = vmatmul.mubr.bf16.gmra.mrb[0].mxu0 %v1675
    %v1758 = vpop.f32.mrb[0].mxu0
    %v1759 = vadd.f32 %v1550, %v1758
    %v1760 = vpop.f32.mrb[0].mxu0
    %v1761 = vpop.f32.mrb[0].mxu0
    %v1762 = vadd.f32 %v1555, %v1761
    %v1763 = vpop.f32.mrb[0].mxu0
    %1764 = vmatprep.mubr.bf16.mxu0 %v1704
    %1765 = vmatmul.mubr.bf16.gmra.mrb[0].mxu0 %v1677
    %v1766 = vpop.f32.mrb[0].mxu0
    %v1767 = vadd.f32 %v1560, %v1766
    %v1768 = vpop.f32.mrb[0].mxu0
    %v1769 = vpop.f32.mrb[0].mxu0
    %v1770 = vadd.f32 %v1565, %v1769
    %v1771 = vpop.f32.mrb[0].mxu0
    %1772 = vmatprep.mubr.bf16.mxu0 %v1707
    %1773 = vmatmul.mubr.bf16.gmra.mrb[0].mxu0 %v1679
    %v1774 = vpop.f32.mrb[0].mxu0
    %v1775 = vadd.f32 %v1570, %v1774
    %v1776 = vpop.f32.mrb[0].mxu0
    %v1777 = vpop.f32.mrb[0].mxu0
    %v1778 = vadd.f32 %v1575, %v1777
    %v1779 = vpop.f32.mrb[0].mxu0
    %1780 = vmatprep.mubr.bf16.mxu0 %v1710
    %1781 = vmatmul.mubr.bf16.gmra.mrb[0].mxu0 %v1681
    %v1782 = vpop.f32.mrb[0].mxu0
    %v1783 = vadd.f32 %v1580, %v1782
    %v1784 = vpop.f32.mrb[0].mxu0
    %v1785 = vpop.f32.mrb[0].mxu0
    %v1786 = vadd.f32 %v1585, %v1785
    %v1787 = vpop.f32.mrb[0].mxu0
    %1788 = vmatprep.mubr.bf16.mxu0 %v1713
    %1789 = vmatmul.mubr.bf16.gmra.mrb[0].mxu0 %v1683
    %v1790 = vpop.f32.mrb[0].mxu0
    %v1791 = vadd.f32 %v1590, %v1790
    %v1792 = vpop.f32.mrb[0].mxu0
    %v1793 = vpop.f32.mrb[0].mxu0
    %v1794 = vadd.f32 %v1595, %v1793
    %v1795 = vpop.f32.mrb[0].mxu0
    %1796 = vmatprep.mubr.bf16.mxu0 %v1716
    %1797 = vmatmul.mubr.bf16.gmra.mrb[0].mxu0 %v1685
    %v1798 = vpop.f32.mrb[0].mxu0
    %v1799 = vadd.f32 %v1600, %v1798
    %v1800 = vpop.f32.mrb[0].mxu0
    %v1801 = vpop.f32.mrb[0].mxu0
    %v1802 = vadd.f32 %v1605, %v1801
    %v1803 = vpop.f32.mrb[0].mxu0
    %1804 = vmatprep.mubr.bf16.mxu0 %v1719
    %1805 = vmatmul.mubr.bf16.gmra.mrb[0].mxu0 %v1687
    %v1806 = vpop.f32.mrb[0].mxu0
    %v1807 = vadd.f32 %v1610, %v1806
    %v1808 = vpop.f32.mrb[0].mxu0
    %v1809 = vpop.f32.mrb[0].mxu0
    %v1810 = vadd.f32 %v1615, %v1809
    %v1811 = vpop.f32.mrb[0].mxu0
    %1812 = vmatprep.mubr.bf16.mxu0 %v1722
    %1813 = vmatmul.mubr.bf16.gmra.mrb[0].mxu0 %v1689
    %v1814 = vpop.f32.mrb[0].mxu0
    %v1815 = vadd.f32 %v1620, %v1814
    %v1816 = vpop.f32.mrb[0].mxu0
    %v1817 = vpop.f32.mrb[0].mxu0
    %v1818 = vadd.f32 %v1625, %v1817
    %v1819 = vpop.f32.mrb[0].mxu0
    %1820 = vdwg.mxu0
    %v1821 = vmax.f32 %v1759, 0.0
    %v1822 = vmax.f32 %v1762, 0.0
    %v1823 = vmax.f32 %v1767, 0.0
    %v1824 = vmax.f32 %v1770, 0.0
    %v1825 = vmax.f32 %v1775, 0.0
    %v1826 = vmax.f32 %v1778, 0.0
    %v1827 = vmax.f32 %v1783, 0.0
    %v1828 = vmax.f32 %v1786, 0.0
    %v1829 = vmax.f32 %v1791, 0.0
    %v1830 = vmax.f32 %v1794, 0.0
    %v1831 = vmax.f32 %v1799, 0.0
    %v1832 = vmax.f32 %v1802, 0.0
    %v1833 = vmax.f32 %v1807, 0.0
    %v1834 = vmax.f32 %v1810, 0.0
    %v1835 = vmax.f32 %v1815, 0.0
    %v1836 = vmax.f32 %v1818, 0.0
    %v1837 = vpack.c.bf16 %v1822, %v1821
    %v1838 = vpack.c.bf16 %v1824, %v1823
    %v1839 = vpack.c.bf16 %v1826, %v1825
    %v1840 = vpack.c.bf16 %v1828, %v1827
    %v1841 = vpack.c.bf16 %v1830, %v1829
    %v1842 = vpack.c.bf16 %v1832, %v1831
    %v1843 = vpack.c.bf16 %v1834, %v1833
    %v1844 = vpack.c.bf16 %v1836, %v1835
    %v1845 = vld [vmem:[%s5] sm:$0xf]
    %v1846 = vld [vmem:[%s5 + $0x4] sm:$0xf]
    %v1847 = vld [vmem:[%s5 + $0x8] sm:$0xf]
    %v1848 = vld [vmem:[%s5 + $0xc] sm:$0xf]
    %v1849 = vld [vmem:[%s5 + $0x10] sm:$0xf]
    %v1850 = vld [vmem:[%s5 + $0x14] sm:$0xf]
    %v1851 = vld [vmem:[%s5 + $0x18] sm:$0xf]
    %v1852 = vld [vmem:[%s5 + $0x1c] sm:$0xf]
    %v1853 = vld [vmem:[%s6] sm:$0xff]
    %v1854 = vld [vmem:[%s6 + $0x8] sm:$0xff]
    %v1855 = vld [vmem:[%s6 + $0x10] sm:$0xff]
    %v1856 = vld [vmem:[%s6 + $0x18] sm:$0xff]
    %v1857 = vld [vmem:[%s6 + $0x20] sm:$0xff]
    %v1858 = vld [vmem:[%s6 + $0x28] sm:$0xff]
    %v1859 = vld [vmem:[%s6 + $0x30] sm:$0xff]
    %v1860 = vld [vmem:[%s6 + $0x38] sm:$0xff]
    %1862 = vset.pattern.permute.xlu0 0
    %1863 = vperm.xlu0 %1862, %v1853
    %v1864 = vpop.permute.xlu0 %1863
    %1867 = vset.pattern.permute.xlu0 0
    %1868 = vperm.xlu0 %1867, %v1854
    %v1869 = vpop.permute.xlu0 %1868
    %1872 = vset.pattern.permute.xlu0 0
    %1873 = vperm.xlu0 %1872, %v1855
    %v1874 = vpop.permute.xlu0 %1873
    %1877 = vset.pattern.permute.xlu0 0
    %1878 = vperm.xlu0 %1877, %v1856
    %v1879 = vpop.permute.xlu0 %1878
    %1882 = vset.pattern.permute.xlu0 0
    %1883 = vperm.xlu0 %1882, %v1857
    %v1884 = vpop.permute.xlu0 %1883
    %1887 = vset.pattern.permute.xlu0 0
    %1888 = vperm.xlu0 %1887, %v1858
    %v1889 = vpop.permute.xlu0 %1888
    %1892 = vset.pattern.permute.xlu0 0
    %1893 = vperm.xlu0 %1892, %v1859
    %v1894 = vpop.permute.xlu0 %1893
    %1897 = vset.pattern.permute.xlu0 0
    %1898 = vperm.xlu0 %1897, %v1860
    %v1899 = vpop.permute.xlu0 %1898
    %v1909 = vunpack.c.l.b16 %v1845
    %v1910 = vunpack.c.l.b16 %v1846
    %v1911 = vunpack.c.l.b16 %v1847
    %v1912 = vunpack.c.l.b16 %v1848
    %v1913 = vunpack.c.l.b16 %v1849
    %v1914 = vunpack.c.l.b16 %v1850
    %v1915 = vunpack.c.l.b16 %v1851
    %v1916 = vunpack.c.l.b16 %v1852
    %v1917 = vpack.c.b16 %v1910, %v1909
    %v1918 = vpack.c.b16 %v1912, %v1911
    %v1919 = vpack.c.b16 %v1914, %v1913
    %v1920 = vpack.c.b16 %v1916, %v1915
    %1925 = vmatprep.subr.bf16.mxu0 0
    %1926 = vmatpush1.bf16.msra.mxu0 %v1837
    %1927 = vmatprep.subr.bf16.mxu0 0
    %1928 = vmatpush1.bf16.msra.mxu0 %v1838
    %1929 = vmatprep.subr.bf16.mxu0 0
    %1930 = vmatpush1.bf16.msra.mxu0 %v1839
    %1931 = vmatprep.subr.bf16.mxu0 0
    %1932 = vmatpush1.bf16.msra.mxu0 %v1840
    %1933 = vmatprep.subr.bf16.mxu0 0
    %1934 = vmatpush1.bf16.msra.mxu0 %v1841
    %1935 = vmatprep.subr.bf16.mxu0 0
    %1936 = vmatpush1.bf16.msra.mxu0 %v1842
    %1937 = vmatprep.subr.bf16.mxu0 0
    %1938 = vmatpush1.bf16.msra.mxu0 %v1843
    %1939 = vmatprep.subr.bf16.mxu0 0
    %1940 = vmatpush1.bf16.msra.mxu0 %v1844
    %1941 = vmatprep.subr.bf16.mxu0 0
    %1942 = vmatpush1.bf16.msra.mxu0 0
    %1943 = vmatprep.subr.bf16.mxu0 0
    %1944 = vmatpush1.bf16.msra.mxu0 0
    %1945 = vmatprep.subr.bf16.mxu0 0
    %1946 = vmatpush1.bf16.msra.mxu0 0
    %1947 = vmatprep.subr.bf16.mxu0 0
    %1948 = vmatpush1.bf16.msra.mxu0 0
    %1949 = vmatprep.subr.bf16.mxu0 0
    %1950 = vmatpush1.bf16.msra.mxu0 0
    %1951 = vmatprep.subr.bf16.mxu0 0
    %1952 = vmatpush1.bf16.msra.mxu0 0
    %1953 = vmatprep.subr.bf16.mxu0 0
    %1954 = vmatpush1.bf16.msra.mxu0 0
    %1955 = vmatprep.subr.bf16.mxu0 0
    %1956 = vmatpush1.bf16.msra.mxu0 0
    %1957 = vmatprep.mubr.bf16.mxu0 0
    %1958 = vmatmul.mubr.bf16.gmra.mrb[0].mxu0 %v1917
    %v1959 = vpop.f32.mrb[0].mxu0
    %v1960 = vadd.f32 %v1864, %v1959
    %v1961 = vpop.f32.mrb[0].mxu0
    %v1962 = vpop.f32.mrb[0].mxu0
    %v1963 = vadd.f32 %v1869, %v1962
    %v1964 = vpop.f32.mrb[0].mxu0
    %1965 = vmatprep.mubr.bf16.mxu0 0
    %1966 = vmatmul.mubr.bf16.gmra.mrb[0].mxu0 %v1918
    %v1967 = vpop.f32.mrb[0].mxu0
    %v1968 = vadd.f32 %v1874, %v1967
    %v1969 = vpop.f32.mrb[0].mxu0
    %v1970 = vpop.f32.mrb[0].mxu0
    %v1971 = vadd.f32 %v1879, %v1970
    %v1972 = vpop.f32.mrb[0].mxu0
    %1973 = vmatprep.mubr.bf16.mxu0 0
    %1974 = vmatmul.mubr.bf16.gmra.mrb[0].mxu0 %v1919
    %v1975 = vpop.f32.mrb[0].mxu0
    %v1976 = vadd.f32 %v1884, %v1975
    %v1977 = vpop.f32.mrb[0].mxu0
    %v1978 = vpop.f32.mrb[0].mxu0
    %v1979 = vadd.f32 %v1889, %v1978
    %v1980 = vpop.f32.mrb[0].mxu0
    %1981 = vmatprep.mubr.bf16.mxu0 0
    %1982 = vmatmul.mubr.bf16.gmra.mrb[0].mxu0 %v1920
    %v1983 = vpop.f32.mrb[0].mxu0
    %v1984 = vadd.f32 %v1894, %v1983
    %v1985 = vpop.f32.mrb[0].mxu0
    %v1986 = vpop.f32.mrb[0].mxu0
    %v1987 = vadd.f32 %v1899, %v1986
    %v1988 = vpop.f32.mrb[0].mxu0
    %1989 = vdwg.mxu0
    %v1990 = vmax.f32 %v1960, 0.0
    %v1991 = vmax.f32 %v1963, 0.0
    %v1992 = vmax.f32 %v1968, 0.0
    %v1993 = vmax.f32 %v1971, 0.0
    %v1994 = vmax.f32 %v1976, 0.0
    %v1995 = vmax.f32 %v1979, 0.0
    %v1996 = vmax.f32 %v1984, 0.0
    %v1997 = vmax.f32 %v1987, 0.0
    %v1998 = vpack.c.bf16 %v1991, %v1990
    %v1999 = vpack.c.bf16 %v1993, %v1992
    %v2000 = vpack.c.bf16 %v1995, %v1994
    %v2001 = vpack.c.bf16 %v1997, %v1996
    %v2002 = vld [vmem:[%s7] sm:$0xf]
    %v2003 = vld [vmem:[%s7 + $0x4] sm:$0xf]
    %v2004 = vld [vmem:[%s7 + $0x8] sm:$0xf]
    %v2005 = vld [vmem:[%s7 + $0xc] sm:$0xf]
    %v2006 = vld [vmem:[%s7 + $0x10] sm:$0xf]
    %v2007 = vld [vmem:[%s7 + $0x14] sm:$0xf]
    %v2008 = vld [vmem:[%s7 + $0x18] sm:$0xf]
    %v2009 = vld [vmem:[%s7 + $0x1c] sm:$0xf]
    %v2010 = vld [vmem:[%s8] sm:$0xff]
    %v2011 = vld [vmem:[%s8 + $0x8] sm:$0xff]
    %v2012 = vld [vmem:[%s8 + $0x10] sm:$0xff]
    %v2013 = vld [vmem:[%s8 + $0x18] sm:$0xff]
    %v2014 = vld [vmem:[%s8 + $0x20] sm:$0xff]
    %v2015 = vld [vmem:[%s8 + $0x28] sm:$0xff]
    %v2016 = vld [vmem:[%s8 + $0x30] sm:$0xff]
    %v2017 = vld [vmem:[%s8 + $0x38] sm:$0xff]
    %2019 = vset.pattern.permute.xlu0 0
    %2020 = vperm.xlu0 %2019, %v2010
    %v2021 = vpop.permute.xlu0 %2020
    %2024 = vset.pattern.permute.xlu0 0
    %2025 = vperm.xlu0 %2024, %v2011
    %v2026 = vpop.permute.xlu0 %2025
    %2029 = vset.pattern.permute.xlu0 0
    %2030 = vperm.xlu0 %2029, %v2012
    %v2031 = vpop.permute.xlu0 %2030
    %2034 = vset.pattern.permute.xlu0 0
    %2035 = vperm.xlu0 %2034, %v2013
    %v2036 = vpop.permute.xlu0 %2035
    %2039 = vset.pattern.permute.xlu0 0
    %2040 = vperm.xlu0 %2039, %v2014
    %v2041 = vpop.permute.xlu0 %2040
    %2044 = vset.pattern.permute.xlu0 0
    %2045 = vperm.xlu0 %2044, %v2015
    %v2046 = vpop.permute.xlu0 %2045
    %2049 = vset.pattern.permute.xlu0 0
    %2050 = vperm.xlu0 %2049, %v2016
    %v2051 = vpop.permute.xlu0 %2050
    %2054 = vset.pattern.permute.xlu0 0
    %2055 = vperm.xlu0 %2054, %v2017
    %v2056 = vpop.permute.xlu0 %2055
    %v2066 = vunpack.c.l.b16 %v2002
    %v2067 = vunpack.c.l.b16 %v2003
    %v2068 = vunpack.c.l.b16 %v2004
    %v2069 = vunpack.c.l.b16 %v2005
    %v2070 = vunpack.c.l.b16 %v2006
    %v2071 = vunpack.c.l.b16 %v2007
    %v2072 = vunpack.c.l.b16 %v2008
    %v2073 = vunpack.c.l.b16 %v2009
    %v2074 = vpack.c.b16 %v2067, %v2066
    %v2075 = vpack.c.b16 %v2069, %v2068
    %v2076 = vpack.c.b16 %v2071, %v2070
    %v2077 = vpack.c.b16 %v2073, %v2072
    %vm2078 = vcmask 523264
    %v2080 = vsel %vm2078, %v2074, 0
    %v2083 = vsel %vm2078, %v2075, 0
    %v2086 = vsel %vm2078, %v2076, 0
    %v2089 = vsel %vm2078, %v2077, 0
    %2091 = vmatprep.subr.bf16.mxu0 0
    %2092 = vmatpush1.bf16.msra.mxu0 %v1998
    %2093 = vmatprep.subr.bf16.mxu0 0
    %2094 = vmatpush1.bf16.msra.mxu0 %v1999
    %2095 = vmatprep.subr.bf16.mxu0 0
    %2096 = vmatpush1.bf16.msra.mxu0 %v2000
    %2097 = vmatprep.subr.bf16.mxu0 0
    %2098 = vmatpush1.bf16.msra.mxu0 %v2001
    %2099 = vmatprep.subr.bf16.mxu0 0
    %2100 = vmatpush1.bf16.msra.mxu0 0
    %2101 = vmatprep.subr.bf16.mxu0 0
    %2102 = vmatpush1.bf16.msra.mxu0 0
    %2103 = vmatprep.subr.bf16.mxu0 0
    %2104 = vmatpush1.bf16.msra.mxu0 0
    %2105 = vmatprep.subr.bf16.mxu0 0
    %2106 = vmatpush1.bf16.msra.mxu0 0
    %2107 = vmatprep.subr.bf16.mxu0 0
    %2108 = vmatpush1.bf16.msra.mxu0 0
    %2109 = vmatprep.subr.bf16.mxu0 0
    %2110 = vmatpush1.bf16.msra.mxu0 0
    %2111 = vmatprep.subr.bf16.mxu0 0
    %2112 = vmatpush1.bf16.msra.mxu0 0
    %2113 = vmatprep.subr.bf16.mxu0 0
    %2114 = vmatpush1.bf16.msra.mxu0 0
    %2115 = vmatprep.subr.bf16.mxu0 0
    %2116 = vmatpush1.bf16.msra.mxu0 0
    %2117 = vmatprep.subr.bf16.mxu0 0
    %2118 = vmatpush1.bf16.msra.mxu0 0
    %2119 = vmatprep.subr.bf16.mxu0 0
    %2120 = vmatpush1.bf16.msra.mxu0 0
    %2121 = vmatprep.subr.bf16.mxu0 0
    %2122 = vmatpush1.bf16.msra.mxu0 0
    %2123 = vmatprep.mubr.bf16.mxu0 0
    %2124 = vmatmul.mubr.bf16.gmra.mrb[0].mxu0 %v2080
    %v2125 = vpop.f32.mrb[0].mxu0
    %v2126 = vadd.f32 %v2021, %v2125
    %v2127 = vpop.f32.mrb[0].mxu0
    %v2128 = vpop.f32.mrb[0].mxu0
    %v2129 = vadd.f32 %v2026, %v2128
    %v2130 = vpop.f32.mrb[0].mxu0
    %2131 = vmatprep.mubr.bf16.mxu0 0
    %2132 = vmatmul.mubr.bf16.gmra.mrb[0].mxu0 %v2083
    %v2133 = vpop.f32.mrb[0].mxu0
    %v2134 = vadd.f32 %v2031, %v2133
    %v2135 = vpop.f32.mrb[0].mxu0
    %v2136 = vpop.f32.mrb[0].mxu0
    %v2137 = vadd.f32 %v2036, %v2136
    %v2138 = vpop.f32.mrb[0].mxu0
    %2139 = vmatprep.mubr.bf16.mxu0 0
    %2140 = vmatmul.mubr.bf16.gmra.mrb[0].mxu0 %v2086
    %v2141 = vpop.f32.mrb[0].mxu0
    %v2142 = vadd.f32 %v2041, %v2141
    %v2143 = vpop.f32.mrb[0].mxu0
    %v2144 = vpop.f32.mrb[0].mxu0
    %v2145 = vadd.f32 %v2046, %v2144
    %v2146 = vpop.f32.mrb[0].mxu0
    %2147 = vmatprep.mubr.bf16.mxu0 0
    %2148 = vmatmul.mubr.bf16.gmra.mrb[0].mxu0 %v2089
    %v2149 = vpop.f32.mrb[0].mxu0
    %v2150 = vadd.f32 %v2051, %v2149
    %v2151 = vpop.f32.mrb[0].mxu0
    %v2152 = vpop.f32.mrb[0].mxu0
    %v2153 = vadd.f32 %v2056, %v2152
    %v2154 = vpop.f32.mrb[0].mxu0
    %2155 = vdwg.mxu0
    %v2156 = vtanh.pop %v2126
    %v2157 = vtanh.pop %v2129
    %v2158 = vtanh.pop %v2134
    %v2159 = vtanh.pop %v2137
    %v2160 = vtanh.pop %v2142
    %v2161 = vtanh.pop %v2145
    %v2162 = vtanh.pop %v2150
    %v2163 = vtanh.pop %v2153
    %v2164 = vld [vmem:[%s9] sm:$0xff]
    %v2165 = vld [vmem:[%s9 + $0x8] sm:$0xff]
    %v2166 = vld [vmem:[%s9 + $0x10] sm:$0xff]
    %v2167 = vld [vmem:[%s9 + $0x18] sm:$0xff]
    %v2168 = vld [vmem:[%s9 + $0x20] sm:$0xff]
    %v2169 = vld [vmem:[%s9 + $0x28] sm:$0xff]
    %v2170 = vld [vmem:[%s9 + $0x30] sm:$0xff]
    %v2171 = vld [vmem:[%s9 + $0x38] sm:$0xff]
    %2173 = vset.pattern.permute.xlu0 0
    %2174 = vperm.xlu0 %2173, %v2164
    %v2175 = vpop.permute.xlu0 %2174
    %2178 = vset.pattern.permute.xlu0 0
    %2179 = vperm.xlu0 %2178, %v2165
    %v2180 = vpop.permute.xlu0 %2179
    %2183 = vset.pattern.permute.xlu0 0
    %2184 = vperm.xlu0 %2183, %v2166
    %v2185 = vpop.permute.xlu0 %2184
    %2188 = vset.pattern.permute.xlu0 0
    %2189 = vperm.xlu0 %2188, %v2167
    %v2190 = vpop.permute.xlu0 %2189
    %2193 = vset.pattern.permute.xlu0 0
    %2194 = vperm.xlu0 %2193, %v2168
    %v2195 = vpop.permute.xlu0 %2194
    %2198 = vset.pattern.permute.xlu0 0
    %2199 = vperm.xlu0 %2198, %v2169
    %v2200 = vpop.permute.xlu0 %2199
    %2203 = vset.pattern.permute.xlu0 0
    %2204 = vperm.xlu0 %2203, %v2170
    %v2205 = vpop.permute.xlu0 %2204
    %2208 = vset.pattern.permute.xlu0 0
    %2209 = vperm.xlu0 %2208, %v2171
    %v2210 = vpop.permute.xlu0 %2209
    %v2212 = vmul.f32 %v2156, %v2175
    %v2213 = vmul.f32 %v2157, %v2180
    %v2214 = vmul.f32 %v2158, %v2185
    %v2215 = vmul.f32 %v2159, %v2190
    %v2216 = vmul.f32 %v2160, %v2195
    %v2217 = vmul.f32 %v2161, %v2200
    %v2218 = vmul.f32 %v2162, %v2205
    %v2219 = vmul.f32 %v2163, %v2210
    %vm2220 = vcmask 15360
    %v2221 = vsel %vm2220, %v2212, 0.0
    %v2222 = vsel %vm2220, %v2213, 0.0
    %v2223 = vadd.f32 %v2221, %v2222
    %v2224 = vsel %vm2220, %v2214, 0.0
    %v2225 = vadd.f32 %v2223, %v2224
    %v2226 = vsel %vm2220, %v2215, 0.0
    %v2227 = vadd.f32 %v2225, %v2226
    %v2228 = vsel %vm2220, %v2216, 0.0
    %v2229 = vadd.f32 %v2227, %v2228
    %v2230 = vsel %vm2220, %v2217, 0.0
    %v2231 = vadd.f32 %v2229, %v2230
    %v2232 = vsel %vm2220, %v2218, 0.0
    %v2233 = vadd.f32 %v2231, %v2232
    %v2234 = vsel %vm2220, %v2219, 0.0
    %v2235 = vadd.f32 %v2233, %v2234
    %v2236 = vrot.slane %v2235, 4
    %v2237 = vadd.f32 %v2235, %v2236
    %v2238 = vrot.slane %v2237, 2
    %v2239 = vadd.f32 %v2237, %v2238
    %v2240 = vrot.slane %v2239, 1
    %v2241 = vadd.f32 %v2239, %v2240
    %v2242 = vld [vmem:[#allocation2] sm:$0x1]
    %2244 = vset.pattern.permute.xlu0 0
    %2245 = vperm.xlu0 %2244, %v2242
    %v2246 = vpop.permute.xlu0 %2245
    %v2248 = vlaneseq
    %v2249 = vshrl.u32 %v2248, 7
    %v2250 = vsub.s32 0, %v2249
    %v2251 = vrot.slane %v2246, %v2250
    %v2252 = vadd.f32 %v2241, %v2251
    %vm2253 = vcmask 8192
    %2254 = vst.msk [vmem:[#allocation3] sm:$0x1] %vm2253, %v2252
    // Predicated region
    $region46: #{critic_model_forward.1} parent=1 // pred_check
      _
    $region47: #{critic_model_forward.1} parent=1 // pred_check_branch
      %2256 = sbr.rel (0) target = $region49
    $region48: #{critic_model_forward.1} parent=1 // pred_region
      %s2258 = ssub.s32 16, 16
      %2259 = vsyncadd [#allocation4], %s2258
      %s2261 = sshll.u32 [#allocation3], 4
      %s2262 = int_to_ptr.vmem [resolvable:$true] %s2261
      %2264 = dma.vmem_to_hbm [thread:$0]  %s2262, 16, %s11, [#allocation4]
    $region49: #{critic_model_forward.1} parent=1 // pred_fallthru
      _
    // Predicated region
    $region50: #{critic_model_forward.1} parent=1 // pred_check
      _
    $region51: #{critic_model_forward.1} parent=1 // pred_check_branch
      %2266 = sbr.rel (0) target = $region53
    $region52: #{critic_model_forward.1} parent=1 // pred_region
      %2267 = dma.done [#allocation4], 16
    $region53: #{critic_model_forward.1} parent=1 // pred_fallthru
      _
    %2268 = vsyncpa [#allocation4], 1

</llo_original>
